<compile_context>
chip_gen: v7x
topology: tpu7x:2x2x1
jax: 0.10.0
libtpu: 0.0.40
codegen_flags: <defaults>
</compile_context>

<pallas_src>
import functools

import jax
import jax.numpy as jnp
from jax import lax
from jax.experimental import pallas as pl
from jax.experimental.pallas import tpu as pltpu

EPS = 1e-5


def _round_up(v, m):
    return (v + m - 1) // m * m


def _vmem_limit_bytes():
    # Per-generation scoped-VMEM budget (v7x: 64 MiB physical, v5e/v6e: 128 MiB).
    try:
        cap = int(pltpu.get_tpu_info().vmem_capacity_bytes)
    except Exception:  # conservative fallback if the query is unavailable
        cap = 64 * 1024 * 1024
    return int(min(cap * 3 // 4, 100 * 1024 * 1024))


def _make_kernels(*, Cin, Cout, T, Wpad, HALO_A, HALO_B, TwinB):
    # Tap row offsets in the flattened padded-row layout.
    OFFS = [(dy - 1) * Wpad + (dx - 1) for dy in range(3) for dx in range(3)]

    def conv3x3(src_ref, base, rows, w_ref, cin):
        """3x3 conv over `rows` output rows; taps are static row slices of src_ref."""
        if cin < 128:
            # Tiny channel counts: one im2col matmul (K = 9*cin) feeds the MXU
            # better than nine K=cin matmuls.
            cols = [src_ref[pl.ds(base + off, rows), :] for off in OFFS]
            x9 = jnp.concatenate(cols, axis=1)                 # (rows, 9*cin) bf16
            return jnp.dot(x9, w_ref[...], preferred_element_type=jnp.float32)
        # Realistic channel counts: 9 accumulating matmuls, no (rows, 9*cin) temp.
        acc = jnp.zeros((rows, Cout), jnp.float32)
        for t, off in enumerate(OFFS):
            acc = acc + jnp.dot(src_ref[pl.ds(base + off, rows), :],
                                w_ref[pl.ds(t * cin, cin), :],
                                preferred_element_type=jnp.float32)
        return acc

    def partial_stats(stat_ref, ym):
        stat_ref[...] = jnp.concatenate(
            [jnp.sum(ym, axis=0, keepdims=True),
             jnp.sum(ym * ym, axis=0, keepdims=True)], axis=0)

    def conv1_kernel(xwin_ref, mwin_ref, w_ref, ywin_ref, stat_ref):
        # conv1 for the block's T center rows *plus* HALO_B halo rows each side
        # (redundant recompute so kernel 2 needs no overlapping reads).
        y = conv3x3(xwin_ref, HALO_A - HALO_B, TwinB, w_ref, Cin)   # (TwinB, Cout) f32
        ywin_ref[...] = y.astype(ywin_ref.dtype)
        # BN1 partial sums over the valid center rows only.
        m = mwin_ref[pl.ds(HALO_B, T), :]                           # (T, 1)
        yc = y[HALO_B:HALO_B + T] * m
        partial_stats(stat_ref, yc)

    def conv2_kernel(ywin_ref, mwin_ref, s_ref, t_ref, w_ref,
                     y2_ref, stat_ref, act_ref):
        mwin = mwin_ref[...]                                        # (TwinB, 1)
        # BN1 + ReLU fused; re-zero the spatial padding (ReLU(shift) != 0).
        a = jnp.maximum(
            ywin_ref[...].astype(jnp.float32) * s_ref[...] + t_ref[...], 0.0)
        act_ref[...] = (a * mwin).astype(act_ref.dtype)
        # conv2 for the T center rows.
        y = conv3x3(act_ref, HALO_B, T, w_ref, Cout)                # (T, Cout) f32
        ym = y * mwin[HALO_B:HALO_B + T]
        y2_ref[...] = ym.astype(y2_ref.dtype)
        partial_stats(stat_ref, ym)

    def bn_relu_kernel(y_ref, s_ref, t_ref, o_ref):
        o_ref[...] = jnp.maximum(
            y_ref[...].astype(jnp.float32) * s_ref[...] + t_ref[...], 0.0)

    return conv1_kernel, conv2_kernel, bn_relu_kernel


def encoder_block(x_nchw, params, *, block_rows=1024):
    """MaxPool(2,2) -> [Conv3x3 -> BN(train) -> ReLU] x 2; NCHW in, NCHW out."""
    N, Cin, H, W = x_nchw.shape
    Hp, Wp = H // 2, W // 2
    Cout = params["w1"].shape[0]
    P = N * Hp * Wp                          # BN population per channel

    Hpp, Wpad = Hp + 2, Wp + 2               # spatially zero-padded pooled image
    Rpad = N * Hpp * Wpad                    # rows of the flattened padded layout

    T = min(_round_up(block_rows, 8), _round_up(Rpad, 8))   # rows per grid block
    NB = pl.cdiv(Rpad, T)
    HALO_B = _round_up(Wpad + 1, 8)          # rows a 3x3 tap can reach (8-aligned)
    HALO_A = 2 * HALO_B                      # conv1 must also cover conv2's halo
    TwinA = T + 2 * HALO_A
    TwinB = T + 2 * HALO_B

    # --- wrapper-side prep (cheap XLA ops on the smallest tensors) -----------
    x = x_nchw.astype(jnp.float32)
    pooled = lax.reduce_window(x, -jnp.inf, lax.max,
                               (1, 1, 2, 2), (1, 1, 2, 2), "VALID")
    p_nhwc = jnp.transpose(pooled, (0, 2, 3, 1)).astype(jnp.bfloat16)
    xflat = jnp.pad(p_nhwc, ((0, 0), (1, 1), (1, 1), (0, 0))).reshape(Rpad, Cin)
    # Overlapping per-block halo windows of the (small) pooled input.
    xext = jnp.pad(xflat, ((HALO_A, NB * T + HALO_A - Rpad), (0, 0)))
    xwin = xext[jnp.arange(NB)[:, None] * T + jnp.arange(TwinA)[None, :]]

    # Validity of each padded row (1 inside the image, 0 on padding / tail),
    # windowed the same way; shared by both conv kernels.
    row = jnp.arange(Rpad, dtype=jnp.int32)
    hh, ww = (row // Wpad) % Hpp, row % Wpad
    mflat = ((hh >= 1) & (hh <= Hp) & (ww >= 1) & (ww <= Wp)).astype(jnp.float32)
    mext = jnp.pad(mflat, (HALO_B, NB * T + HALO_B - Rpad))
    mwin = mext[jnp.arange(NB)[:, None] * T + jnp.arange(TwinB)[None, :]][..., None]

    def kmat(w):                             # OIHW -> (9*I, O) im2col weight
        o, i = w.shape[0], w.shape[1]
        return jnp.transpose(w, (2, 3, 1, 0)).reshape(9 * i, o).astype(jnp.bfloat16)

    w1m, w2m = kmat(params["w1"]), kmat(params["w2"])

    def bn_affine(stats, gamma, beta):
        s = jnp.sum(stats[:, 0, :], axis=0)
        q = jnp.sum(stats[:, 1, :], axis=0)
        mean = s / P
        var = jnp.maximum(q / P - mean * mean, 0.0)   # biased batch variance
        scale = gamma.astype(jnp.float32) * lax.rsqrt(var + EPS)
        shift = beta.astype(jnp.float32) - mean * scale
        return scale.reshape(1, Cout), shift.reshape(1, Cout)

    conv1_kernel, conv2_kernel, bn_relu_kernel = _make_kernels(
        Cin=Cin, Cout=Cout, T=T, Wpad=Wpad,
        HALO_A=HALO_A, HALO_B=HALO_B, TwinB=TwinB)

    cparams = pltpu.CompilerParams(dimension_semantics=("parallel",),
                                   vmem_limit_bytes=_vmem_limit_bytes())

    # --- pass 1: conv1 (+halo rows) and BN1 per-block partial sums ------------
    y1win, st1 = pl.pallas_call(
        conv1_kernel,
        grid=(NB,),
        in_specs=[
            pl.BlockSpec((None, TwinA, Cin), lambda b: (b, 0, 0)),
            pl.BlockSpec((None, TwinB, 1), lambda b: (b, 0, 0)),
            pl.BlockSpec((9 * Cin, Cout), lambda b: (0, 0)),
        ],
        out_specs=[
            pl.BlockSpec((None, TwinB, Cout), lambda b: (b, 0, 0)),
            pl.BlockSpec((None, 2, Cout), lambda b: (b, 0, 0)),
        ],
        out_shape=[
            jax.ShapeDtypeStruct((NB, TwinB, Cout), jnp.bfloat16),
            jax.ShapeDtypeStruct((NB, 2, Cout), jnp.float32),
        ],
        compiler_params=cparams,
    )(xwin, mwin, w1m)
    s1, t1 = bn_affine(st1, params["g1"], params["b1"])

    # --- pass 2: BN1+ReLU fused into conv2, BN2 per-block partial sums --------
    y2, st2 = pl.pallas_call(
        conv2_kernel,
        grid=(NB,),
        in_specs=[
            pl.BlockSpec((None, TwinB, Cout), lambda b: (b, 0, 0)),
            pl.BlockSpec((None, TwinB, 1), lambda b: (b, 0, 0)),
            pl.BlockSpec((1, Cout), lambda b: (0, 0)),
            pl.BlockSpec((1, Cout), lambda b: (0, 0)),
            pl.BlockSpec((9 * Cout, Cout), lambda b: (0, 0)),
        ],
        out_specs=[
            pl.BlockSpec((T, Cout), lambda b: (b, 0)),
            pl.BlockSpec((None, 2, Cout), lambda b: (b, 0, 0)),
        ],
        out_shape=[
            jax.ShapeDtypeStruct((NB * T, Cout), jnp.bfloat16),
            jax.ShapeDtypeStruct((NB, 2, Cout), jnp.float32),
        ],
        scratch_shapes=[pltpu.VMEM((TwinB, Cout), jnp.bfloat16)],
        compiler_params=cparams,
    )(y1win, mwin, s1, t1, w2m)
    s2, t2 = bn_affine(st2, params["g2"], params["b2"])

    # --- pass 3: BN2 + ReLU ----------------------------------------------------
    y3 = pl.pallas_call(
        bn_relu_kernel,
        grid=(NB,),
        in_specs=[
            pl.BlockSpec((T, Cout), lambda b: (b, 0)),
            pl.BlockSpec((1, Cout), lambda b: (0, 0)),
            pl.BlockSpec((1, Cout), lambda b: (0, 0)),
        ],
        out_specs=pl.BlockSpec((T, Cout), lambda b: (b, 0)),
        out_shape=jax.ShapeDtypeStruct((NB * T, Cout), jnp.float32),
        compiler_params=cparams,
    )(y2, s2, t2)

    # Strip the spatial padding and return NCHW (matching the PyTorch module).
    # TODO(synk): returning NHWC / the padded layout would save this final
    #             re-layout HBM round trip when the consumer allows it.
    out = y3[:Rpad].reshape(N, Hpp, Wpad, Cout)[:, 1:Hp + 1, 1:Wp + 1, :]
    return jnp.transpose(out, (0, 3, 1, 2))


def ref_encoder_block(x, params):
    """Pure-JAX f32 reference (same semantics as the PyTorch module in train mode)."""
    pooled = lax.reduce_window(x, -jnp.inf, lax.max,
                               (1, 1, 2, 2), (1, 1, 2, 2), "VALID")

    def conv(a, w):
        return lax.conv_general_dilated(
            a, w, (1, 1), ((1, 1), (1, 1)),
            dimension_numbers=("NCHW", "OIHW", "NCHW"),
            precision=lax.Precision.HIGHEST)

    def bn_relu(a, g, b):
        mean = jnp.mean(a, axis=(0, 2, 3), keepdims=True)
        var = jnp.mean((a - mean) ** 2, axis=(0, 2, 3), keepdims=True)
        y = (a - mean) * lax.rsqrt(var + EPS) * g.reshape(1, -1, 1, 1) \
            + b.reshape(1, -1, 1, 1)
        return jnp.maximum(y, 0.0)

    h = bn_relu(conv(pooled, params["w1"]), params["g1"], params["b1"])
    return bn_relu(conv(h, params["w2"]), params["g2"], params["b2"])


if __name__ == "__main__":
    key = jax.random.PRNGKey(0)
    N, Cin, H, W = 2, 4, 16, 16
    Cout = 8
    ks = jax.random.split(key, 7)
    x = jax.random.normal(ks[0], (N, Cin, H, W), jnp.float32)
    params = {
        "w1": 0.2 * jax.random.normal(ks[1], (Cout, Cin, 3, 3), jnp.float32),
        "g1": 1.0 + 0.1 * jax.random.normal(ks[2], (Cout,), jnp.float32),
        "b1": 0.1 * jax.random.normal(ks[3], (Cout,), jnp.float32),
        "w2": 0.2 * jax.random.normal(ks[4], (Cout, Cout, 3, 3), jnp.float32),
        "g2": 1.0 + 0.1 * jax.random.normal(ks[5], (Cout,), jnp.float32),
        "b2": 0.1 * jax.random.normal(ks[6], (Cout,), jnp.float32),
    }

    # block_rows=128 so the toy shape already exercises a multi-block grid
    # (halo recompute, per-block BN partials, tail masking).
    run = jax.jit(functools.partial(encoder_block, block_rows=128))
    out = jax.block_until_ready(run(x, params))
    assert out.shape == (N, Cout, H // 2, W // 2), out.shape

    ref = ref_encoder_block(x, params)
    max_err = float(jnp.max(jnp.abs(out - ref)))
    # Tolerance covers bf16 MXU operands and bf16 HBM intermediates (f32
    # accumulation / BN stats); structural bugs would give O(1) mismatches.
    if not bool(jnp.allclose(out, ref, atol=3e-2, rtol=3e-2)):
        raise AssertionError(f"mismatch vs reference, max abs err = {max_err}")
    print("KERNEL_OK")
</pallas_src>

<mosaic_0001>
module attributes {stable_mosaic.version = 11 : i64} {
  func.func @conv1_kernel(%arg0: i32, %arg1: memref<1x192x4xbf16, #tpu.memory_space<vmem>>, %arg2: memref<1x160x1xf32, #tpu.memory_space<vmem>>, %arg3: memref<36x8xbf16, #tpu.memory_space<vmem>>, %arg4: memref<1x160x8xbf16, #tpu.memory_space<vmem>>, %arg5: memref<1x2x8xf32, #tpu.memory_space<vmem>>) attributes {dimension_semantics = [#tpu.dimension_semantics<parallel>], iteration_bounds = array<i64: 2>, scalar_prefetch = 0 : i64, scratch_operands = 0 : i64, tpu.core_type = #tpu.core_type<tc>, window_params = [{transform_indices = @transform_0, window_bounds = array<i64: 1, 192, 4>}, {transform_indices = @transform_1, window_bounds = array<i64: 1, 160, 1>}, {pipeline_mode = #tpu.pipeline_mode<synchronous>, transform_indices = @transform_2, window_bounds = array<i64: 36, 8>}, {transform_indices = @transform_3, window_bounds = array<i64: 1, 160, 8>}, {transform_indices = @transform_4, window_bounds = array<i64: 1, 2, 8>}]} {
    %c0 = arith.constant 0 : index
    %c5 = arith.constant 5 : index
    %c0_0 = arith.constant 0 : index
    %0 = vector.load %arg1[%c0, %c5, %c0_0] : memref<1x192x4xbf16, #tpu.memory_space<vmem>>, vector<1x160x4xbf16>
    %1 = vector.shape_cast %0 : vector<1x160x4xbf16> to vector<160x4xbf16>
    %c0_1 = arith.constant 0 : index
    %c6 = arith.constant 6 : index
    %c0_2 = arith.constant 0 : index
    %2 = vector.load %arg1[%c0_1, %c6, %c0_2] : memref<1x192x4xbf16, #tpu.memory_space<vmem>>, vector<1x160x4xbf16>
    %3 = vector.shape_cast %2 : vector<1x160x4xbf16> to vector<160x4xbf16>
    %c0_3 = arith.constant 0 : index
    %c7 = arith.constant 7 : index
    %c0_4 = arith.constant 0 : index
    %4 = vector.load %arg1[%c0_3, %c7, %c0_4] : memref<1x192x4xbf16, #tpu.memory_space<vmem>>, vector<1x160x4xbf16>
    %5 = vector.shape_cast %4 : vector<1x160x4xbf16> to vector<160x4xbf16>
    %c0_5 = arith.constant 0 : index
    %c15 = arith.constant 15 : index
    %c0_6 = arith.constant 0 : index
    %6 = vector.load %arg1[%c0_5, %c15, %c0_6] : memref<1x192x4xbf16, #tpu.memory_space<vmem>>, vector<1x160x4xbf16>
    %7 = vector.shape_cast %6 : vector<1x160x4xbf16> to vector<160x4xbf16>
    %c0_7 = arith.constant 0 : index
    %c16 = arith.constant 16 : index
    %c0_8 = arith.constant 0 : index
    %8 = vector.load %arg1[%c0_7, %c16, %c0_8] : memref<1x192x4xbf16, #tpu.memory_space<vmem>>, vector<1x160x4xbf16>
    %9 = vector.shape_cast %8 : vector<1x160x4xbf16> to vector<160x4xbf16>
    %c0_9 = arith.constant 0 : index
    %c17 = arith.constant 17 : index
    %c0_10 = arith.constant 0 : index
    %10 = vector.load %arg1[%c0_9, %c17, %c0_10] : memref<1x192x4xbf16, #tpu.memory_space<vmem>>, vector<1x160x4xbf16>
    %11 = vector.shape_cast %10 : vector<1x160x4xbf16> to vector<160x4xbf16>
    %c0_11 = arith.constant 0 : index
    %c25 = arith.constant 25 : index
    %c0_12 = arith.constant 0 : index
    %12 = vector.load %arg1[%c0_11, %c25, %c0_12] : memref<1x192x4xbf16, #tpu.memory_space<vmem>>, vector<1x160x4xbf16>
    %13 = vector.shape_cast %12 : vector<1x160x4xbf16> to vector<160x4xbf16>
    %c0_13 = arith.constant 0 : index
    %c26 = arith.constant 26 : index
    %c0_14 = arith.constant 0 : index
    %14 = vector.load %arg1[%c0_13, %c26, %c0_14] : memref<1x192x4xbf16, #tpu.memory_space<vmem>>, vector<1x160x4xbf16>
    %15 = vector.shape_cast %14 : vector<1x160x4xbf16> to vector<160x4xbf16>
    %c0_15 = arith.constant 0 : index
    %c27 = arith.constant 27 : index
    %c0_16 = arith.constant 0 : index
    %16 = vector.load %arg1[%c0_15, %c27, %c0_16] : memref<1x192x4xbf16, #tpu.memory_space<vmem>>, vector<1x160x4xbf16>
    %17 = vector.shape_cast %16 : vector<1x160x4xbf16> to vector<160x4xbf16>
    %18 = tpu.concatenate %1, %3, %5, %7, %9, %11, %13, %15, %17 in 1 : vector<160x4xbf16>, vector<160x4xbf16>, vector<160x4xbf16>, vector<160x4xbf16>, vector<160x4xbf16>, vector<160x4xbf16>, vector<160x4xbf16>, vector<160x4xbf16>, vector<160x4xbf16> -> vector<160x36xbf16>
    %c0_17 = arith.constant 0 : index
    %c0_18 = arith.constant 0 : index
    %19 = vector.load %arg3[%c0_17, %c0_18] : memref<36x8xbf16, #tpu.memory_space<vmem>>, vector<36x8xbf16>
    %cst = arith.constant dense<0.000000e+00> : vector<160x8xf32>
    %20 = tpu.matmul %18, %19, %cst {dimension_numbers = #tpu.dot_dimension_numbers<[1], [0], [0], [1], [0, 0, 1, 1], [], []>} : vector<160x36xbf16>, vector<36x8xbf16>, vector<160x8xf32> -> vector<160x8xf32>
    %21 = arith.truncf %20 : vector<160x8xf32> to vector<160x8xbf16>
    %c0_19 = arith.constant 0 : index
    %c0_20 = arith.constant 0 : index
    %c0_21 = arith.constant 0 : index
    %22 = vector.load %arg4[%c0_19, %c0_20, %c0_21] : memref<1x160x8xbf16, #tpu.memory_space<vmem>>, vector<1x160x8xbf16>
    %23 = vector.shape_cast %22 : vector<1x160x8xbf16> to vector<160x8xbf16>
    %24 = vector.shape_cast %21 : vector<160x8xbf16> to vector<1x160x8xbf16>
    tpu.vector_store %arg4[%c0_19, %c0_20, %c0_21], %24 {strides = array<i32>} : memref<1x160x8xbf16, #tpu.memory_space<vmem>>, vector<1x160x8xbf16>,
    %c0_22 = arith.constant 0 : index
    %c16_23 = arith.constant 16 : index
    %c0_24 = arith.constant 0 : index
    %25 = vector.load %arg2[%c0_22, %c16_23, %c0_24] : memref<1x160x1xf32, #tpu.memory_space<vmem>>, vector<1x128x1xf32>
    %26 = vector.shape_cast %25 : vector<1x128x1xf32> to vector<128x1xf32>
    %27 = vector.extract_strided_slice %20 {offsets = [16, 0], sizes = [128, 8], strides = [1, 1]} : vector<160x8xf32> to vector<128x8xf32>
    %28 = vector.broadcast %26 : vector<128x1xf32> to vector<128x8xf32>
    %29 = arith.mulf %27, %28 : vector<128x8xf32>
    %cst_25 = arith.constant dense<0.000000e+00> : vector<8xf32>
    %30 = vector.multi_reduction <add>, %29, %cst_25 [0] : vector<128x8xf32> to vector<8xf32>
    %31 = vector.shape_cast %30 : vector<8xf32> to vector<1x8xf32>
    %32 = arith.mulf %29, %29 : vector<128x8xf32>
    %cst_26 = arith.constant dense<0.000000e+00> : vector<8xf32>
    %33 = vector.multi_reduction <add>, %32, %cst_26 [0] : vector<128x8xf32> to vector<8xf32>
    %34 = vector.shape_cast %33 : vector<8xf32> to vector<1x8xf32>
    %35 = tpu.concatenate %31, %34 in 0 : vector<1x8xf32>, vector<1x8xf32> -> vector<2x8xf32>
    %c0_27 = arith.constant 0 : index
    %c0_28 = arith.constant 0 : index
    %c0_29 = arith.constant 0 : index
    %36 = vector.load %arg5[%c0_27, %c0_28, %c0_29] : memref<1x2x8xf32, #tpu.memory_space<vmem>>, vector<1x2x8xf32>
    %37 = vector.shape_cast %36 : vector<1x2x8xf32> to vector<2x8xf32>
    %38 = vector.shape_cast %35 : vector<2x8xf32> to vector<1x2x8xf32>
    tpu.vector_store %arg5[%c0_27, %c0_28, %c0_29], %38 {strides = array<i32>} : memref<1x2x8xf32, #tpu.memory_space<vmem>>, vector<1x2x8xf32>,
    return
  }
  func.func @transform_0(%arg0: i32) -> (i32, i32, i32) {
    %c0_i32 = arith.constant 0 : i32
    %c0_i32_0 = arith.constant 0 : i32
    %c0_i32_1 = arith.constant 0 : i32
    return %arg0, %c0_i32, %c0_i32_0 : i32, i32, i32
  }
  func.func @transform_1(%arg0: i32) -> (i32, i32, i32) {
    %c0_i32 = arith.constant 0 : i32
    %c0_i32_0 = arith.constant 0 : i32
    %c0_i32_1 = arith.constant 0 : i32
    return %arg0, %c0_i32, %c0_i32_0 : i32, i32, i32
  }
  func.func @transform_2(%arg0: i32) -> (i32, i32) {
    %c0_i32 = arith.constant 0 : i32
    %c0_i32_0 = arith.constant 0 : i32
    %c0_i32_1 = arith.constant 0 : i32
    return %c0_i32, %c0_i32_0 : i32, i32
  }
  func.func @transform_3(%arg0: i32) -> (i32, i32, i32) {
    %c0_i32 = arith.constant 0 : i32
    %c0_i32_0 = arith.constant 0 : i32
    %c0_i32_1 = arith.constant 0 : i32
    return %arg0, %c0_i32, %c0_i32_0 : i32, i32, i32
  }
  func.func @transform_4(%arg0: i32) -> (i32, i32, i32) {
    %c0_i32 = arith.constant 0 : i32
    %c0_i32_0 = arith.constant 0 : i32
    %c0_i32_1 = arith.constant 0 : i32
    return %arg0, %c0_i32, %c0_i32_0 : i32, i32, i32
  }
}

module attributes {stable_mosaic.version = 11 : i64} {
  func.func @conv2_kernel(%arg0: i32, %arg1: memref<1x160x8xbf16, #tpu.memory_space<vmem>>, %arg2: memref<1x160x1xf32, #tpu.memory_space<vmem>>, %arg3: memref<1x8xf32, #tpu.memory_space<vmem>>, %arg4: memref<1x8xf32, #tpu.memory_space<vmem>>, %arg5: memref<72x8xbf16, #tpu.memory_space<vmem>>, %arg6: memref<128x8xbf16, #tpu.memory_space<vmem>>, %arg7: memref<1x2x8xf32, #tpu.memory_space<vmem>>, %arg8: memref<160x8xbf16, #tpu.memory_space<vmem>>) attributes {dimension_semantics = [#tpu.dimension_semantics<parallel>], iteration_bounds = array<i64: 2>, scalar_prefetch = 0 : i64, scratch_operands = 1 : i64, tpu.core_type = #tpu.core_type<tc>, window_params = [{transform_indices = @transform_0, window_bounds = array<i64: 1, 160, 8>}, {transform_indices = @transform_1, window_bounds = array<i64: 1, 160, 1>}, {pipeline_mode = #tpu.pipeline_mode<synchronous>, transform_indices = @transform_2, window_bounds = array<i64: 1, 8>}, {pipeline_mode = #tpu.pipeline_mode<synchronous>, transform_indices = @transform_3, window_bounds = array<i64: 1, 8>}, {pipeline_mode = #tpu.pipeline_mode<synchronous>, transform_indices = @transform_4, window_bounds = array<i64: 72, 8>}, {transform_indices = @transform_5, window_bounds = array<i64: 128, 8>}, {transform_indices = @transform_6, window_bounds = array<i64: 1, 2, 8>}]} {
    %c0 = arith.constant 0 : index
    %c0_0 = arith.constant 0 : index
    %c0_1 = arith.constant 0 : index
    %0 = vector.load %arg2[%c0, %c0_0, %c0_1] : memref<1x160x1xf32, #tpu.memory_space<vmem>>, vector<1x160x1xf32>
    %1 = vector.shape_cast %0 : vector<1x160x1xf32> to vector<160x1xf32>
    %c0_2 = arith.constant 0 : index
    %c0_3 = arith.constant 0 : index
    %c0_4 = arith.constant 0 : index
    %2 = vector.load %arg1[%c0_2, %c0_3, %c0_4] : memref<1x160x8xbf16, #tpu.memory_space<vmem>>, vector<1x160x8xbf16>
    %3 = vector.shape_cast %2 : vector<1x160x8xbf16> to vector<160x8xbf16>
    %4 = arith.extf %3 : vector<160x8xbf16> to vector<160x8xf32>
    %c0_5 = arith.constant 0 : index
    %c0_6 = arith.constant 0 : index
    %5 = vector.load %arg3[%c0_5, %c0_6] : memref<1x8xf32, #tpu.memory_space<vmem>>, vector<1x8xf32>
    %6 = vector.broadcast %5 : vector<1x8xf32> to vector<160x8xf32>
    %7 = arith.mulf %4, %6 : vector<160x8xf32>
    %c0_7 = arith.constant 0 : index
    %c0_8 = arith.constant 0 : index
    %8 = vector.load %arg4[%c0_7, %c0_8] : memref<1x8xf32, #tpu.memory_space<vmem>>, vector<1x8xf32>
    %9 = vector.broadcast %8 : vector<1x8xf32> to vector<160x8xf32>
    %10 = arith.addf %7, %9 : vector<160x8xf32>
    %cst = arith.constant 0.000000e+00 : f32
    %11 = vector.broadcast %cst : f32 to vector<160x8xf32>
    %12 = arith.maximumf %10, %11 : vector<160x8xf32>
    %13 = vector.broadcast %1 : vector<160x1xf32> to vector<160x8xf32>
    %14 = arith.mulf %12, %13 : vector<160x8xf32>
    %15 = arith.truncf %14 : vector<160x8xf32> to vector<160x8xbf16>
    %c0_9 = arith.constant 0 : index
    %c0_10 = arith.constant 0 : index
    %16 = vector.load %arg8[%c0_9, %c0_10] : memref<160x8xbf16, #tpu.memory_space<vmem>>, vector<160x8xbf16>
    tpu.vector_store %arg8[%c0_9, %c0_10], %15 {strides = array<i32>} : memref<160x8xbf16, #tpu.memory_space<vmem>>, vector<160x8xbf16>,
    %c5 = arith.constant 5 : index
    %c0_11 = arith.constant 0 : index
    %17 = vector.load %arg8[%c5, %c0_11] : memref<160x8xbf16, #tpu.memory_space<vmem>>, vector<128x8xbf16>
    %c6 = arith.constant 6 : index
    %c0_12 = arith.constant 0 : index
    %18 = vector.load %arg8[%c6, %c0_12] : memref<160x8xbf16, #tpu.memory_space<vmem>>, vector<128x8xbf16>
    %c7 = arith.constant 7 : index
    %c0_13 = arith.constant 0 : index
    %19 = vector.load %arg8[%c7, %c0_13] : memref<160x8xbf16, #tpu.memory_space<vmem>>, vector<128x8xbf16>
    %c15 = arith.constant 15 : index
    %c0_14 = arith.constant 0 : index
    %20 = vector.load %arg8[%c15, %c0_14] : memref<160x8xbf16, #tpu.memory_space<vmem>>, vector<128x8xbf16>
    %c16 = arith.constant 16 : index
    %c0_15 = arith.constant 0 : index
    %21 = vector.load %arg8[%c16, %c0_15] : memref<160x8xbf16, #tpu.memory_space<vmem>>, vector<128x8xbf16>
    %c17 = arith.constant 17 : index
    %c0_16 = arith.constant 0 : index
    %22 = vector.load %arg8[%c17, %c0_16] : memref<160x8xbf16, #tpu.memory_space<vmem>>, vector<128x8xbf16>
    %c25 = arith.constant 25 : index
    %c0_17 = arith.constant 0 : index
    %23 = vector.load %arg8[%c25, %c0_17] : memref<160x8xbf16, #tpu.memory_space<vmem>>, vector<128x8xbf16>
    %c26 = arith.constant 26 : index
    %c0_18 = arith.constant 0 : index
    %24 = vector.load %arg8[%c26, %c0_18] : memref<160x8xbf16, #tpu.memory_space<vmem>>, vector<128x8xbf16>
    %c27 = arith.constant 27 : index
    %c0_19 = arith.constant 0 : index
    %25 = vector.load %arg8[%c27, %c0_19] : memref<160x8xbf16, #tpu.memory_space<vmem>>, vector<128x8xbf16>
    %26 = tpu.concatenate %17, %18, %19, %20, %21, %22, %23, %24, %25 in 1 : vector<128x8xbf16>, vector<128x8xbf16>, vector<128x8xbf16>, vector<128x8xbf16>, vector<128x8xbf16>, vector<128x8xbf16>, vector<128x8xbf16>, vector<128x8xbf16>, vector<128x8xbf16> -> vector<128x72xbf16>
    %c0_20 = arith.constant 0 : index
    %c0_21 = arith.constant 0 : index
    %27 = vector.load %arg5[%c0_20, %c0_21] : memref<72x8xbf16, #tpu.memory_space<vmem>>, vector<72x8xbf16>
    %cst_22 = arith.constant dense<0.000000e+00> : vector<128x8xf32>
    %28 = tpu.matmul %26, %27, %cst_22 {dimension_numbers = #tpu.dot_dimension_numbers<[1], [0], [0], [1], [0, 0, 1, 1], [], []>} : vector<128x72xbf16>, vector<72x8xbf16>, vector<128x8xf32> -> vector<128x8xf32>
    %29 = vector.extract_strided_slice %1 {offsets = [16, 0], sizes = [128, 1], strides = [1, 1]} : vector<160x1xf32> to vector<128x1xf32>
    %30 = vector.broadcast %29 : vector<128x1xf32> to vector<128x8xf32>
    %31 = arith.mulf %28, %30 : vector<128x8xf32>
    %32 = arith.truncf %31 : vector<128x8xf32> to vector<128x8xbf16>
    %c0_23 = arith.constant 0 : index
    %c0_24 = arith.constant 0 : index
    %33 = vector.load %arg6[%c0_23, %c0_24] : memref<128x8xbf16, #tpu.memory_space<vmem>>, vector<128x8xbf16>
    tpu.vector_store %arg6[%c0_23, %c0_24], %32 {strides = array<i32>} : memref<128x8xbf16, #tpu.memory_space<vmem>>, vector<128x8xbf16>,
    %cst_25 = arith.constant dense<0.000000e+00> : vector<8xf32>
    %34 = vector.multi_reduction <add>, %31, %cst_25 [0] : vector<128x8xf32> to vector<8xf32>
    %35 = vector.shape_cast %34 : vector<8xf32> to vector<1x8xf32>
    %36 = arith.mulf %31, %31 : vector<128x8xf32>
    %cst_26 = arith.constant dense<0.000000e+00> : vector<8xf32>
    %37 = vector.multi_reduction <add>, %36, %cst_26 [0] : vector<128x8xf32> to vector<8xf32>
    %38 = vector.shape_cast %37 : vector<8xf32> to vector<1x8xf32>
    %39 = tpu.concatenate %35, %38 in 0 : vector<1x8xf32>, vector<1x8xf32> -> vector<2x8xf32>
    %c0_27 = arith.constant 0 : index
    %c0_28 = arith.constant 0 : index
    %c0_29 = arith.constant 0 : index
    %40 = vector.load %arg7[%c0_27, %c0_28, %c0_29] : memref<1x2x8xf32, #tpu.memory_space<vmem>>, vector<1x2x8xf32>
    %41 = vector.shape_cast %40 : vector<1x2x8xf32> to vector<2x8xf32>
    %42 = vector.shape_cast %39 : vector<2x8xf32> to vector<1x2x8xf32>
    tpu.vector_store %arg7[%c0_27, %c0_28, %c0_29], %42 {strides = array<i32>} : memref<1x2x8xf32, #tpu.memory_space<vmem>>, vector<1x2x8xf32>,
    return
  }
  func.func @transform_0(%arg0: i32) -> (i32, i32, i32) {
    %c0_i32 = arith.constant 0 : i32
    %c0_i32_0 = arith.constant 0 : i32
    %c0_i32_1 = arith.constant 0 : i32
    return %arg0, %c0_i32, %c0_i32_0 : i32, i32, i32
  }
  func.func @transform_1(%arg0: i32) -> (i32, i32, i32) {
    %c0_i32 = arith.constant 0 : i32
    %c0_i32_0 = arith.constant 0 : i32
    %c0_i32_1 = arith.constant 0 : i32
    return %arg0, %c0_i32, %c0_i32_0 : i32, i32, i32
  }
  func.func @transform_2(%arg0: i32) -> (i32, i32) {
    %c0_i32 = arith.constant 0 : i32
    %c0_i32_0 = arith.constant 0 : i32
    %c0_i32_1 = arith.constant 0 : i32
    return %c0_i32, %c0_i32_0 : i32, i32
  }
  func.func @transform_3(%arg0: i32) -> (i32, i32) {
    %c0_i32 = arith.constant 0 : i32
    %c0_i32_0 = arith.constant 0 : i32
    %c0_i32_1 = arith.constant 0 : i32
    return %c0_i32, %c0_i32_0 : i32, i32
  }
  func.func @transform_4(%arg0: i32) -> (i32, i32) {
    %c0_i32 = arith.constant 0 : i32
    %c0_i32_0 = arith.constant 0 : i32
    %c0_i32_1 = arith.constant 0 : i32
    return %c0_i32, %c0_i32_0 : i32, i32
  }
  func.func @transform_5(%arg0: i32) -> (i32, i32) {
    %c0_i32 = arith.constant 0 : i32
    %c0_i32_0 = arith.constant 0 : i32
    return %arg0, %c0_i32 : i32, i32
  }
  func.func @transform_6(%arg0: i32) -> (i32, i32, i32) {
    %c0_i32 = arith.constant 0 : i32
    %c0_i32_0 = arith.constant 0 : i32
    %c0_i32_1 = arith.constant 0 : i32
    return %arg0, %c0_i32, %c0_i32_0 : i32, i32, i32
  }
}

module attributes {stable_mosaic.version = 11 : i64} {
  func.func @bn_relu_kernel(%arg0: i32, %arg1: memref<128x8xbf16, #tpu.memory_space<vmem>>, %arg2: memref<1x8xf32, #tpu.memory_space<vmem>>, %arg3: memref<1x8xf32, #tpu.memory_space<vmem>>, %arg4: memref<128x8xf32, #tpu.memory_space<vmem>>) attributes {dimension_semantics = [#tpu.dimension_semantics<parallel>], iteration_bounds = array<i64: 2>, scalar_prefetch = 0 : i64, scratch_operands = 0 : i64, tpu.core_type = #tpu.core_type<tc>, window_params = [{transform_indices = @transform_0, window_bounds = array<i64: 128, 8>}, {pipeline_mode = #tpu.pipeline_mode<synchronous>, transform_indices = @transform_1, window_bounds = array<i64: 1, 8>}, {pipeline_mode = #tpu.pipeline_mode<synchronous>, transform_indices = @transform_2, window_bounds = array<i64: 1, 8>}, {transform_indices = @transform_3, window_bounds = array<i64: 128, 8>}]} {
    %c0 = arith.constant 0 : index
    %c0_0 = arith.constant 0 : index
    %0 = vector.load %arg1[%c0, %c0_0] : memref<128x8xbf16, #tpu.memory_space<vmem>>, vector<128x8xbf16>
    %1 = arith.extf %0 : vector<128x8xbf16> to vector<128x8xf32>
    %c0_1 = arith.constant 0 : index
    %c0_2 = arith.constant 0 : index
    %2 = vector.load %arg2[%c0_1, %c0_2] : memref<1x8xf32, #tpu.memory_space<vmem>>, vector<1x8xf32>
    %3 = vector.broadcast %2 : vector<1x8xf32> to vector<128x8xf32>
    %4 = arith.mulf %1, %3 : vector<128x8xf32>
    %c0_3 = arith.constant 0 : index
    %c0_4 = arith.constant 0 : index
    %5 = vector.load %arg3[%c0_3, %c0_4] : memref<1x8xf32, #tpu.memory_space<vmem>>, vector<1x8xf32>
    %6 = vector.broadcast %5 : vector<1x8xf32> to vector<128x8xf32>
    %7 = arith.addf %4, %6 : vector<128x8xf32>
    %cst = arith.constant 0.000000e+00 : f32
    %8 = vector.broadcast %cst : f32 to vector<128x8xf32>
    %9 = arith.maximumf %7, %8 : vector<128x8xf32>
    %c0_5 = arith.constant 0 : index
    %c0_6 = arith.constant 0 : index
    %10 = vector.load %arg4[%c0_5, %c0_6] : memref<128x8xf32, #tpu.memory_space<vmem>>, vector<128x8xf32>
    tpu.vector_store %arg4[%c0_5, %c0_6], %9 {strides = array<i32>} : memref<128x8xf32, #tpu.memory_space<vmem>>, vector<128x8xf32>,
    return
  }
  func.func @transform_0(%arg0: i32) -> (i32, i32) {
    %c0_i32 = arith.constant 0 : i32
    %c0_i32_0 = arith.constant 0 : i32
    return %arg0, %c0_i32 : i32, i32
  }
  func.func @transform_1(%arg0: i32) -> (i32, i32) {
    %c0_i32 = arith.constant 0 : i32
    %c0_i32_0 = arith.constant 0 : i32
    %c0_i32_1 = arith.constant 0 : i32
    return %c0_i32, %c0_i32_0 : i32, i32
  }
  func.func @transform_2(%arg0: i32) -> (i32, i32) {
    %c0_i32 = arith.constant 0 : i32
    %c0_i32_0 = arith.constant 0 : i32
    %c0_i32_1 = arith.constant 0 : i32
    return %c0_i32, %c0_i32_0 : i32, i32
  }
  func.func @transform_3(%arg0: i32) -> (i32, i32) {
    %c0_i32 = arith.constant 0 : i32
    %c0_i32_0 = arith.constant 0 : i32
    return %arg0, %c0_i32 : i32, i32
  }
}

</mosaic_0001>

<llo_original>
// kernel: encoder_block.5
$region0: #{encoder_block.5}
  #allocation0 [shape = 'u32[]', space=smem, size = 0x4, offset = 0x4, fixed_abs, tag = 'smem constant byte address 0x4 - core index']
  #allocation1 [shape = 'u32[144,128]{1,0:T(1,128)}', space=vmem, size = 0x12000, scoped, tag = 'internal scratch']
  %s0 = inlined_call_operand.vmem [shape: bf16[256,8], index: 0, kind: input, shape index: {}]
  %s1 = inlined_call_operand.vmem [shape: f32[1,8], index: 1, kind: input, shape index: {}]
  %s2 = inlined_call_operand.vmem [shape: f32[1,8], index: 2, kind: input, shape index: {}]
  %s3 = inlined_call_operand.vmem [shape: f32[256,8], index: 3, kind: output, shape index: {}]
  %s4 = sld [smem:[#allocation0]]
  $region45: #{encoder_block.5} parent=0
    _
  %s6 = ssub.s32 1, %s4
  %s7 = scalar_select 0, %s6, %s4
  loop: start=0, step=1, limit=4
  $region2: #{encoder_block.5} parent=0 // loop_pre_header
    _
  $region3: #{encoder_block.5} parent=0 // loop_header
    %s9 = sphi 0, %s13
    %p10 = scmp.ge.s32.totalorder %s9, 4
    %s19 = sphi 0, %s21
    %s22 = sphi 0, %s19
    %s23 = sphi 0, %s22
    %s39 = sphi 0, %s23
    %s43 = sphi 0, %s43
    %s45 = sphi 0, %s43
    %s46 = sphi 0, %s45
    %s60 = sphi 0, %s46
    %s64 = sphi 0, %s64
    %s66 = sphi 0, %s64
    %s67 = sphi 0, %s66
    %s81 = sphi 0, %s67
    %s87 = sphi 0, %s89
    %s90 = sphi 0, %s87
    %s91 = sphi 0, %s90
    %s107 = sphi 0, %s91
  $region4: #{encoder_block.5} parent=0 // loop_header_branch
    %12 = sbr.rel (%p10) target = $region8
  $region5: #{encoder_block.5} parent=0 // loop_body
    %s14 = ssub.s32 %s9, 1
    %s15 = ssub.s32 %s9, 2
    %s16 = sadd.s32 %s9, 1
    %s17 = ssub.s32 %s9, %s16
    %p18 = scmp.eq.s32.totalorder %s17, 0
    %s20 = sadd.s32 %s19, 1
    %s21 = scalar_select %p18, %s19, %s20
    %p24 = pneg %p18
    %p25 = scmp.eq.s32.totalorder %s9, 1
    %p26 = por %p24, %p25
    %p27 = scmp.ne.s32.totalorder %s19, %s22
    %p28 = scmp.eq.s32.totalorder %s9, 0
    %p29 = por %p27, %p28
    %p30 = scmp.ne.s32.totalorder %s19, %s22
    %p31 = scmp.eq.s32.totalorder %s14, 1
    %p32 = por %p30, %p31
    %p33 = scmp.ne.s32.totalorder %s22, %s23
    %p34 = scmp.eq.s32.totalorder %s14, 0
    %p35 = por %p33, %p34
    %p36 = scmp.ne.s32.totalorder %s22, %s23
    %p37 = scmp.eq.s32.totalorder %s15, 1
    %p38 = por %p36, %p37
    %p40 = scmp.ne.s32.totalorder %s23, %s39
    %p41 = scmp.eq.s32.totalorder %s15, 0
    %p42 = por %p40, %p41
    %s44 = sadd.s32 %s43, 1
    %p47 = scmp.eq.s32.totalorder %s9, 1
    %p48 = scmp.ne.s32.totalorder %s43, %s45
    %p49 = scmp.eq.s32.totalorder %s9, 0
    %p50 = por %p48, %p49
    %p51 = scmp.ne.s32.totalorder %s43, %s45
    %p52 = scmp.eq.s32.totalorder %s14, 1
    %p53 = por %p51, %p52
    %p54 = scmp.ne.s32.totalorder %s45, %s46
    %p55 = scmp.eq.s32.totalorder %s14, 0
    %p56 = por %p54, %p55
    %p57 = scmp.ne.s32.totalorder %s45, %s46
    %p58 = scmp.eq.s32.totalorder %s15, 1
    %p59 = por %p57, %p58
    %p61 = scmp.ne.s32.totalorder %s46, %s60
    %p62 = scmp.eq.s32.totalorder %s15, 0
    %p63 = por %p61, %p62
    %s65 = sadd.s32 %s64, 1
    %p68 = scmp.eq.s32.totalorder %s9, 1
    %p69 = scmp.ne.s32.totalorder %s64, %s66
    %p70 = scmp.eq.s32.totalorder %s9, 0
    %p71 = por %p69, %p70
    %p72 = scmp.ne.s32.totalorder %s64, %s66
    %p73 = scmp.eq.s32.totalorder %s14, 1
    %p74 = por %p72, %p73
    %p75 = scmp.ne.s32.totalorder %s66, %s67
    %p76 = scmp.eq.s32.totalorder %s14, 0
    %p77 = por %p75, %p76
    %p78 = scmp.ne.s32.totalorder %s66, %s67
    %p79 = scmp.eq.s32.totalorder %s15, 1
    %p80 = por %p78, %p79
    %p82 = scmp.ne.s32.totalorder %s67, %s81
    %p83 = scmp.eq.s32.totalorder %s15, 0
    %p84 = por %p82, %p83
    %s85 = ssub.s32 %s9, %s16
    %p86 = scmp.eq.s32.totalorder %s85, 0
    %s88 = sadd.s32 %s87, 1
    %s89 = scalar_select %p86, %s87, %s88
    %p92 = pneg %p86
    %p93 = scmp.eq.s32.totalorder %s9, 1
    %p94 = por %p92, %p93
    %p95 = scmp.ne.s32.totalorder %s87, %s90
    %p96 = scmp.eq.s32.totalorder %s9, 0
    %p97 = por %p95, %p96
    %p98 = scmp.ne.s32.totalorder %s87, %s90
    %p99 = scmp.eq.s32.totalorder %s14, 1
    %p100 = por %p98, %p99
    %p101 = scmp.ne.s32.totalorder %s90, %s91
    %p102 = scmp.eq.s32.totalorder %s14, 0
    %p103 = por %p101, %p102
    %p104 = scmp.ne.s32.totalorder %s90, %s91
    %p105 = scmp.eq.s32.totalorder %s15, 1
    %p106 = por %p104, %p105
    %p108 = scmp.ne.s32.totalorder %s91, %s107
    %p109 = scmp.eq.s32.totalorder %s15, 0
    %p110 = por %p108, %p109
    %p111 = scmp.le.s32.totalorder 1, %s9
    %p112 = scmp.lt.s32.totalorder %s9, 3
    %p113 = pnand %p111, %p112
    %p114 = pneg %p113
    // Predicated region
    $region9: #{encoder_block.5} parent=5 // pred_check
      _
    $region10: #{encoder_block.5} parent=5 // pred_check_branch
      %116 = sbr.rel (%p113) target = $region12
    $region11: #{encoder_block.5} parent=5 // pred_region
      %s117 = ssub.s32 %s9, 1
      // Predicated region
      $region13: #{encoder_block.5} parent=11 // pred_check
        %p118 = pneg %p56
      $region14: #{encoder_block.5} parent=11 // pred_check_branch
        %120 = sbr.rel (%p118) target = $region16
      $region15: #{encoder_block.5} parent=11 // pred_region
        _
      $region16: #{encoder_block.5} parent=11 // pred_fallthru
        _
      // Predicated region
      $region17: #{encoder_block.5} parent=11 // pred_check
        %p121 = pneg %p77
      $region18: #{encoder_block.5} parent=11 // pred_check_branch
        %123 = sbr.rel (%p121) target = $region20
      $region19: #{encoder_block.5} parent=11 // pred_region
        _
      $region20: #{encoder_block.5} parent=11 // pred_fallthru
        _
    $region12: #{encoder_block.5} parent=5 // pred_fallthru
      _
    %p124 = scmp.lt.s32.totalorder %s9, 2
    // Predicated region
    $region21: #{encoder_block.5} parent=5 // pred_check
      %p125 = pneg %p124
    $region22: #{encoder_block.5} parent=5 // pred_check_branch
      %127 = sbr.rel (%p125) target = $region24
    $region23: #{encoder_block.5} parent=5 // pred_region
      // Predicated region
      $region25: #{encoder_block.5} parent=23 // pred_check
        %p128 = pneg %p29
      $region26: #{encoder_block.5} parent=23 // pred_check_branch
        %130 = sbr.rel (%p128) target = $region28
      $region27: #{encoder_block.5} parent=23 // pred_region
        %s131 = smul.u32 16, %s9
        %p132 = scmp.lt.s32.totalorder %s131, 31
        %s133 = scalar_select %p132, %s131, 31
        %s134 = smul.addr %s133, 4
        %s135 = scalar_lea.vmem %s0, %s134
        %s136 = smul.u32 16, %s9
      $region28: #{encoder_block.5} parent=23 // pred_fallthru
        _
    $region24: #{encoder_block.5} parent=5 // pred_fallthru
      _
    %p137 = scmp.le.s32.totalorder 1, %s9
    %p138 = scmp.lt.s32.totalorder %s9, 3
    %p139 = pnand %p137, %p138
    %p140 = pneg %p139
    // Predicated region
    $region29: #{encoder_block.5} parent=5 // pred_check
      _
    $region30: #{encoder_block.5} parent=5 // pred_check_branch
      %142 = sbr.rel (%p139) target = $region32
    $region31: #{encoder_block.5} parent=5 // pred_region
      %s143 = ssub.s32 %s9, 1
      %s144 = smul.u32 16, %s14
      %p145 = scmp.lt.s32.totalorder %s144, 31
      %s146 = scalar_select %p145, %s144, 31
      %s147 = smul.addr %s146, 4
      %s148 = scalar_lea.vmem %s0, %s147
      %p149 = pneg %p35
      %p150 = pneg %p32
      %p151 = pneg %p56
      %p152 = pneg %p53
      %p153 = pneg %p77
      %p154 = pneg %p74
      %p155 = pneg %p103
      %p156 = pneg %p100
      %s157 = smul.u32 16, %s14
      %p158 = scmp.lt.s32.totalorder %s157, 31
      %s159 = scalar_select %p158, %s157, 31
      %s160 = smul.addr %s159, 8
      %s161 = scalar_lea.vmem %s3, %s160
      %s162 = smul.u32 16, %s14
      %p163 = scmp.lt.s32.totalorder %s162, 31
      %s164 = scalar_select %p163, %s162, 31
      %s165 = smul.addr %s164, 4
      %s166 = scalar_lea.vmem %s0, %s165
      %s167 = smul.u32 16, %s14
      %s168 = smul.u32 16, %s14
      %p169 = scmp.lt.s32.totalorder %s168, 31
      %s170 = scalar_select %p169, %s168, 31
      %s171 = smul.addr %s170, 8
      %s172 = scalar_lea.vmem %s3, %s171
      %s173 = smul.u32 16, %s14
      %v174 = vld [vmem:[%s166] sm:$0xf]
      %v175 = vld [vmem:[%s166 + $0x4] sm:$0xf]
      %v176 = vld [vmem:[%s166 + $0x8] sm:$0xf]
      %v177 = vld [vmem:[%s166 + $0xc] sm:$0xf]
      %v178 = vld [vmem:[%s166 + $0x10] sm:$0xf]
      %v179 = vld [vmem:[%s166 + $0x14] sm:$0xf]
      %v180 = vld [vmem:[%s166 + $0x18] sm:$0xf]
      %v181 = vld [vmem:[%s166 + $0x1c] sm:$0xf]
      %v182 = vld [vmem:[%s166 + $0x20] sm:$0xf]
      %v183 = vld [vmem:[%s166 + $0x24] sm:$0xf]
      %v184 = vld [vmem:[%s166 + $0x28] sm:$0xf]
      %v185 = vld [vmem:[%s166 + $0x2c] sm:$0xf]
      %v186 = vld [vmem:[%s166 + $0x30] sm:$0xf]
      %v187 = vld [vmem:[%s166 + $0x34] sm:$0xf]
      %v188 = vld [vmem:[%s166 + $0x38] sm:$0xf]
      %v189 = vld [vmem:[%s166 + $0x3c] sm:$0xf]
      %v190 = vunpack.c.l.bf16 %v174
      %v191 = vunpack.c.l.bf16 %v175
      %v192 = vunpack.c.l.bf16 %v176
      %v193 = vunpack.c.l.bf16 %v177
      %v194 = vunpack.c.l.bf16 %v178
      %v195 = vunpack.c.l.bf16 %v179
      %v196 = vunpack.c.l.bf16 %v180
      %v197 = vunpack.c.l.bf16 %v181
      %v198 = vunpack.c.l.bf16 %v182
      %v199 = vunpack.c.l.bf16 %v183
      %v200 = vunpack.c.l.bf16 %v184
      %v201 = vunpack.c.l.bf16 %v185
      %v202 = vunpack.c.l.bf16 %v186
      %v203 = vunpack.c.l.bf16 %v187
      %v204 = vunpack.c.l.bf16 %v188
      %v205 = vunpack.c.l.bf16 %v189
      %v206 = vld [vmem:[%s1] sm:$0x1]
      %v208 = vlaneseq
      %v209 = vshrl.u32 %v208, 7
      %v210 = vsub.s32 0, %v209
      %v211 = vrot.slane %v206, %v210
      %v213 = vmul.f32 %v190, %v211
      %v214 = vmul.f32 %v191, %v211
      %v215 = vmul.f32 %v192, %v211
      %v216 = vmul.f32 %v193, %v211
      %v217 = vmul.f32 %v194, %v211
      %v218 = vmul.f32 %v195, %v211
      %v219 = vmul.f32 %v196, %v211
      %v220 = vmul.f32 %v197, %v211
      %v221 = vmul.f32 %v198, %v211
      %v222 = vmul.f32 %v199, %v211
      %v223 = vmul.f32 %v200, %v211
      %v224 = vmul.f32 %v201, %v211
      %v225 = vmul.f32 %v202, %v211
      %v226 = vmul.f32 %v203, %v211
      %v227 = vmul.f32 %v204, %v211
      %v228 = vmul.f32 %v205, %v211
      %v229 = vld [vmem:[%s2] sm:$0x1]
      %v231 = vlaneseq
      %v232 = vshrl.u32 %v231, 7
      %v233 = vsub.s32 0, %v232
      %v234 = vrot.slane %v229, %v233
      %v236 = vadd.f32 %v213, %v234
      %v237 = vadd.f32 %v214, %v234
      %v238 = vadd.f32 %v215, %v234
      %v239 = vadd.f32 %v216, %v234
      %v240 = vadd.f32 %v217, %v234
      %v241 = vadd.f32 %v218, %v234
      %v242 = vadd.f32 %v219, %v234
      %v243 = vadd.f32 %v220, %v234
      %v244 = vadd.f32 %v221, %v234
      %v245 = vadd.f32 %v222, %v234
      %v246 = vadd.f32 %v223, %v234
      %v247 = vadd.f32 %v224, %v234
      %v248 = vadd.f32 %v225, %v234
      %v249 = vadd.f32 %v226, %v234
      %v250 = vadd.f32 %v227, %v234
      %v251 = vadd.f32 %v228, %v234
      %v252 = vmax.f32 %v236, 0.0
      %v253 = vmax.f32 %v237, 0.0
      %v254 = vmax.f32 %v238, 0.0
      %v255 = vmax.f32 %v239, 0.0
      %v256 = vmax.f32 %v240, 0.0
      %v257 = vmax.f32 %v241, 0.0
      %v258 = vmax.f32 %v242, 0.0
      %v259 = vmax.f32 %v243, 0.0
      %v260 = vmax.f32 %v244, 0.0
      %v261 = vmax.f32 %v245, 0.0
      %v262 = vmax.f32 %v246, 0.0
      %v263 = vmax.f32 %v247, 0.0
      %v264 = vmax.f32 %v248, 0.0
      %v265 = vmax.f32 %v249, 0.0
      %v266 = vmax.f32 %v250, 0.0
      %v267 = vmax.f32 %v251, 0.0
      %vm268 = vcmask 64512
      %269 = vst.msk [vmem:[%s172] sm:$0xff] %vm268, %v252
      %270 = vst.msk [vmem:[%s172 + $0x8] sm:$0xff] %vm268, %v253
      %271 = vst.msk [vmem:[%s172 + $0x10] sm:$0xff] %vm268, %v254
      %272 = vst.msk [vmem:[%s172 + $0x18] sm:$0xff] %vm268, %v255
      %273 = vst.msk [vmem:[%s172 + $0x20] sm:$0xff] %vm268, %v256
      %274 = vst.msk [vmem:[%s172 + $0x28] sm:$0xff] %vm268, %v257
      %275 = vst.msk [vmem:[%s172 + $0x30] sm:$0xff] %vm268, %v258
      %276 = vst.msk [vmem:[%s172 + $0x38] sm:$0xff] %vm268, %v259
      %277 = vst.msk [vmem:[%s172 + $0x40] sm:$0xff] %vm268, %v260
      %278 = vst.msk [vmem:[%s172 + $0x48] sm:$0xff] %vm268, %v261
      %279 = vst.msk [vmem:[%s172 + $0x50] sm:$0xff] %vm268, %v262
      %280 = vst.msk [vmem:[%s172 + $0x58] sm:$0xff] %vm268, %v263
      %281 = vst.msk [vmem:[%s172 + $0x60] sm:$0xff] %vm268, %v264
      %282 = vst.msk [vmem:[%s172 + $0x68] sm:$0xff] %vm268, %v265
      %283 = vst.msk [vmem:[%s172 + $0x70] sm:$0xff] %vm268, %v266
      %284 = vst.msk [vmem:[%s172 + $0x78] sm:$0xff] %vm268, %v267
      %s285 = smul.u32 16, %s14
      %p286 = scmp.lt.s32.totalorder %s285, 31
      %s287 = scalar_select %p286, %s285, 31
      %s288 = smul.addr %s287, 8
      %s289 = scalar_lea.vmem %s3, %s288
      // Predicated region
      $region33: #{encoder_block.5} parent=31 // pred_check
        %p290 = pneg %p100
      $region34: #{encoder_block.5} parent=31 // pred_check_branch
        %292 = sbr.rel (%p290) target = $region36
      $region35: #{encoder_block.5} parent=31 // pred_region
        %s293 = smul.u32 16, %s14
      $region36: #{encoder_block.5} parent=31 // pred_fallthru
        _
    $region32: #{encoder_block.5} parent=5 // pred_fallthru
      _
    %p294 = scmp.le.s32.totalorder 2, %s9
    // Predicated region
    $region37: #{encoder_block.5} parent=5 // pred_check
      %p295 = pneg %p294
    $region38: #{encoder_block.5} parent=5 // pred_check_branch
      %297 = sbr.rel (%p295) target = $region40
    $region39: #{encoder_block.5} parent=5 // pred_region
      %s298 = ssub.s32 %s9, 2
      // Predicated region
      $region41: #{encoder_block.5} parent=39 // pred_check
        %p299 = pneg %p106
      $region42: #{encoder_block.5} parent=39 // pred_check_branch
        %301 = sbr.rel (%p299) target = $region44
      $region43: #{encoder_block.5} parent=39 // pred_region
        %s302 = smul.u32 16, %s15
        %p303 = scmp.lt.s32.totalorder %s302, 31
        %s304 = scalar_select %p303, %s302, 31
        %s305 = smul.addr %s304, 8
        %s306 = scalar_lea.vmem %s3, %s305
      $region44: #{encoder_block.5} parent=39 // pred_fallthru
        _
    $region40: #{encoder_block.5} parent=5 // pred_fallthru
      _
  $region6: #{encoder_block.5} parent=0 // loop_footer
    %s13 = sadd.s32 1, %s9
  $region7: #{encoder_block.5} parent=0 // loop_footer_branch
    %8 = sbr.rel target = $region3
  $region8: #{encoder_block.5} parent=0 // loop_exit
    _

// kernel: encoder_block.4
$region0: #{encoder_block.4}
  #allocation0 [shape = 'u32[]', space=smem, size = 0x4, offset = 0x4, fixed_abs, tag = 'smem constant byte address 0x4 - core index']
  #allocation1 [shape = 'u32[144,128]{1,0:T(1,128)}', space=vmem, size = 0x12000, scoped, tag = 'internal scratch']
  #allocation2 [shape = 'bf16[160,8]{1,0:T(16,128)(2,1)}', space=vmem, size = 0xa000, scoped, tag = 'scratch operand']
  %s0 = inlined_call_operand.vmem [shape: bf16[2,160,8], index: 0, kind: input, shape index: {}]
  %s1 = inlined_call_operand.vmem [shape: f32[2,160,1], index: 1, kind: input, shape index: {}]
  %s2 = inlined_call_operand.vmem [shape: f32[1,8], index: 2, kind: input, shape index: {}]
  %s3 = inlined_call_operand.vmem [shape: f32[1,8], index: 3, kind: input, shape index: {}]
  %s4 = inlined_call_operand.vmem [shape: bf16[72,8], index: 4, kind: input, shape index: {}]
  %s5 = inlined_call_operand.vmem [shape: bf16[256,8], index: 5, kind: output, shape index: {0}]
  %s6 = inlined_call_operand.vmem [shape: f32[2,2,8], index: 6, kind: output, shape index: {1}]
  %7 = xla_tuple %s5, %s6
  %s8 = sld [smem:[#allocation0]]
  $region61: #{encoder_block.4} parent=0
    _
  %s10 = ssub.s32 1, %s8
  %s11 = scalar_select 0, %s10, %s8
  loop: start=0, step=1, limit=4
  $region2: #{encoder_block.4} parent=0 // loop_pre_header
    _
  $region3: #{encoder_block.4} parent=0 // loop_header
    %s13 = sphi 0, %s17
    %p14 = scmp.ge.s32.totalorder %s13, 4
    %s23 = sphi 0, %s25
    %s26 = sphi 0, %s23
    %s27 = sphi 0, %s26
    %s43 = sphi 0, %s27
    %s49 = sphi 0, %s51
    %s52 = sphi 0, %s49
    %s53 = sphi 0, %s52
    %s69 = sphi 0, %s53
    %s73 = sphi 0, %s73
    %s75 = sphi 0, %s73
    %s76 = sphi 0, %s75
    %s90 = sphi 0, %s76
    %s94 = sphi 0, %s94
    %s96 = sphi 0, %s94
    %s97 = sphi 0, %s96
    %s111 = sphi 0, %s97
    %s115 = sphi 0, %s115
    %s117 = sphi 0, %s115
    %s118 = sphi 0, %s117
    %s132 = sphi 0, %s118
    %s138 = sphi 0, %s140
    %s141 = sphi 0, %s138
    %s142 = sphi 0, %s141
    %s158 = sphi 0, %s142
    %s164 = sphi 0, %s166
    %s167 = sphi 0, %s164
    %s168 = sphi 0, %s167
    %s184 = sphi 0, %s168
  $region4: #{encoder_block.4} parent=0 // loop_header_branch
    %16 = sbr.rel (%p14) target = $region8
  $region5: #{encoder_block.4} parent=0 // loop_body
    %s18 = ssub.s32 %s13, 1
    %s19 = ssub.s32 %s13, 2
    %s20 = sadd.s32 %s13, 1
    %s21 = ssub.s32 %s13, %s20
    %p22 = scmp.eq.s32.totalorder %s21, 0
    %s24 = sadd.s32 %s23, 1
    %s25 = scalar_select %p22, %s23, %s24
    %p28 = pneg %p22
    %p29 = scmp.eq.s32.totalorder %s13, 1
    %p30 = por %p28, %p29
    %p31 = scmp.ne.s32.totalorder %s23, %s26
    %p32 = scmp.eq.s32.totalorder %s13, 0
    %p33 = por %p31, %p32
    %p34 = scmp.ne.s32.totalorder %s23, %s26
    %p35 = scmp.eq.s32.totalorder %s18, 1
    %p36 = por %p34, %p35
    %p37 = scmp.ne.s32.totalorder %s26, %s27
    %p38 = scmp.eq.s32.totalorder %s18, 0
    %p39 = por %p37, %p38
    %p40 = scmp.ne.s32.totalorder %s26, %s27
    %p41 = scmp.eq.s32.totalorder %s19, 1
    %p42 = por %p40, %p41
    %p44 = scmp.ne.s32.totalorder %s27, %s43
    %p45 = scmp.eq.s32.totalorder %s19, 0
    %p46 = por %p44, %p45
    %s47 = ssub.s32 %s13, %s20
    %p48 = scmp.eq.s32.totalorder %s47, 0
    %s50 = sadd.s32 %s49, 1
    %s51 = scalar_select %p48, %s49, %s50
    %p54 = pneg %p48
    %p55 = scmp.eq.s32.totalorder %s13, 1
    %p56 = por %p54, %p55
    %p57 = scmp.ne.s32.totalorder %s49, %s52
    %p58 = scmp.eq.s32.totalorder %s13, 0
    %p59 = por %p57, %p58
    %p60 = scmp.ne.s32.totalorder %s49, %s52
    %p61 = scmp.eq.s32.totalorder %s18, 1
    %p62 = por %p60, %p61
    %p63 = scmp.ne.s32.totalorder %s52, %s53
    %p64 = scmp.eq.s32.totalorder %s18, 0
    %p65 = por %p63, %p64
    %p66 = scmp.ne.s32.totalorder %s52, %s53
    %p67 = scmp.eq.s32.totalorder %s19, 1
    %p68 = por %p66, %p67
    %p70 = scmp.ne.s32.totalorder %s53, %s69
    %p71 = scmp.eq.s32.totalorder %s19, 0
    %p72 = por %p70, %p71
    %s74 = sadd.s32 %s73, 1
    %p77 = scmp.eq.s32.totalorder %s13, 1
    %p78 = scmp.ne.s32.totalorder %s73, %s75
    %p79 = scmp.eq.s32.totalorder %s13, 0
    %p80 = por %p78, %p79
    %p81 = scmp.ne.s32.totalorder %s73, %s75
    %p82 = scmp.eq.s32.totalorder %s18, 1
    %p83 = por %p81, %p82
    %p84 = scmp.ne.s32.totalorder %s75, %s76
    %p85 = scmp.eq.s32.totalorder %s18, 0
    %p86 = por %p84, %p85
    %p87 = scmp.ne.s32.totalorder %s75, %s76
    %p88 = scmp.eq.s32.totalorder %s19, 1
    %p89 = por %p87, %p88
    %p91 = scmp.ne.s32.totalorder %s76, %s90
    %p92 = scmp.eq.s32.totalorder %s19, 0
    %p93 = por %p91, %p92
    %s95 = sadd.s32 %s94, 1
    %p98 = scmp.eq.s32.totalorder %s13, 1
    %p99 = scmp.ne.s32.totalorder %s94, %s96
    %p100 = scmp.eq.s32.totalorder %s13, 0
    %p101 = por %p99, %p100
    %p102 = scmp.ne.s32.totalorder %s94, %s96
    %p103 = scmp.eq.s32.totalorder %s18, 1
    %p104 = por %p102, %p103
    %p105 = scmp.ne.s32.totalorder %s96, %s97
    %p106 = scmp.eq.s32.totalorder %s18, 0
    %p107 = por %p105, %p106
    %p108 = scmp.ne.s32.totalorder %s96, %s97
    %p109 = scmp.eq.s32.totalorder %s19, 1
    %p110 = por %p108, %p109
    %p112 = scmp.ne.s32.totalorder %s97, %s111
    %p113 = scmp.eq.s32.totalorder %s19, 0
    %p114 = por %p112, %p113
    %s116 = sadd.s32 %s115, 1
    %p119 = scmp.eq.s32.totalorder %s13, 1
    %p120 = scmp.ne.s32.totalorder %s115, %s117
    %p121 = scmp.eq.s32.totalorder %s13, 0
    %p122 = por %p120, %p121
    %p123 = scmp.ne.s32.totalorder %s115, %s117
    %p124 = scmp.eq.s32.totalorder %s18, 1
    %p125 = por %p123, %p124
    %p126 = scmp.ne.s32.totalorder %s117, %s118
    %p127 = scmp.eq.s32.totalorder %s18, 0
    %p128 = por %p126, %p127
    %p129 = scmp.ne.s32.totalorder %s117, %s118
    %p130 = scmp.eq.s32.totalorder %s19, 1
    %p131 = por %p129, %p130
    %p133 = scmp.ne.s32.totalorder %s118, %s132
    %p134 = scmp.eq.s32.totalorder %s19, 0
    %p135 = por %p133, %p134
    %s136 = ssub.s32 %s13, %s20
    %p137 = scmp.eq.s32.totalorder %s136, 0
    %s139 = sadd.s32 %s138, 1
    %s140 = scalar_select %p137, %s138, %s139
    %p143 = pneg %p137
    %p144 = scmp.eq.s32.totalorder %s13, 1
    %p145 = por %p143, %p144
    %p146 = scmp.ne.s32.totalorder %s138, %s141
    %p147 = scmp.eq.s32.totalorder %s13, 0
    %p148 = por %p146, %p147
    %p149 = scmp.ne.s32.totalorder %s138, %s141
    %p150 = scmp.eq.s32.totalorder %s18, 1
    %p151 = por %p149, %p150
    %p152 = scmp.ne.s32.totalorder %s141, %s142
    %p153 = scmp.eq.s32.totalorder %s18, 0
    %p154 = por %p152, %p153
    %p155 = scmp.ne.s32.totalorder %s141, %s142
    %p156 = scmp.eq.s32.totalorder %s19, 1
    %p157 = por %p155, %p156
    %p159 = scmp.ne.s32.totalorder %s142, %s158
    %p160 = scmp.eq.s32.totalorder %s19, 0
    %p161 = por %p159, %p160
    %s162 = ssub.s32 %s13, %s20
    %p163 = scmp.eq.s32.totalorder %s162, 0
    %s165 = sadd.s32 %s164, 1
    %s166 = scalar_select %p163, %s164, %s165
    %p169 = pneg %p163
    %p170 = scmp.eq.s32.totalorder %s13, 1
    %p171 = por %p169, %p170
    %p172 = scmp.ne.s32.totalorder %s164, %s167
    %p173 = scmp.eq.s32.totalorder %s13, 0
    %p174 = por %p172, %p173
    %p175 = scmp.ne.s32.totalorder %s164, %s167
    %p176 = scmp.eq.s32.totalorder %s18, 1
    %p177 = por %p175, %p176
    %p178 = scmp.ne.s32.totalorder %s167, %s168
    %p179 = scmp.eq.s32.totalorder %s18, 0
    %p180 = por %p178, %p179
    %p181 = scmp.ne.s32.totalorder %s167, %s168
    %p182 = scmp.eq.s32.totalorder %s19, 1
    %p183 = por %p181, %p182
    %p185 = scmp.ne.s32.totalorder %s168, %s184
    %p186 = scmp.eq.s32.totalorder %s19, 0
    %p187 = por %p185, %p186
    %p188 = scmp.le.s32.totalorder 1, %s13
    %p189 = scmp.lt.s32.totalorder %s13, 3
    %p190 = pnand %p188, %p189
    %p191 = pneg %p190
    // Predicated region
    $region9: #{encoder_block.4} parent=5 // pred_check
      _
    $region10: #{encoder_block.4} parent=5 // pred_check_branch
      %193 = sbr.rel (%p190) target = $region12
    $region11: #{encoder_block.4} parent=5 // pred_region
      %s194 = ssub.s32 %s13, 1
      // Predicated region
      $region13: #{encoder_block.4} parent=11 // pred_check
        %p195 = pneg %p86
      $region14: #{encoder_block.4} parent=11 // pred_check_branch
        %197 = sbr.rel (%p195) target = $region16
      $region15: #{encoder_block.4} parent=11 // pred_region
        _
      $region16: #{encoder_block.4} parent=11 // pred_fallthru
        _
      // Predicated region
      $region17: #{encoder_block.4} parent=11 // pred_check
        %p198 = pneg %p107
      $region18: #{encoder_block.4} parent=11 // pred_check_branch
        %200 = sbr.rel (%p198) target = $region20
      $region19: #{encoder_block.4} parent=11 // pred_region
        _
      $region20: #{encoder_block.4} parent=11 // pred_fallthru
        _
      // Predicated region
      $region21: #{encoder_block.4} parent=11 // pred_check
        %p201 = pneg %p128
      $region22: #{encoder_block.4} parent=11 // pred_check_branch
        %203 = sbr.rel (%p201) target = $region24
      $region23: #{encoder_block.4} parent=11 // pred_region
        _
      $region24: #{encoder_block.4} parent=11 // pred_fallthru
        _
    $region12: #{encoder_block.4} parent=5 // pred_fallthru
      _
    %p204 = scmp.lt.s32.totalorder %s13, 2
    // Predicated region
    $region25: #{encoder_block.4} parent=5 // pred_check
      %p205 = pneg %p204
    $region26: #{encoder_block.4} parent=5 // pred_check_branch
      %207 = sbr.rel (%p205) target = $region28
    $region27: #{encoder_block.4} parent=5 // pred_region
      // Predicated region
      $region29: #{encoder_block.4} parent=27 // pred_check
        %p208 = pneg %p33
      $region30: #{encoder_block.4} parent=27 // pred_check_branch
        %210 = sbr.rel (%p208) target = $region32
      $region31: #{encoder_block.4} parent=27 // pred_region
        %p211 = scmp.lt.s32.totalorder %s13, 1
        %s212 = scalar_select %p211, %s13, 1
        %s213 = smul.addr %s212, 20
        %s214 = smul.addr %s213, 4
        %s215 = scalar_lea.vmem %s0, %s214
      $region32: #{encoder_block.4} parent=27 // pred_fallthru
        _
      // Predicated region
      $region33: #{encoder_block.4} parent=27 // pred_check
        %p216 = pneg %p59
      $region34: #{encoder_block.4} parent=27 // pred_check_branch
        %218 = sbr.rel (%p216) target = $region36
      $region35: #{encoder_block.4} parent=27 // pred_region
        %p219 = scmp.lt.s32.totalorder %s13, 1
        %s220 = scalar_select %p219, %s13, 1
        %s221 = smul.addr %s220, 20
        %s222 = smul.addr %s221, 8
        %s223 = scalar_lea.vmem %s1, %s222
      $region36: #{encoder_block.4} parent=27 // pred_fallthru
        _
    $region28: #{encoder_block.4} parent=5 // pred_fallthru
      _
    %p224 = scmp.le.s32.totalorder 1, %s13
    %p225 = scmp.lt.s32.totalorder %s13, 3
    %p226 = pnand %p224, %p225
    %p227 = pneg %p226
    // Predicated region
    $region37: #{encoder_block.4} parent=5 // pred_check
      _
    $region38: #{encoder_block.4} parent=5 // pred_check_branch
      %229 = sbr.rel (%p226) target = $region40
    $region39: #{encoder_block.4} parent=5 // pred_region
      %s230 = ssub.s32 %s13, 1
      %p231 = scmp.lt.s32.totalorder %s18, 1
      %s232 = scalar_select %p231, %s18, 1
      %s233 = smul.addr %s232, 20
      %s234 = smul.addr %s233, 4
      %s235 = scalar_lea.vmem %s0, %s234
      %p236 = pneg %p39
      %p237 = pneg %p36
      %p238 = scmp.lt.s32.totalorder %s18, 1
      %s239 = scalar_select %p238, %s18, 1
      %s240 = smul.addr %s239, 20
      %s241 = smul.addr %s240, 8
      %s242 = scalar_lea.vmem %s1, %s241
      %p243 = pneg %p65
      %p244 = pneg %p62
      %p245 = pneg %p86
      %p246 = pneg %p83
      %p247 = pneg %p107
      %p248 = pneg %p104
      %p249 = pneg %p128
      %p250 = pneg %p125
      %p251 = pneg %p154
      %p252 = pneg %p151
      %s253 = smul.u32 16, %s18
      %p254 = scmp.lt.s32.totalorder %s253, 31
      %s255 = scalar_select %p254, %s253, 31
      %s256 = smul.addr %s255, 4
      %s257 = scalar_lea.vmem %s5, %s256
      %p258 = pneg %p180
      %p259 = pneg %p177
      %p260 = scmp.lt.s32.totalorder %s18, 1
      %s261 = scalar_select %p260, %s18, 1
      %s262 = smul.addr %s261, 2
      %s263 = scalar_lea.vmem %s6, %s262
      %p264 = scmp.lt.s32.totalorder %s18, 1
      %s265 = scalar_select %p264, %s18, 1
      %s266 = smul.addr %s265, 20
      %s267 = smul.addr %s266, 4
      %s268 = scalar_lea.vmem %s0, %s267
      %p269 = scmp.lt.s32.totalorder %s18, 1
      %s270 = scalar_select %p269, %s18, 1
      %s271 = smul.addr %s270, 20
      %s272 = smul.addr %s271, 8
      %s273 = scalar_lea.vmem %s1, %s272
      %s274 = smul.u32 16, %s18
      %p275 = scmp.lt.s32.totalorder %s274, 31
      %s276 = scalar_select %p275, %s274, 31
      %s277 = smul.addr %s276, 4
      %s278 = scalar_lea.vmem %s5, %s277
      %s279 = smul.u32 16, %s18
      %p280 = scmp.lt.s32.totalorder %s18, 1
      %s281 = scalar_select %p280, %s18, 1
      %s282 = smul.addr %s281, 2
      %s283 = scalar_lea.vmem %s6, %s282
      %v285 = vld [vmem:[%s273] sm:$0xff]
      %v286 = vld [vmem:[%s273 + $0x8] sm:$0xff]
      %v287 = vld [vmem:[%s273 + $0x10] sm:$0xff]
      %v288 = vld [vmem:[%s273 + $0x18] sm:$0xff]
      %v289 = vld [vmem:[%s273 + $0x20] sm:$0xff]
      %v290 = vld [vmem:[%s273 + $0x28] sm:$0xff]
      %v291 = vld [vmem:[%s273 + $0x30] sm:$0xff]
      %v292 = vld [vmem:[%s273 + $0x38] sm:$0xff]
      %v293 = vld [vmem:[%s273 + $0x40] sm:$0xff]
      %v294 = vld [vmem:[%s273 + $0x48] sm:$0xff]
      %v295 = vld [vmem:[%s273 + $0x50] sm:$0xff]
      %v296 = vld [vmem:[%s273 + $0x58] sm:$0xff]
      %v297 = vld [vmem:[%s273 + $0x60] sm:$0xff]
      %v298 = vld [vmem:[%s273 + $0x68] sm:$0xff]
      %v299 = vld [vmem:[%s273 + $0x70] sm:$0xff]
      %v300 = vld [vmem:[%s273 + $0x78] sm:$0xff]
      %v301 = vld [vmem:[%s273 + $0x80] sm:$0xff]
      %v302 = vld [vmem:[%s273 + $0x88] sm:$0xff]
      %v303 = vld [vmem:[%s273 + $0x90] sm:$0xff]
      %v304 = vld [vmem:[%s273 + $0x98] sm:$0xff]
      %v305 = vld [vmem:[%s268] sm:$0xf]
      %v306 = vld [vmem:[%s268 + $0x4] sm:$0xf]
      %v307 = vld [vmem:[%s268 + $0x8] sm:$0xf]
      %v308 = vld [vmem:[%s268 + $0xc] sm:$0xf]
      %v309 = vld [vmem:[%s268 + $0x10] sm:$0xf]
      %v310 = vld [vmem:[%s268 + $0x14] sm:$0xf]
      %v311 = vld [vmem:[%s268 + $0x18] sm:$0xf]
      %v312 = vld [vmem:[%s268 + $0x1c] sm:$0xf]
      %v313 = vld [vmem:[%s268 + $0x20] sm:$0xf]
      %v314 = vld [vmem:[%s268 + $0x24] sm:$0xf]
      %v315 = vld [vmem:[%s268 + $0x28] sm:$0xf]
      %v316 = vld [vmem:[%s268 + $0x2c] sm:$0xf]
      %v317 = vld [vmem:[%s268 + $0x30] sm:$0xf]
      %v318 = vld [vmem:[%s268 + $0x34] sm:$0xf]
      %v319 = vld [vmem:[%s268 + $0x38] sm:$0xf]
      %v320 = vld [vmem:[%s268 + $0x3c] sm:$0xf]
      %v321 = vld [vmem:[%s268 + $0x40] sm:$0xf]
      %v322 = vld [vmem:[%s268 + $0x44] sm:$0xf]
      %v323 = vld [vmem:[%s268 + $0x48] sm:$0xf]
      %v324 = vld [vmem:[%s268 + $0x4c] sm:$0xf]
      %v325 = vunpack.c.l.bf16 %v305
      %v326 = vunpack.c.l.bf16 %v306
      %v327 = vunpack.c.l.bf16 %v307
      %v328 = vunpack.c.l.bf16 %v308
      %v329 = vunpack.c.l.bf16 %v309
      %v330 = vunpack.c.l.bf16 %v310
      %v331 = vunpack.c.l.bf16 %v311
      %v332 = vunpack.c.l.bf16 %v312
      %v333 = vunpack.c.l.bf16 %v313
      %v334 = vunpack.c.l.bf16 %v314
      %v335 = vunpack.c.l.bf16 %v315
      %v336 = vunpack.c.l.bf16 %v316
      %v337 = vunpack.c.l.bf16 %v317
      %v338 = vunpack.c.l.bf16 %v318
      %v339 = vunpack.c.l.bf16 %v319
      %v340 = vunpack.c.l.bf16 %v320
      %v341 = vunpack.c.l.bf16 %v321
      %v342 = vunpack.c.l.bf16 %v322
      %v343 = vunpack.c.l.bf16 %v323
      %v344 = vunpack.c.l.bf16 %v324
      %v345 = vld [vmem:[%s2] sm:$0x1]
      %v347 = vlaneseq
      %v348 = vshrl.u32 %v347, 7
      %v349 = vsub.s32 0, %v348
      %v350 = vrot.slane %v345, %v349
      %v352 = vmul.f32 %v325, %v350
      %v353 = vmul.f32 %v326, %v350
      %v354 = vmul.f32 %v327, %v350
      %v355 = vmul.f32 %v328, %v350
      %v356 = vmul.f32 %v329, %v350
      %v357 = vmul.f32 %v330, %v350
      %v358 = vmul.f32 %v331, %v350
      %v359 = vmul.f32 %v332, %v350
      %v360 = vmul.f32 %v333, %v350
      %v361 = vmul.f32 %v334, %v350
      %v362 = vmul.f32 %v335, %v350
      %v363 = vmul.f32 %v336, %v350
      %v364 = vmul.f32 %v337, %v350
      %v365 = vmul.f32 %v338, %v350
      %v366 = vmul.f32 %v339, %v350
      %v367 = vmul.f32 %v340, %v350
      %v368 = vmul.f32 %v341, %v350
      %v369 = vmul.f32 %v342, %v350
      %v370 = vmul.f32 %v343, %v350
      %v371 = vmul.f32 %v344, %v350
      %v372 = vld [vmem:[%s3] sm:$0x1]
      %v374 = vlaneseq
      %v375 = vshrl.u32 %v374, 7
      %v376 = vsub.s32 0, %v375
      %v377 = vrot.slane %v372, %v376
      %v379 = vadd.f32 %v352, %v377
      %v380 = vadd.f32 %v353, %v377
      %v381 = vadd.f32 %v354, %v377
      %v382 = vadd.f32 %v355, %v377
      %v383 = vadd.f32 %v356, %v377
      %v384 = vadd.f32 %v357, %v377
      %v385 = vadd.f32 %v358, %v377
      %v386 = vadd.f32 %v359, %v377
      %v387 = vadd.f32 %v360, %v377
      %v388 = vadd.f32 %v361, %v377
      %v389 = vadd.f32 %v362, %v377
      %v390 = vadd.f32 %v363, %v377
      %v391 = vadd.f32 %v364, %v377
      %v392 = vadd.f32 %v365, %v377
      %v393 = vadd.f32 %v366, %v377
      %v394 = vadd.f32 %v367, %v377
      %v395 = vadd.f32 %v368, %v377
      %v396 = vadd.f32 %v369, %v377
      %v397 = vadd.f32 %v370, %v377
      %v398 = vadd.f32 %v371, %v377
      %v399 = vmax.f32 %v379, 0.0
      %v400 = vmax.f32 %v380, 0.0
      %v401 = vmax.f32 %v381, 0.0
      %v402 = vmax.f32 %v382, 0.0
      %v403 = vmax.f32 %v383, 0.0
      %v404 = vmax.f32 %v384, 0.0
      %v405 = vmax.f32 %v385, 0.0
      %v406 = vmax.f32 %v386, 0.0
      %v407 = vmax.f32 %v387, 0.0
      %v408 = vmax.f32 %v388, 0.0
      %v409 = vmax.f32 %v389, 0.0
      %v410 = vmax.f32 %v390, 0.0
      %v411 = vmax.f32 %v391, 0.0
      %v412 = vmax.f32 %v392, 0.0
      %v413 = vmax.f32 %v393, 0.0
      %v414 = vmax.f32 %v394, 0.0
      %v415 = vmax.f32 %v395, 0.0
      %v416 = vmax.f32 %v396, 0.0
      %v417 = vmax.f32 %v397, 0.0
      %v418 = vmax.f32 %v398, 0.0
      %420 = vset.pattern.permute.xlu0 0
      %421 = vperm.xlu0 %420, %v285
      %v422 = vpop.permute.xlu0 %421
      %425 = vset.pattern.permute.xlu0 0
      %426 = vperm.xlu0 %425, %v286
      %v427 = vpop.permute.xlu0 %426
      %430 = vset.pattern.permute.xlu0 0
      %431 = vperm.xlu0 %430, %v287
      %v432 = vpop.permute.xlu0 %431
      %435 = vset.pattern.permute.xlu0 0
      %436 = vperm.xlu0 %435, %v288
      %v437 = vpop.permute.xlu0 %436
      %440 = vset.pattern.permute.xlu0 0
      %441 = vperm.xlu0 %440, %v289
      %v442 = vpop.permute.xlu0 %441
      %445 = vset.pattern.permute.xlu0 0
      %446 = vperm.xlu0 %445, %v290
      %v447 = vpop.permute.xlu0 %446
      %450 = vset.pattern.permute.xlu0 0
      %451 = vperm.xlu0 %450, %v291
      %v452 = vpop.permute.xlu0 %451
      %455 = vset.pattern.permute.xlu0 0
      %456 = vperm.xlu0 %455, %v292
      %v457 = vpop.permute.xlu0 %456
      %460 = vset.pattern.permute.xlu0 0
      %461 = vperm.xlu0 %460, %v293
      %v462 = vpop.permute.xlu0 %461
      %465 = vset.pattern.permute.xlu0 0
      %466 = vperm.xlu0 %465, %v294
      %v467 = vpop.permute.xlu0 %466
      %470 = vset.pattern.permute.xlu0 0
      %471 = vperm.xlu0 %470, %v295
      %v472 = vpop.permute.xlu0 %471
      %475 = vset.pattern.permute.xlu0 0
      %476 = vperm.xlu0 %475, %v296
      %v477 = vpop.permute.xlu0 %476
      %480 = vset.pattern.permute.xlu0 0
      %481 = vperm.xlu0 %480, %v297
      %v482 = vpop.permute.xlu0 %481
      %485 = vset.pattern.permute.xlu0 0
      %486 = vperm.xlu0 %485, %v298
      %v487 = vpop.permute.xlu0 %486
      %490 = vset.pattern.permute.xlu0 0
      %491 = vperm.xlu0 %490, %v299
      %v492 = vpop.permute.xlu0 %491
      %495 = vset.pattern.permute.xlu0 0
      %496 = vperm.xlu0 %495, %v300
      %v497 = vpop.permute.xlu0 %496
      %500 = vset.pattern.permute.xlu0 0
      %501 = vperm.xlu0 %500, %v301
      %v502 = vpop.permute.xlu0 %501
      %505 = vset.pattern.permute.xlu0 0
      %506 = vperm.xlu0 %505, %v302
      %v507 = vpop.permute.xlu0 %506
      %510 = vset.pattern.permute.xlu0 0
      %511 = vperm.xlu0 %510, %v303
      %v512 = vpop.permute.xlu0 %511
      %515 = vset.pattern.permute.xlu0 0
      %516 = vperm.xlu0 %515, %v304
      %v517 = vpop.permute.xlu0 %516
      %v519 = vmul.f32 %v399, %v422
      %v520 = vmul.f32 %v400, %v427
      %v521 = vmul.f32 %v401, %v432
      %v522 = vmul.f32 %v402, %v437
      %v523 = vmul.f32 %v403, %v442
      %v524 = vmul.f32 %v404, %v447
      %v525 = vmul.f32 %v405, %v452
      %v526 = vmul.f32 %v406, %v457
      %v527 = vmul.f32 %v407, %v462
      %v528 = vmul.f32 %v408, %v467
      %v529 = vmul.f32 %v409, %v472
      %v530 = vmul.f32 %v410, %v477
      %v531 = vmul.f32 %v411, %v482
      %v532 = vmul.f32 %v412, %v487
      %v533 = vmul.f32 %v413, %v492
      %v534 = vmul.f32 %v414, %v497
      %v535 = vmul.f32 %v415, %v502
      %v536 = vmul.f32 %v416, %v507
      %v537 = vmul.f32 %v417, %v512
      %v538 = vmul.f32 %v418, %v517
      %v539 = vpack.c.bf16 %v520, %v519
      %v540 = vpack.c.bf16 %v522, %v521
      %v541 = vpack.c.bf16 %v524, %v523
      %v542 = vpack.c.bf16 %v526, %v525
      %v543 = vpack.c.bf16 %v528, %v527
      %v544 = vpack.c.bf16 %v530, %v529
      %v545 = vpack.c.bf16 %v532, %v531
      %v546 = vpack.c.bf16 %v534, %v533
      %v547 = vpack.c.bf16 %v536, %v535
      %v548 = vpack.c.bf16 %v538, %v537
      %vm549 = vcmask 64512
      %550 = vst.msk [vmem:[#allocation2] sm:$0xff] %vm549, %v539
      %551 = vst.msk [vmem:[#allocation2 + $0x8] sm:$0xff] %vm549, %v540
      %552 = vst.msk [vmem:[#allocation2 + $0x10] sm:$0xff] %vm549, %v541
      %553 = vst.msk [vmem:[#allocation2 + $0x18] sm:$0xff] %vm549, %v542
      %554 = vst.msk [vmem:[#allocation2 + $0x20] sm:$0xff] %vm549, %v543
      %555 = vst.msk [vmem:[#allocation2 + $0x28] sm:$0xff] %vm549, %v544
      %556 = vst.msk [vmem:[#allocation2 + $0x30] sm:$0xff] %vm549, %v545
      %557 = vst.msk [vmem:[#allocation2 + $0x38] sm:$0xff] %vm549, %v546
      %558 = vst.msk [vmem:[#allocation2 + $0x40] sm:$0xff] %vm549, %v547
      %559 = vst.msk [vmem:[#allocation2 + $0x48] sm:$0xff] %vm549, %v548
      %v560 = vld [vmem:[#allocation2] sm:$0xfc]
      %v561 = vld [vmem:[#allocation2 + $0x8] sm:$0xff]
      %v562 = vld [vmem:[#allocation2 + $0x10] sm:$0xff]
      %v563 = vld [vmem:[#allocation2 + $0x18] sm:$0xff]
      %v564 = vld [vmem:[#allocation2 + $0x20] sm:$0xff]
      %v565 = vld [vmem:[#allocation2 + $0x28] sm:$0xff]
      %v566 = vld [vmem:[#allocation2 + $0x30] sm:$0xff]
      %v567 = vld [vmem:[#allocation2 + $0x38] sm:$0xff]
      %v568 = vld [vmem:[#allocation2 + $0x40] sm:$0x7]
      %v569 = vld [vmem:[#allocation2] sm:$0xf8]
      %v570 = vld [vmem:[#allocation2 + $0x40] sm:$0xf]
      %v571 = vld [vmem:[#allocation2] sm:$0x80]
      %v572 = vld [vmem:[#allocation2 + $0x40] sm:$0xff]
      %v573 = vld [vmem:[#allocation2 + $0x48] sm:$0x1]
      %v574 = vld [vmem:[#allocation2 + $0x8] sm:$0xf0]
      %v575 = vld [vmem:[#allocation2 + $0x48] sm:$0x1f]
      %v576 = vld [vmem:[#allocation2 + $0x8] sm:$0xe0]
      %v577 = vld [vmem:[#allocation2 + $0x48] sm:$0x3f]
      %vm578 = vsmask.f32 7424
      %v580 = vshrl.u32 %v569, 16
      %v582 = vshll.u32 %v569, 16
      %v584 = vrot.slane %v582, 1
      %v585 = vor.u32 %v580, %v584
      %v587 = vshll.u32 %v561, 16
      %v589 = vrot.slane %v587, 1
      %v590 = vsel %vm578, %v585, %v589
      %v591 = vshrl.u32 %v561, 16
      %v593 = vor.u32 %v591, %v589
      %v595 = vshll.u32 %v562, 16
      %v597 = vrot.slane %v595, 1
      %v598 = vsel %vm578, %v593, %v597
      %v599 = vshrl.u32 %v562, 16
      %v601 = vor.u32 %v599, %v597
      %v603 = vshll.u32 %v563, 16
      %v605 = vrot.slane %v603, 1
      %v606 = vsel %vm578, %v601, %v605
      %v607 = vshrl.u32 %v563, 16
      %v609 = vor.u32 %v607, %v605
      %v611 = vshll.u32 %v564, 16
      %v613 = vrot.slane %v611, 1
      %v614 = vsel %vm578, %v609, %v613
      %v615 = vshrl.u32 %v564, 16
      %v617 = vor.u32 %v615, %v613
      %v619 = vshll.u32 %v565, 16
      %v621 = vrot.slane %v619, 1
      %v622 = vsel %vm578, %v617, %v621
      %v623 = vshrl.u32 %v565, 16
      %v625 = vor.u32 %v623, %v621
      %v627 = vshll.u32 %v566, 16
      %v629 = vrot.slane %v627, 1
      %v630 = vsel %vm578, %v625, %v629
      %v631 = vshrl.u32 %v566, 16
      %v633 = vor.u32 %v631, %v629
      %v635 = vshll.u32 %v567, 16
      %v637 = vrot.slane %v635, 1
      %v638 = vsel %vm578, %v633, %v637
      %v639 = vshrl.u32 %v567, 16
      %v641 = vor.u32 %v639, %v637
      %v643 = vshll.u32 %v568, 16
      %v645 = vrot.slane %v643, 1
      %v646 = vsel %vm578, %v641, %v645
      %v647 = vshrl.u32 %v568, 16
      %v649 = vor.u32 %v647, %v645
      %650 = vrot.lane.b32.xlu0 %v590, 8
      %v651 = vpop.permute.xlu0 %650
      %652 = vrot.lane.b32.xlu0 %v598, 8
      %v653 = vpop.permute.xlu0 %652
      %654 = vrot.lane.b32.xlu0 %v606, 8
      %v655 = vpop.permute.xlu0 %654
      %656 = vrot.lane.b32.xlu0 %v614, 8
      %v657 = vpop.permute.xlu0 %656
      %658 = vrot.lane.b32.xlu0 %v622, 8
      %v659 = vpop.permute.xlu0 %658
      %660 = vrot.lane.b32.xlu0 %v630, 8
      %v661 = vpop.permute.xlu0 %660
      %662 = vrot.lane.b32.xlu0 %v638, 8
      %v663 = vpop.permute.xlu0 %662
      %664 = vrot.lane.b32.xlu0 %v646, 8
      %v665 = vpop.permute.xlu0 %664
      %666 = vrot.lane.b32.xlu0 %v649, 8
      %v667 = vpop.permute.xlu0 %666
      %vm677 = vcmask 1046528
      %v678 = vrot.slane %v569, 1
      %v679 = vrot.slane %v561, 1
      %v680 = vsel %vm677, %v678, %v679
      %v681 = vrot.slane %v562, 1
      %v682 = vsel %vm677, %v679, %v681
      %v683 = vrot.slane %v563, 1
      %v684 = vsel %vm677, %v681, %v683
      %v685 = vrot.slane %v564, 1
      %v686 = vsel %vm677, %v683, %v685
      %v687 = vrot.slane %v565, 1
      %v688 = vsel %vm677, %v685, %v687
      %v689 = vrot.slane %v566, 1
      %v690 = vsel %vm677, %v687, %v689
      %v691 = vrot.slane %v567, 1
      %v692 = vsel %vm677, %v689, %v691
      %v693 = vrot.slane %v570, 1
      %v694 = vsel %vm677, %v691, %v693
      %695 = vrot.lane.b32.xlu0 %v680, 16
      %v696 = vpop.permute.xlu0 %695
      %697 = vrot.lane.b32.xlu0 %v682, 16
      %v698 = vpop.permute.xlu0 %697
      %699 = vrot.lane.b32.xlu0 %v684, 16
      %v700 = vpop.permute.xlu0 %699
      %701 = vrot.lane.b32.xlu0 %v686, 16
      %v702 = vpop.permute.xlu0 %701
      %703 = vrot.lane.b32.xlu0 %v688, 16
      %v704 = vpop.permute.xlu0 %703
      %705 = vrot.lane.b32.xlu0 %v690, 16
      %v706 = vpop.permute.xlu0 %705
      %707 = vrot.lane.b32.xlu0 %v692, 16
      %v708 = vpop.permute.xlu0 %707
      %709 = vrot.lane.b32.xlu0 %v694, 16
      %v710 = vpop.permute.xlu0 %709
      %711 = vrot.lane.b32.xlu0 %v693, 16
      %v712 = vpop.permute.xlu0 %711
      %vm715 = vcmask 1042432
      %v716 = vrot.slane %v571, 5
      %v717 = vrot.slane %v561, 5
      %v718 = vsel %vm715, %v716, %v717
      %v719 = vrot.slane %v562, 5
      %v720 = vsel %vm715, %v717, %v719
      %v721 = vrot.slane %v563, 5
      %v722 = vsel %vm715, %v719, %v721
      %v723 = vrot.slane %v564, 5
      %v724 = vsel %vm715, %v721, %v723
      %v725 = vrot.slane %v565, 5
      %v726 = vsel %vm715, %v723, %v725
      %v727 = vrot.slane %v566, 5
      %v728 = vsel %vm715, %v725, %v727
      %v729 = vrot.slane %v567, 5
      %v730 = vsel %vm715, %v727, %v729
      %v731 = vrot.slane %v572, 5
      %v732 = vsel %vm715, %v729, %v731
      %733 = vrot.lane.b32.xlu0 %v718, 24
      %v734 = vpop.permute.xlu0 %733
      %735 = vrot.lane.b32.xlu0 %v720, 24
      %v736 = vpop.permute.xlu0 %735
      %737 = vrot.lane.b32.xlu0 %v722, 24
      %v738 = vpop.permute.xlu0 %737
      %739 = vrot.lane.b32.xlu0 %v724, 24
      %v740 = vpop.permute.xlu0 %739
      %741 = vrot.lane.b32.xlu0 %v726, 24
      %v742 = vpop.permute.xlu0 %741
      %743 = vrot.lane.b32.xlu0 %v728, 24
      %v744 = vpop.permute.xlu0 %743
      %745 = vrot.lane.b32.xlu0 %v730, 24
      %v746 = vpop.permute.xlu0 %745
      %747 = vrot.lane.b32.xlu0 %v732, 24
      %v748 = vpop.permute.xlu0 %747
      %749 = vrot.lane.b32.xlu0 %v731, 24
      %v750 = vpop.permute.xlu0 %749
      %vm751 = vsmask.f32 2304
      %v752 = vrot.slane %v591, 5
      %v753 = vrot.slane %v587, 6
      %v754 = vor.u32 %v752, %v753
      %v755 = vrot.slane %v599, 5
      %v756 = vrot.slane %v595, 6
      %v757 = vor.u32 %v755, %v756
      %v758 = vsel %vm751, %v754, %v757
      %v759 = vrot.slane %v607, 5
      %v760 = vrot.slane %v603, 6
      %v761 = vor.u32 %v759, %v760
      %v762 = vsel %vm751, %v757, %v761
      %v763 = vrot.slane %v615, 5
      %v764 = vrot.slane %v611, 6
      %v765 = vor.u32 %v763, %v764
      %v766 = vsel %vm751, %v761, %v765
      %v767 = vrot.slane %v623, 5
      %v768 = vrot.slane %v619, 6
      %v769 = vor.u32 %v767, %v768
      %v770 = vsel %vm751, %v765, %v769
      %v771 = vrot.slane %v631, 5
      %v772 = vrot.slane %v627, 6
      %v773 = vor.u32 %v771, %v772
      %v774 = vsel %vm751, %v769, %v773
      %v775 = vrot.slane %v639, 5
      %v776 = vrot.slane %v635, 6
      %v777 = vor.u32 %v775, %v776
      %v778 = vsel %vm751, %v773, %v777
      %v780 = vshrl.u32 %v572, 16
      %v782 = vrot.slane %v780, 5
      %v783 = vshll.u32 %v572, 16
      %v785 = vrot.slane %v783, 6
      %v786 = vor.u32 %v782, %v785
      %v787 = vsel %vm751, %v777, %v786
      %788 = vrot.lane.b32.xlu0 %v754, 32
      %v789 = vpop.permute.xlu0 %788
      %790 = vrot.lane.b32.xlu0 %v758, 32
      %v791 = vpop.permute.xlu0 %790
      %792 = vrot.lane.b32.xlu0 %v762, 32
      %v793 = vpop.permute.xlu0 %792
      %794 = vrot.lane.b32.xlu0 %v766, 32
      %v795 = vpop.permute.xlu0 %794
      %796 = vrot.lane.b32.xlu0 %v770, 32
      %v797 = vpop.permute.xlu0 %796
      %798 = vrot.lane.b32.xlu0 %v774, 32
      %v799 = vpop.permute.xlu0 %798
      %800 = vrot.lane.b32.xlu0 %v778, 32
      %v801 = vpop.permute.xlu0 %800
      %802 = vrot.lane.b32.xlu0 %v787, 32
      %v803 = vpop.permute.xlu0 %802
      %804 = vrot.lane.b32.xlu0 %v786, 32
      %v805 = vpop.permute.xlu0 %804
      %vm807 = vcmask 1041408
      %v808 = vrot.slane %v561, 6
      %v809 = vrot.slane %v562, 6
      %v810 = vsel %vm807, %v808, %v809
      %v811 = vrot.slane %v563, 6
      %v812 = vsel %vm807, %v809, %v811
      %v813 = vrot.slane %v564, 6
      %v814 = vsel %vm807, %v811, %v813
      %v815 = vrot.slane %v565, 6
      %v816 = vsel %vm807, %v813, %v815
      %v817 = vrot.slane %v566, 6
      %v818 = vsel %vm807, %v815, %v817
      %v819 = vrot.slane %v567, 6
      %v820 = vsel %vm807, %v817, %v819
      %v821 = vrot.slane %v572, 6
      %v822 = vsel %vm807, %v819, %v821
      %v823 = vrot.slane %v573, 6
      %v824 = vsel %vm807, %v821, %v823
      %825 = vrot.lane.b32.xlu0 %v808, 40
      %v826 = vpop.permute.xlu0 %825
      %827 = vrot.lane.b32.xlu0 %v810, 40
      %v828 = vpop.permute.xlu0 %827
      %829 = vrot.lane.b32.xlu0 %v812, 40
      %v830 = vpop.permute.xlu0 %829
      %831 = vrot.lane.b32.xlu0 %v814, 40
      %v832 = vpop.permute.xlu0 %831
      %833 = vrot.lane.b32.xlu0 %v816, 40
      %v834 = vpop.permute.xlu0 %833
      %835 = vrot.lane.b32.xlu0 %v818, 40
      %v836 = vpop.permute.xlu0 %835
      %837 = vrot.lane.b32.xlu0 %v820, 40
      %v838 = vpop.permute.xlu0 %837
      %839 = vrot.lane.b32.xlu0 %v822, 40
      %v840 = vpop.permute.xlu0 %839
      %841 = vrot.lane.b32.xlu0 %v824, 40
      %v842 = vpop.permute.xlu0 %841
      %vm845 = vcmask 1045504
      %v846 = vrot.slane %v574, 2
      %v847 = vrot.slane %v562, 2
      %v848 = vsel %vm845, %v846, %v847
      %v849 = vrot.slane %v563, 2
      %v850 = vsel %vm845, %v847, %v849
      %v851 = vrot.slane %v564, 2
      %v852 = vsel %vm845, %v849, %v851
      %v853 = vrot.slane %v565, 2
      %v854 = vsel %vm845, %v851, %v853
      %v855 = vrot.slane %v566, 2
      %v856 = vsel %vm845, %v853, %v855
      %v857 = vrot.slane %v567, 2
      %v858 = vsel %vm845, %v855, %v857
      %v859 = vrot.slane %v572, 2
      %v860 = vsel %vm845, %v857, %v859
      %v861 = vrot.slane %v575, 2
      %v862 = vsel %vm845, %v859, %v861
      %863 = vrot.lane.b32.xlu0 %v848, 48
      %v864 = vpop.permute.xlu0 %863
      %865 = vrot.lane.b32.xlu0 %v850, 48
      %v866 = vpop.permute.xlu0 %865
      %867 = vrot.lane.b32.xlu0 %v852, 48
      %v868 = vpop.permute.xlu0 %867
      %869 = vrot.lane.b32.xlu0 %v854, 48
      %v870 = vpop.permute.xlu0 %869
      %871 = vrot.lane.b32.xlu0 %v856, 48
      %v872 = vpop.permute.xlu0 %871
      %873 = vrot.lane.b32.xlu0 %v858, 48
      %v874 = vpop.permute.xlu0 %873
      %875 = vrot.lane.b32.xlu0 %v860, 48
      %v876 = vpop.permute.xlu0 %875
      %877 = vrot.lane.b32.xlu0 %v862, 48
      %v878 = vpop.permute.xlu0 %877
      %879 = vrot.lane.b32.xlu0 %v861, 48
      %v880 = vpop.permute.xlu0 %879
      %vm881 = vsmask.f32 5376
      %v883 = vshrl.u32 %v576, 16
      %v885 = vrot.slane %v883, 2
      %v886 = vshll.u32 %v576, 16
      %v888 = vrot.slane %v886, 3
      %v889 = vor.u32 %v885, %v888
      %v890 = vrot.slane %v599, 2
      %v891 = vrot.slane %v595, 3
      %v892 = vor.u32 %v890, %v891
      %v893 = vsel %vm881, %v889, %v892
      %v894 = vrot.slane %v607, 2
      %v895 = vrot.slane %v603, 3
      %v896 = vor.u32 %v894, %v895
      %v897 = vsel %vm881, %v892, %v896
      %v898 = vrot.slane %v615, 2
      %v899 = vrot.slane %v611, 3
      %v900 = vor.u32 %v898, %v899
      %v901 = vsel %vm881, %v896, %v900
      %v902 = vrot.slane %v623, 2
      %v903 = vrot.slane %v619, 3
      %v904 = vor.u32 %v902, %v903
      %v905 = vsel %vm881, %v900, %v904
      %v906 = vrot.slane %v631, 2
      %v907 = vrot.slane %v627, 3
      %v908 = vor.u32 %v906, %v907
      %v909 = vsel %vm881, %v904, %v908
      %v910 = vrot.slane %v639, 2
      %v911 = vrot.slane %v635, 3
      %v912 = vor.u32 %v910, %v911
      %v913 = vsel %vm881, %v908, %v912
      %v914 = vrot.slane %v780, 2
      %v915 = vrot.slane %v783, 3
      %v916 = vor.u32 %v914, %v915
      %v917 = vsel %vm881, %v912, %v916
      %v919 = vshrl.u32 %v575, 16
      %v921 = vrot.slane %v919, 2
      %v922 = vshll.u32 %v575, 16
      %v924 = vrot.slane %v922, 3
      %v925 = vor.u32 %v921, %v924
      %v926 = vsel %vm881, %v916, %v925
      %927 = vrot.lane.b32.xlu0 %v893, 56
      %v928 = vpop.permute.xlu0 %927
      %929 = vrot.lane.b32.xlu0 %v897, 56
      %v930 = vpop.permute.xlu0 %929
      %931 = vrot.lane.b32.xlu0 %v901, 56
      %v932 = vpop.permute.xlu0 %931
      %933 = vrot.lane.b32.xlu0 %v905, 56
      %v934 = vpop.permute.xlu0 %933
      %935 = vrot.lane.b32.xlu0 %v909, 56
      %v936 = vpop.permute.xlu0 %935
      %937 = vrot.lane.b32.xlu0 %v913, 56
      %v938 = vpop.permute.xlu0 %937
      %939 = vrot.lane.b32.xlu0 %v917, 56
      %v940 = vpop.permute.xlu0 %939
      %941 = vrot.lane.b32.xlu0 %v926, 56
      %v942 = vpop.permute.xlu0 %941
      %943 = vrot.lane.b32.xlu0 %v925, 56
      %v944 = vpop.permute.xlu0 %943
      %vm947 = vcmask 1044480
      %v948 = vrot.slane %v576, 3
      %v949 = vrot.slane %v562, 3
      %v950 = vsel %vm947, %v948, %v949
      %v951 = vrot.slane %v563, 3
      %v952 = vsel %vm947, %v949, %v951
      %v953 = vrot.slane %v564, 3
      %v954 = vsel %vm947, %v951, %v953
      %v955 = vrot.slane %v565, 3
      %v956 = vsel %vm947, %v953, %v955
      %v957 = vrot.slane %v566, 3
      %v958 = vsel %vm947, %v955, %v957
      %v959 = vrot.slane %v567, 3
      %v960 = vsel %vm947, %v957, %v959
      %v961 = vrot.slane %v572, 3
      %v962 = vsel %vm947, %v959, %v961
      %v963 = vrot.slane %v577, 3
      %v964 = vsel %vm947, %v961, %v963
      %965 = vrot.lane.b32.xlu0 %v950, 64
      %v966 = vpop.permute.xlu0 %965
      %967 = vrot.lane.b32.xlu0 %v952, 64
      %v968 = vpop.permute.xlu0 %967
      %969 = vrot.lane.b32.xlu0 %v954, 64
      %v970 = vpop.permute.xlu0 %969
      %971 = vrot.lane.b32.xlu0 %v956, 64
      %v972 = vpop.permute.xlu0 %971
      %973 = vrot.lane.b32.xlu0 %v958, 64
      %v974 = vpop.permute.xlu0 %973
      %975 = vrot.lane.b32.xlu0 %v960, 64
      %v976 = vpop.permute.xlu0 %975
      %977 = vrot.lane.b32.xlu0 %v962, 64
      %v978 = vpop.permute.xlu0 %977
      %979 = vrot.lane.b32.xlu0 %v964, 64
      %v980 = vpop.permute.xlu0 %979
      %981 = vrot.lane.b32.xlu0 %v963, 64
      %v982 = vpop.permute.xlu0 %981
      %v985 = vsel %vm549, %v560, %v651
      %v987 = vsel %vm549, %v561, %v653
      %v989 = vsel %vm549, %v562, %v655
      %v991 = vsel %vm549, %v563, %v657
      %v993 = vsel %vm549, %v564, %v659
      %v995 = vsel %vm549, %v565, %v661
      %v997 = vsel %vm549, %v566, %v663
      %v999 = vsel %vm549, %v567, %v665
      %v1001 = vsel %vm549, %v568, %v667
      %vm1002 = vcmask 130048
      %v1004 = vsel %vm1002, %v985, %v696
      %v1006 = vsel %vm1002, %v987, %v698
      %v1008 = vsel %vm1002, %v989, %v700
      %v1010 = vsel %vm1002, %v991, %v702
      %v1012 = vsel %vm1002, %v993, %v704
      %v1014 = vsel %vm1002, %v995, %v706
      %v1016 = vsel %vm1002, %v997, %v708
      %v1018 = vsel %vm1002, %v999, %v710
      %v1020 = vsel %vm1002, %v1001, %v712
      %vm1021 = vcmask 195584
      %v1023 = vsel %vm1021, %v1004, %v734
      %v1025 = vsel %vm1021, %v1006, %v736
      %v1027 = vsel %vm1021, %v1008, %v738
      %v1029 = vsel %vm1021, %v1010, %v740
      %v1031 = vsel %vm1021, %v1012, %v742
      %v1033 = vsel %vm1021, %v1014, %v744
      %v1035 = vsel %vm1021, %v1016, %v746
      %v1037 = vsel %vm1021, %v1018, %v748
      %v1039 = vsel %vm1021, %v1020, %v750
      %vm1040 = vcmask 261120
      %v1042 = vsel %vm1040, %v1023, %v789
      %v1044 = vsel %vm1040, %v1025, %v791
      %v1046 = vsel %vm1040, %v1027, %v793
      %v1048 = vsel %vm1040, %v1029, %v795
      %v1050 = vsel %vm1040, %v1031, %v797
      %v1052 = vsel %vm1040, %v1033, %v799
      %v1054 = vsel %vm1040, %v1035, %v801
      %v1056 = vsel %vm1040, %v1037, %v803
      %v1058 = vsel %vm1040, %v1039, %v805
      %vm1059 = vcmask 326656
      %v1061 = vsel %vm1059, %v1042, %v826
      %v1063 = vsel %vm1059, %v1044, %v828
      %v1065 = vsel %vm1059, %v1046, %v830
      %v1067 = vsel %vm1059, %v1048, %v832
      %v1069 = vsel %vm1059, %v1050, %v834
      %v1071 = vsel %vm1059, %v1052, %v836
      %v1073 = vsel %vm1059, %v1054, %v838
      %v1075 = vsel %vm1059, %v1056, %v840
      %v1077 = vsel %vm1059, %v1058, %v842
      %vm1078 = vcmask 392192
      %v1080 = vsel %vm1078, %v1061, %v864
      %v1082 = vsel %vm1078, %v1063, %v866
      %v1084 = vsel %vm1078, %v1065, %v868
      %v1086 = vsel %vm1078, %v1067, %v870
      %v1088 = vsel %vm1078, %v1069, %v872
      %v1090 = vsel %vm1078, %v1071, %v874
      %v1092 = vsel %vm1078, %v1073, %v876
      %v1094 = vsel %vm1078, %v1075, %v878
      %v1096 = vsel %vm1078, %v1077, %v880
      %vm1097 = vcmask 457728
      %v1099 = vsel %vm1097, %v1080, %v928
      %v1101 = vsel %vm1097, %v1082, %v930
      %v1103 = vsel %vm1097, %v1084, %v932
      %v1105 = vsel %vm1097, %v1086, %v934
      %v1107 = vsel %vm1097, %v1088, %v936
      %v1109 = vsel %vm1097, %v1090, %v938
      %v1111 = vsel %vm1097, %v1092, %v940
      %v1113 = vsel %vm1097, %v1094, %v942
      %v1115 = vsel %vm1097, %v1096, %v944
      %vm1116 = vcmask 523264
      %v1118 = vsel %vm1116, %v1099, %v966
      %v1120 = vsel %vm1116, %v1101, %v968
      %v1122 = vsel %vm1116, %v1103, %v970
      %v1124 = vsel %vm1116, %v1105, %v972
      %v1126 = vsel %vm1116, %v1107, %v974
      %v1128 = vsel %vm1116, %v1109, %v976
      %v1130 = vsel %vm1116, %v1111, %v978
      %v1132 = vsel %vm1116, %v1113, %v980
      %v1134 = vsel %vm1116, %v1115, %v982
      %v1135 = vld [vmem:[%s4] sm:$0xf]
      %v1136 = vld [vmem:[%s4 + $0x4] sm:$0xf]
      %v1137 = vld [vmem:[%s4 + $0x8] sm:$0xf]
      %v1138 = vld [vmem:[%s4 + $0xc] sm:$0xf]
      %v1139 = vld [vmem:[%s4 + $0x10] sm:$0xf]
      %v1140 = vld [vmem:[%s4 + $0x14] sm:$0xf]
      %v1141 = vld [vmem:[%s4 + $0x18] sm:$0xf]
      %v1142 = vld [vmem:[%s4 + $0x1c] sm:$0xf]
      %v1143 = vld [vmem:[%s4 + $0x20] sm:$0xf]
      %v1144 = vshrl.u32 %v1118, 16
      %v1146 = vrot.slane %v1144, 2
      %v1147 = vshll.u32 %v1118, 16
      %v1149 = vrot.slane %v1147, 3
      %v1150 = vor.u32 %v1146, %v1149
      %v1151 = vshrl.u32 %v1120, 16
      %v1153 = vrot.slane %v1151, 2
      %v1154 = vshll.u32 %v1120, 16
      %v1156 = vrot.slane %v1154, 3
      %v1157 = vor.u32 %v1153, %v1156
      %v1158 = vsel %vm881, %v1150, %v1157
      %v1159 = vshrl.u32 %v1122, 16
      %v1161 = vrot.slane %v1159, 2
      %v1162 = vshll.u32 %v1122, 16
      %v1164 = vrot.slane %v1162, 3
      %v1165 = vor.u32 %v1161, %v1164
      %v1166 = vsel %vm881, %v1157, %v1165
      %v1167 = vshrl.u32 %v1124, 16
      %v1169 = vrot.slane %v1167, 2
      %v1170 = vshll.u32 %v1124, 16
      %v1172 = vrot.slane %v1170, 3
      %v1173 = vor.u32 %v1169, %v1172
      %v1174 = vsel %vm881, %v1165, %v1173
      %v1175 = vshrl.u32 %v1126, 16
      %v1177 = vrot.slane %v1175, 2
      %v1178 = vshll.u32 %v1126, 16
      %v1180 = vrot.slane %v1178, 3
      %v1181 = vor.u32 %v1177, %v1180
      %v1182 = vsel %vm881, %v1173, %v1181
      %v1183 = vshrl.u32 %v1128, 16
      %v1185 = vrot.slane %v1183, 2
      %v1186 = vshll.u32 %v1128, 16
      %v1188 = vrot.slane %v1186, 3
      %v1189 = vor.u32 %v1185, %v1188
      %v1190 = vsel %vm881, %v1181, %v1189
      %v1191 = vshrl.u32 %v1130, 16
      %v1193 = vrot.slane %v1191, 2
      %v1194 = vshll.u32 %v1130, 16
      %v1196 = vrot.slane %v1194, 3
      %v1197 = vor.u32 %v1193, %v1196
      %v1198 = vsel %vm881, %v1189, %v1197
      %v1199 = vshrl.u32 %v1132, 16
      %v1201 = vrot.slane %v1199, 2
      %v1202 = vshll.u32 %v1132, 16
      %v1204 = vrot.slane %v1202, 3
      %v1205 = vor.u32 %v1201, %v1204
      %v1206 = vsel %vm881, %v1197, %v1205
      %v1207 = vshrl.u32 %v1134, 16
      %v1209 = vrot.slane %v1207, 2
      %v1210 = vshll.u32 %v1134, 16
      %v1212 = vrot.slane %v1210, 3
      %v1213 = vor.u32 %v1209, %v1212
      %v1214 = vsel %vm881, %v1205, %v1213
      %v1224 = vunpack.c.l.b16 %v1135
      %v1225 = vunpack.c.l.b16 %v1136
      %v1226 = vunpack.c.l.b16 %v1137
      %v1227 = vunpack.c.l.b16 %v1138
      %v1228 = vunpack.c.l.b16 %v1139
      %v1229 = vunpack.c.l.b16 %v1140
      %v1230 = vunpack.c.l.b16 %v1141
      %v1231 = vunpack.c.l.b16 %v1142
      %v1232 = vunpack.c.l.b16 %v1143
      %v1233 = vpack.c.b16 %v1225, %v1224
      %v1234 = vpack.c.b16 %v1227, %v1226
      %v1235 = vpack.c.b16 %v1229, %v1228
      %v1236 = vpack.c.b16 %v1231, %v1230
      %v1237 = vpack.c.b16 %v1232, %v1232
      %vm1242 = vcmask 588800
      %v1244 = vsel %vm1242, %v1158, 0
      %v1247 = vsel %vm1242, %v1166, 0
      %v1250 = vsel %vm1242, %v1174, 0
      %v1253 = vsel %vm1242, %v1182, 0
      %v1256 = vsel %vm1242, %v1190, 0
      %v1259 = vsel %vm1242, %v1198, 0
      %v1262 = vsel %vm1242, %v1206, 0
      %v1265 = vsel %vm1242, %v1214, 0
      %vm1267 = vcmask 1043456
      %v1269 = vsel %vm1267, %v1237, 0
      %1271 = vmatprep.subr.bf16.mxu0 0
      %1272 = vmatpush1.bf16.msra.mxu0 %v1233
      %1273 = vmatprep.subr.bf16.mxu0 0
      %1274 = vmatpush1.bf16.msra.mxu0 %v1234
      %1275 = vmatprep.subr.bf16.mxu0 0
      %1276 = vmatpush1.bf16.msra.mxu0 %v1235
      %1277 = vmatprep.subr.bf16.mxu0 0
      %1278 = vmatpush1.bf16.msra.mxu0 %v1236
      %1279 = vmatprep.subr.bf16.mxu0 0
      %1280 = vmatpush1.bf16.msra.mxu0 %v1269
      %1281 = vmatprep.subr.bf16.mxu0 0
      %1282 = vmatpush1.bf16.msra.mxu0 0
      %1283 = vmatprep.subr.bf16.mxu0 0
      %1284 = vmatpush1.bf16.msra.mxu0 0
      %1285 = vmatprep.subr.bf16.mxu0 0
      %1286 = vmatpush1.bf16.msra.mxu0 0
      %1287 = vmatprep.subr.bf16.mxu0 0
      %1288 = vmatpush1.bf16.msra.mxu0 0
      %1289 = vmatprep.subr.bf16.mxu0 0
      %1290 = vmatpush1.bf16.msra.mxu0 0
      %1291 = vmatprep.subr.bf16.mxu0 0
      %1292 = vmatpush1.bf16.msra.mxu0 0
      %1293 = vmatprep.subr.bf16.mxu0 0
      %1294 = vmatpush1.bf16.msra.mxu0 0
      %1295 = vmatprep.subr.bf16.mxu0 0
      %1296 = vmatpush1.bf16.msra.mxu0 0
      %1297 = vmatprep.subr.bf16.mxu0 0
      %1298 = vmatpush1.bf16.msra.mxu0 0
      %1299 = vmatprep.subr.bf16.mxu0 0
      %1300 = vmatpush1.bf16.msra.mxu0 0
      %1301 = vmatprep.subr.bf16.mxu0 0
      %1302 = vmatpush1.bf16.msra.mxu0 0
      %1303 = vmatprep.mubr.bf16.mxu0 0
      %1304 = vmatmul.mubr.bf16.gmra.mrb[0].mxu0 %v1244
      %v1305 = vpop.f32.mrb[0].mxu0
      %v1306 = vadd.f32 0.0, %v1305
      %v1307 = vpop.f32.mrb[0].mxu0
      %v1308 = vpop.f32.mrb[0].mxu0
      %v1309 = vadd.f32 0.0, %v1308
      %v1310 = vpop.f32.mrb[0].mxu0
      %1311 = vmatprep.mubr.bf16.mxu0 0
      %1312 = vmatmul.mubr.bf16.gmra.mrb[0].mxu0 %v1247
      %v1313 = vpop.f32.mrb[0].mxu0
      %v1314 = vadd.f32 0.0, %v1313
      %v1315 = vpop.f32.mrb[0].mxu0
      %v1316 = vpop.f32.mrb[0].mxu0
      %v1317 = vadd.f32 0.0, %v1316
      %v1318 = vpop.f32.mrb[0].mxu0
      %1319 = vmatprep.mubr.bf16.mxu0 0
      %1320 = vmatmul.mubr.bf16.gmra.mrb[0].mxu0 %v1250
      %v1321 = vpop.f32.mrb[0].mxu0
      %v1322 = vadd.f32 0.0, %v1321
      %v1323 = vpop.f32.mrb[0].mxu0
      %v1324 = vpop.f32.mrb[0].mxu0
      %v1325 = vadd.f32 0.0, %v1324
      %v1326 = vpop.f32.mrb[0].mxu0
      %1327 = vmatprep.mubr.bf16.mxu0 0
      %1328 = vmatmul.mubr.bf16.gmra.mrb[0].mxu0 %v1253
      %v1329 = vpop.f32.mrb[0].mxu0
      %v1330 = vadd.f32 0.0, %v1329
      %v1331 = vpop.f32.mrb[0].mxu0
      %v1332 = vpop.f32.mrb[0].mxu0
      %v1333 = vadd.f32 0.0, %v1332
      %v1334 = vpop.f32.mrb[0].mxu0
      %1335 = vmatprep.mubr.bf16.mxu0 0
      %1336 = vmatmul.mubr.bf16.gmra.mrb[0].mxu0 %v1256
      %v1337 = vpop.f32.mrb[0].mxu0
      %v1338 = vadd.f32 0.0, %v1337
      %v1339 = vpop.f32.mrb[0].mxu0
      %v1340 = vpop.f32.mrb[0].mxu0
      %v1341 = vadd.f32 0.0, %v1340
      %v1342 = vpop.f32.mrb[0].mxu0
      %1343 = vmatprep.mubr.bf16.mxu0 0
      %1344 = vmatmul.mubr.bf16.gmra.mrb[0].mxu0 %v1259
      %v1345 = vpop.f32.mrb[0].mxu0
      %v1346 = vadd.f32 0.0, %v1345
      %v1347 = vpop.f32.mrb[0].mxu0
      %v1348 = vpop.f32.mrb[0].mxu0
      %v1349 = vadd.f32 0.0, %v1348
      %v1350 = vpop.f32.mrb[0].mxu0
      %1351 = vmatprep.mubr.bf16.mxu0 0
      %1352 = vmatmul.mubr.bf16.gmra.mrb[0].mxu0 %v1262
      %v1353 = vpop.f32.mrb[0].mxu0
      %v1354 = vadd.f32 0.0, %v1353
      %v1355 = vpop.f32.mrb[0].mxu0
      %v1356 = vpop.f32.mrb[0].mxu0
      %v1357 = vadd.f32 0.0, %v1356
      %v1358 = vpop.f32.mrb[0].mxu0
      %1359 = vmatprep.mubr.bf16.mxu0 0
      %1360 = vmatmul.mubr.bf16.gmra.mrb[0].mxu0 %v1265
      %v1361 = vpop.f32.mrb[0].mxu0
      %v1362 = vadd.f32 0.0, %v1361
      %v1363 = vpop.f32.mrb[0].mxu0
      %v1364 = vpop.f32.mrb[0].mxu0
      %v1365 = vadd.f32 0.0, %v1364
      %v1366 = vpop.f32.mrb[0].mxu0
      %1367 = vdwg.mxu0
      %v1368 = vmul.f32 %v1306, %v432
      %v1369 = vmul.f32 %v1309, %v437
      %v1370 = vmul.f32 %v1314, %v442
      %v1371 = vmul.f32 %v1317, %v447
      %v1372 = vmul.f32 %v1322, %v452
      %v1373 = vmul.f32 %v1325, %v457
      %v1374 = vmul.f32 %v1330, %v462
      %v1375 = vmul.f32 %v1333, %v467
      %v1376 = vmul.f32 %v1338, %v472
      %v1377 = vmul.f32 %v1341, %v477
      %v1378 = vmul.f32 %v1346, %v482
      %v1379 = vmul.f32 %v1349, %v487
      %v1380 = vmul.f32 %v1354, %v492
      %v1381 = vmul.f32 %v1357, %v497
      %v1382 = vmul.f32 %v1362, %v502
      %v1383 = vmul.f32 %v1365, %v507
      %v1384 = vpack.c.bf16 %v1369, %v1368
      %v1385 = vpack.c.bf16 %v1371, %v1370
      %v1386 = vpack.c.bf16 %v1373, %v1372
      %v1387 = vpack.c.bf16 %v1375, %v1374
      %v1388 = vpack.c.bf16 %v1377, %v1376
      %v1389 = vpack.c.bf16 %v1379, %v1378
      %v1390 = vpack.c.bf16 %v1381, %v1380
      %v1391 = vpack.c.bf16 %v1383, %v1382
      %v1400 = vunpack.c.l.b16 %v1384
      %v1401 = vunpack.c.h.b16 %v1384
      %v1402 = vunpack.c.l.b16 %v1385
      %v1403 = vunpack.c.h.b16 %v1385
      %v1404 = vunpack.c.l.b16 %v1386
      %v1405 = vunpack.c.h.b16 %v1386
      %v1406 = vunpack.c.l.b16 %v1387
      %v1407 = vunpack.c.h.b16 %v1387
      %v1408 = vunpack.c.l.b16 %v1388
      %v1409 = vunpack.c.h.b16 %v1388
      %v1410 = vunpack.c.l.b16 %v1389
      %v1411 = vunpack.c.h.b16 %v1389
      %v1412 = vunpack.c.l.b16 %v1390
      %v1413 = vunpack.c.h.b16 %v1390
      %v1414 = vunpack.c.l.b16 %v1391
      %v1415 = vunpack.c.h.b16 %v1391
      %v1416 = vpack.c.b16 %v1400, %v1400
      %v1417 = vpack.c.b16 %v1401, %v1401
      %v1418 = vpack.c.b16 %v1402, %v1402
      %v1419 = vpack.c.b16 %v1403, %v1403
      %v1420 = vpack.c.b16 %v1404, %v1404
      %v1421 = vpack.c.b16 %v1405, %v1405
      %v1422 = vpack.c.b16 %v1406, %v1406
      %v1423 = vpack.c.b16 %v1407, %v1407
      %v1424 = vpack.c.b16 %v1408, %v1408
      %v1425 = vpack.c.b16 %v1409, %v1409
      %v1426 = vpack.c.b16 %v1410, %v1410
      %v1427 = vpack.c.b16 %v1411, %v1411
      %v1428 = vpack.c.b16 %v1412, %v1412
      %v1429 = vpack.c.b16 %v1413, %v1413
      %v1430 = vpack.c.b16 %v1414, %v1414
      %v1431 = vpack.c.b16 %v1415, %v1415
      %vm1448 = vcmask 60416
      %1449 = vst.msk [vmem:[%s278] sm:$0xf] %vm1448, %v1416
      %1450 = vst.msk [vmem:[%s278 + $0x4] sm:$0xf] %vm1448, %v1417
      %1451 = vst.msk [vmem:[%s278 + $0x8] sm:$0xf] %vm1448, %v1418
      %1452 = vst.msk [vmem:[%s278 + $0xc] sm:$0xf] %vm1448, %v1419
      %1453 = vst.msk [vmem:[%s278 + $0x10] sm:$0xf] %vm1448, %v1420
      %1454 = vst.msk [vmem:[%s278 + $0x14] sm:$0xf] %vm1448, %v1421
      %1455 = vst.msk [vmem:[%s278 + $0x18] sm:$0xf] %vm1448, %v1422
      %1456 = vst.msk [vmem:[%s278 + $0x1c] sm:$0xf] %vm1448, %v1423
      %1457 = vst.msk [vmem:[%s278 + $0x20] sm:$0xf] %vm1448, %v1424
      %1458 = vst.msk [vmem:[%s278 + $0x24] sm:$0xf] %vm1448, %v1425
      %1459 = vst.msk [vmem:[%s278 + $0x28] sm:$0xf] %vm1448, %v1426
      %1460 = vst.msk [vmem:[%s278 + $0x2c] sm:$0xf] %vm1448, %v1427
      %1461 = vst.msk [vmem:[%s278 + $0x30] sm:$0xf] %vm1448, %v1428
      %1462 = vst.msk [vmem:[%s278 + $0x34] sm:$0xf] %vm1448, %v1429
      %1463 = vst.msk [vmem:[%s278 + $0x38] sm:$0xf] %vm1448, %v1430
      %1464 = vst.msk [vmem:[%s278 + $0x3c] sm:$0xf] %vm1448, %v1431
      %v1465 = vsel %vm549, %v1368, 0.0
      %v1466 = vsel %vm549, %v1369, 0.0
      %v1467 = vadd.f32 %v1465, %v1466
      %v1468 = vsel %vm549, %v1370, 0.0
      %v1469 = vadd.f32 %v1467, %v1468
      %v1470 = vsel %vm549, %v1371, 0.0
      %v1471 = vadd.f32 %v1469, %v1470
      %v1472 = vsel %vm549, %v1372, 0.0
      %v1473 = vadd.f32 %v1471, %v1472
      %v1474 = vsel %vm549, %v1373, 0.0
      %v1475 = vadd.f32 %v1473, %v1474
      %v1476 = vsel %vm549, %v1374, 0.0
      %v1477 = vadd.f32 %v1475, %v1476
      %v1478 = vsel %vm549, %v1375, 0.0
      %v1479 = vadd.f32 %v1477, %v1478
      %v1480 = vsel %vm549, %v1376, 0.0
      %v1481 = vadd.f32 %v1479, %v1480
      %v1482 = vsel %vm549, %v1377, 0.0
      %v1483 = vadd.f32 %v1481, %v1482
      %v1484 = vsel %vm549, %v1378, 0.0
      %v1485 = vadd.f32 %v1483, %v1484
      %v1486 = vsel %vm549, %v1379, 0.0
      %v1487 = vadd.f32 %v1485, %v1486
      %v1488 = vsel %vm549, %v1380, 0.0
      %v1489 = vadd.f32 %v1487, %v1488
      %v1490 = vsel %vm549, %v1381, 0.0
      %v1491 = vadd.f32 %v1489, %v1490
      %v1492 = vsel %vm549, %v1382, 0.0
      %v1493 = vadd.f32 %v1491, %v1492
      %v1494 = vsel %vm549, %v1383, 0.0
      %v1495 = vadd.f32 %v1493, %v1494
      %v1496 = vrot.slane %v1495, 4
      %v1497 = vadd.f32 %v1495, %v1496
      %v1498 = vrot.slane %v1497, 2
      %v1499 = vadd.f32 %v1497, %v1498
      %v1500 = vrot.slane %v1499, 1
      %v1501 = vadd.f32 %v1499, %v1500
      %v1502 = vmul.f32 %v1368, %v1368
      %v1503 = vmul.f32 %v1369, %v1369
      %v1504 = vmul.f32 %v1370, %v1370
      %v1505 = vmul.f32 %v1371, %v1371
      %v1506 = vmul.f32 %v1372, %v1372
      %v1507 = vmul.f32 %v1373, %v1373
      %v1508 = vmul.f32 %v1374, %v1374
      %v1509 = vmul.f32 %v1375, %v1375
      %v1510 = vmul.f32 %v1376, %v1376
      %v1511 = vmul.f32 %v1377, %v1377
      %v1512 = vmul.f32 %v1378, %v1378
      %v1513 = vmul.f32 %v1379, %v1379
      %v1514 = vmul.f32 %v1380, %v1380
      %v1515 = vmul.f32 %v1381, %v1381
      %v1516 = vmul.f32 %v1382, %v1382
      %v1517 = vmul.f32 %v1383, %v1383
      %v1518 = vsel %vm549, %v1502, 0.0
      %v1519 = vsel %vm549, %v1503, 0.0
      %v1520 = vadd.f32 %v1518, %v1519
      %v1521 = vsel %vm549, %v1504, 0.0
      %v1522 = vadd.f32 %v1520, %v1521
      %v1523 = vsel %vm549, %v1505, 0.0
      %v1524 = vadd.f32 %v1522, %v1523
      %v1525 = vsel %vm549, %v1506, 0.0
      %v1526 = vadd.f32 %v1524, %v1525
      %v1527 = vsel %vm549, %v1507, 0.0
      %v1528 = vadd.f32 %v1526, %v1527
      %v1529 = vsel %vm549, %v1508, 0.0
      %v1530 = vadd.f32 %v1528, %v1529
      %v1531 = vsel %vm549, %v1509, 0.0
      %v1532 = vadd.f32 %v1530, %v1531
      %v1533 = vsel %vm549, %v1510, 0.0
      %v1534 = vadd.f32 %v1532, %v1533
      %v1535 = vsel %vm549, %v1511, 0.0
      %v1536 = vadd.f32 %v1534, %v1535
      %v1537 = vsel %vm549, %v1512, 0.0
      %v1538 = vadd.f32 %v1536, %v1537
      %v1539 = vsel %vm549, %v1513, 0.0
      %v1540 = vadd.f32 %v1538, %v1539
      %v1541 = vsel %vm549, %v1514, 0.0
      %v1542 = vadd.f32 %v1540, %v1541
      %v1543 = vsel %vm549, %v1515, 0.0
      %v1544 = vadd.f32 %v1542, %v1543
      %v1545 = vsel %vm549, %v1516, 0.0
      %v1546 = vadd.f32 %v1544, %v1545
      %v1547 = vsel %vm549, %v1517, 0.0
      %v1548 = vadd.f32 %v1546, %v1547
      %v1549 = vrot.slane %v1548, 4
      %v1550 = vadd.f32 %v1548, %v1549
      %v1551 = vrot.slane %v1550, 2
      %v1552 = vadd.f32 %v1550, %v1551
      %v1553 = vrot.slane %v1552, 1
      %v1554 = vadd.f32 %v1552, %v1553
      %vm1555 = vcmask 1040384
      %v1556 = vsel %vm1555, %v1501, %v1554
      %vm1557 = vcmask 58368
      %1558 = vst.msk [vmem:[%s283] sm:$0x3] %vm1557, %v1556
      %s1559 = smul.u32 16, %s18
      %p1560 = scmp.lt.s32.totalorder %s1559, 31
      %s1561 = scalar_select %p1560, %s1559, 31
      %s1562 = smul.addr %s1561, 4
      %s1563 = scalar_lea.vmem %s5, %s1562
      %p1564 = scmp.lt.s32.totalorder %s18, 1
      %s1565 = scalar_select %p1564, %s18, 1
      %s1566 = smul.addr %s1565, 2
      %s1567 = scalar_lea.vmem %s6, %s1566
      // Predicated region
      $region41: #{encoder_block.4} parent=39 // pred_check
        %p1568 = pneg %p151
      $region42: #{encoder_block.4} parent=39 // pred_check_branch
        %1570 = sbr.rel (%p1568) target = $region44
      $region43: #{encoder_block.4} parent=39 // pred_region
        %s1571 = smul.u32 16, %s18
      $region44: #{encoder_block.4} parent=39 // pred_fallthru
        _
      // Predicated region
      $region45: #{encoder_block.4} parent=39 // pred_check
        %p1572 = pneg %p177
      $region46: #{encoder_block.4} parent=39 // pred_check_branch
        %1574 = sbr.rel (%p1572) target = $region48
      $region47: #{encoder_block.4} parent=39 // pred_region
        _
      $region48: #{encoder_block.4} parent=39 // pred_fallthru
        _
    $region40: #{encoder_block.4} parent=5 // pred_fallthru
      _
    %p1575 = scmp.le.s32.totalorder 2, %s13
    // Predicated region
    $region49: #{encoder_block.4} parent=5 // pred_check
      %p1576 = pneg %p1575
    $region50: #{encoder_block.4} parent=5 // pred_check_branch
      %1578 = sbr.rel (%p1576) target = $region52
    $region51: #{encoder_block.4} parent=5 // pred_region
      %s1579 = ssub.s32 %s13, 2
      // Predicated region
      $region53: #{encoder_block.4} parent=51 // pred_check
        %p1580 = pneg %p157
      $region54: #{encoder_block.4} parent=51 // pred_check_branch
        %1582 = sbr.rel (%p1580) target = $region56
      $region55: #{encoder_block.4} parent=51 // pred_region
        %s1583 = smul.u32 16, %s19
        %p1584 = scmp.lt.s32.totalorder %s1583, 31
        %s1585 = scalar_select %p1584, %s1583, 31
        %s1586 = smul.addr %s1585, 4
        %s1587 = scalar_lea.vmem %s5, %s1586
      $region56: #{encoder_block.4} parent=51 // pred_fallthru
        _
      // Predicated region
      $region57: #{encoder_block.4} parent=51 // pred_check
        %p1588 = pneg %p183
      $region58: #{encoder_block.4} parent=51 // pred_check_branch
        %1590 = sbr.rel (%p1588) target = $region60
      $region59: #{encoder_block.4} parent=51 // pred_region
        %p1591 = scmp.lt.s32.totalorder %s19, 1
        %s1592 = scalar_select %p1591, %s19, 1
        %s1593 = smul.addr %s1592, 2
        %s1594 = scalar_lea.vmem %s6, %s1593
      $region60: #{encoder_block.4} parent=51 // pred_fallthru
        _
    $region52: #{encoder_block.4} parent=5 // pred_fallthru
      _
  $region6: #{encoder_block.4} parent=0 // loop_footer
    %s17 = sadd.s32 1, %s13
  $region7: #{encoder_block.4} parent=0 // loop_footer_branch
    %12 = sbr.rel target = $region3
  $region8: #{encoder_block.4} parent=0 // loop_exit
    _

// kernel: encoder_block.3
$region0: #{encoder_block.3}
  #allocation0 [shape = 'u32[]', space=smem, size = 0x4, offset = 0x4, fixed_abs, tag = 'smem constant byte address 0x4 - core index']
  #allocation1 [shape = 'u32[144,128]{1,0:T(1,128)}', space=vmem, size = 0x12000, scoped, tag = 'internal scratch']
  %s0 = inlined_call_operand.vmem [shape: bf16[2,192,4], index: 0, kind: input, shape index: {}]
  %s1 = inlined_call_operand.vmem [shape: f32[2,160,1], index: 1, kind: input, shape index: {}]
  %s2 = inlined_call_operand.vmem [shape: bf16[36,8], index: 2, kind: input, shape index: {}]
  %s3 = inlined_call_operand.vmem [shape: bf16[2,160,8], index: 3, kind: output, shape index: {0}]
  %s4 = inlined_call_operand.vmem [shape: f32[2,2,8], index: 4, kind: output, shape index: {1}]
  %5 = xla_tuple %s3, %s4
  %s6 = sld [smem:[#allocation0]]
  $region53: #{encoder_block.3} parent=0
    _
  %s8 = ssub.s32 1, %s6
  %s9 = scalar_select 0, %s8, %s6
  loop: start=0, step=1, limit=4
  $region2: #{encoder_block.3} parent=0 // loop_pre_header
    _
  $region3: #{encoder_block.3} parent=0 // loop_header
    %s11 = sphi 0, %s15
    %p12 = scmp.ge.s32.totalorder %s11, 4
    %s21 = sphi 0, %s23
    %s24 = sphi 0, %s21
    %s25 = sphi 0, %s24
    %s41 = sphi 0, %s25
    %s47 = sphi 0, %s49
    %s50 = sphi 0, %s47
    %s51 = sphi 0, %s50
    %s67 = sphi 0, %s51
    %s71 = sphi 0, %s71
    %s73 = sphi 0, %s71
    %s74 = sphi 0, %s73
    %s88 = sphi 0, %s74
    %s94 = sphi 0, %s96
    %s97 = sphi 0, %s94
    %s98 = sphi 0, %s97
    %s114 = sphi 0, %s98
    %s120 = sphi 0, %s122
    %s123 = sphi 0, %s120
    %s124 = sphi 0, %s123
    %s140 = sphi 0, %s124
  $region4: #{encoder_block.3} parent=0 // loop_header_branch
    %14 = sbr.rel (%p12) target = $region8
  $region5: #{encoder_block.3} parent=0 // loop_body
    %s16 = ssub.s32 %s11, 1
    %s17 = ssub.s32 %s11, 2
    %s18 = sadd.s32 %s11, 1
    %s19 = ssub.s32 %s11, %s18
    %p20 = scmp.eq.s32.totalorder %s19, 0
    %s22 = sadd.s32 %s21, 1
    %s23 = scalar_select %p20, %s21, %s22
    %p26 = pneg %p20
    %p27 = scmp.eq.s32.totalorder %s11, 1
    %p28 = por %p26, %p27
    %p29 = scmp.ne.s32.totalorder %s21, %s24
    %p30 = scmp.eq.s32.totalorder %s11, 0
    %p31 = por %p29, %p30
    %p32 = scmp.ne.s32.totalorder %s21, %s24
    %p33 = scmp.eq.s32.totalorder %s16, 1
    %p34 = por %p32, %p33
    %p35 = scmp.ne.s32.totalorder %s24, %s25
    %p36 = scmp.eq.s32.totalorder %s16, 0
    %p37 = por %p35, %p36
    %p38 = scmp.ne.s32.totalorder %s24, %s25
    %p39 = scmp.eq.s32.totalorder %s17, 1
    %p40 = por %p38, %p39
    %p42 = scmp.ne.s32.totalorder %s25, %s41
    %p43 = scmp.eq.s32.totalorder %s17, 0
    %p44 = por %p42, %p43
    %s45 = ssub.s32 %s11, %s18
    %p46 = scmp.eq.s32.totalorder %s45, 0
    %s48 = sadd.s32 %s47, 1
    %s49 = scalar_select %p46, %s47, %s48
    %p52 = pneg %p46
    %p53 = scmp.eq.s32.totalorder %s11, 1
    %p54 = por %p52, %p53
    %p55 = scmp.ne.s32.totalorder %s47, %s50
    %p56 = scmp.eq.s32.totalorder %s11, 0
    %p57 = por %p55, %p56
    %p58 = scmp.ne.s32.totalorder %s47, %s50
    %p59 = scmp.eq.s32.totalorder %s16, 1
    %p60 = por %p58, %p59
    %p61 = scmp.ne.s32.totalorder %s50, %s51
    %p62 = scmp.eq.s32.totalorder %s16, 0
    %p63 = por %p61, %p62
    %p64 = scmp.ne.s32.totalorder %s50, %s51
    %p65 = scmp.eq.s32.totalorder %s17, 1
    %p66 = por %p64, %p65
    %p68 = scmp.ne.s32.totalorder %s51, %s67
    %p69 = scmp.eq.s32.totalorder %s17, 0
    %p70 = por %p68, %p69
    %s72 = sadd.s32 %s71, 1
    %p75 = scmp.eq.s32.totalorder %s11, 1
    %p76 = scmp.ne.s32.totalorder %s71, %s73
    %p77 = scmp.eq.s32.totalorder %s11, 0
    %p78 = por %p76, %p77
    %p79 = scmp.ne.s32.totalorder %s71, %s73
    %p80 = scmp.eq.s32.totalorder %s16, 1
    %p81 = por %p79, %p80
    %p82 = scmp.ne.s32.totalorder %s73, %s74
    %p83 = scmp.eq.s32.totalorder %s16, 0
    %p84 = por %p82, %p83
    %p85 = scmp.ne.s32.totalorder %s73, %s74
    %p86 = scmp.eq.s32.totalorder %s17, 1
    %p87 = por %p85, %p86
    %p89 = scmp.ne.s32.totalorder %s74, %s88
    %p90 = scmp.eq.s32.totalorder %s17, 0
    %p91 = por %p89, %p90
    %s92 = ssub.s32 %s11, %s18
    %p93 = scmp.eq.s32.totalorder %s92, 0
    %s95 = sadd.s32 %s94, 1
    %s96 = scalar_select %p93, %s94, %s95
    %p99 = pneg %p93
    %p100 = scmp.eq.s32.totalorder %s11, 1
    %p101 = por %p99, %p100
    %p102 = scmp.ne.s32.totalorder %s94, %s97
    %p103 = scmp.eq.s32.totalorder %s11, 0
    %p104 = por %p102, %p103
    %p105 = scmp.ne.s32.totalorder %s94, %s97
    %p106 = scmp.eq.s32.totalorder %s16, 1
    %p107 = por %p105, %p106
    %p108 = scmp.ne.s32.totalorder %s97, %s98
    %p109 = scmp.eq.s32.totalorder %s16, 0
    %p110 = por %p108, %p109
    %p111 = scmp.ne.s32.totalorder %s97, %s98
    %p112 = scmp.eq.s32.totalorder %s17, 1
    %p113 = por %p111, %p112
    %p115 = scmp.ne.s32.totalorder %s98, %s114
    %p116 = scmp.eq.s32.totalorder %s17, 0
    %p117 = por %p115, %p116
    %s118 = ssub.s32 %s11, %s18
    %p119 = scmp.eq.s32.totalorder %s118, 0
    %s121 = sadd.s32 %s120, 1
    %s122 = scalar_select %p119, %s120, %s121
    %p125 = pneg %p119
    %p126 = scmp.eq.s32.totalorder %s11, 1
    %p127 = por %p125, %p126
    %p128 = scmp.ne.s32.totalorder %s120, %s123
    %p129 = scmp.eq.s32.totalorder %s11, 0
    %p130 = por %p128, %p129
    %p131 = scmp.ne.s32.totalorder %s120, %s123
    %p132 = scmp.eq.s32.totalorder %s16, 1
    %p133 = por %p131, %p132
    %p134 = scmp.ne.s32.totalorder %s123, %s124
    %p135 = scmp.eq.s32.totalorder %s16, 0
    %p136 = por %p134, %p135
    %p137 = scmp.ne.s32.totalorder %s123, %s124
    %p138 = scmp.eq.s32.totalorder %s17, 1
    %p139 = por %p137, %p138
    %p141 = scmp.ne.s32.totalorder %s124, %s140
    %p142 = scmp.eq.s32.totalorder %s17, 0
    %p143 = por %p141, %p142
    %p144 = scmp.le.s32.totalorder 1, %s11
    %p145 = scmp.lt.s32.totalorder %s11, 3
    %p146 = pnand %p144, %p145
    %p147 = pneg %p146
    // Predicated region
    $region9: #{encoder_block.3} parent=5 // pred_check
      _
    $region10: #{encoder_block.3} parent=5 // pred_check_branch
      %149 = sbr.rel (%p146) target = $region12
    $region11: #{encoder_block.3} parent=5 // pred_region
      %s150 = ssub.s32 %s11, 1
      // Predicated region
      $region13: #{encoder_block.3} parent=11 // pred_check
        %p151 = pneg %p84
      $region14: #{encoder_block.3} parent=11 // pred_check_branch
        %153 = sbr.rel (%p151) target = $region16
      $region15: #{encoder_block.3} parent=11 // pred_region
        _
      $region16: #{encoder_block.3} parent=11 // pred_fallthru
        _
    $region12: #{encoder_block.3} parent=5 // pred_fallthru
      _
    %p154 = scmp.lt.s32.totalorder %s11, 2
    // Predicated region
    $region17: #{encoder_block.3} parent=5 // pred_check
      %p155 = pneg %p154
    $region18: #{encoder_block.3} parent=5 // pred_check_branch
      %157 = sbr.rel (%p155) target = $region20
    $region19: #{encoder_block.3} parent=5 // pred_region
      // Predicated region
      $region21: #{encoder_block.3} parent=19 // pred_check
        %p158 = pneg %p31
      $region22: #{encoder_block.3} parent=19 // pred_check_branch
        %160 = sbr.rel (%p158) target = $region24
      $region23: #{encoder_block.3} parent=19 // pred_region
        %p161 = scmp.lt.s32.totalorder %s11, 1
        %s162 = scalar_select %p161, %s11, 1
        %s163 = smul.addr %s162, 24
        %s164 = smul.addr %s163, 4
        %s165 = scalar_lea.vmem %s0, %s164
      $region24: #{encoder_block.3} parent=19 // pred_fallthru
        _
      // Predicated region
      $region25: #{encoder_block.3} parent=19 // pred_check
        %p166 = pneg %p57
      $region26: #{encoder_block.3} parent=19 // pred_check_branch
        %168 = sbr.rel (%p166) target = $region28
      $region27: #{encoder_block.3} parent=19 // pred_region
        %p169 = scmp.lt.s32.totalorder %s11, 1
        %s170 = scalar_select %p169, %s11, 1
        %s171 = smul.addr %s170, 20
        %s172 = smul.addr %s171, 8
        %s173 = scalar_lea.vmem %s1, %s172
      $region28: #{encoder_block.3} parent=19 // pred_fallthru
        _
    $region20: #{encoder_block.3} parent=5 // pred_fallthru
      _
    %p174 = scmp.le.s32.totalorder 1, %s11
    %p175 = scmp.lt.s32.totalorder %s11, 3
    %p176 = pnand %p174, %p175
    %p177 = pneg %p176
    // Predicated region
    $region29: #{encoder_block.3} parent=5 // pred_check
      _
    $region30: #{encoder_block.3} parent=5 // pred_check_branch
      %179 = sbr.rel (%p176) target = $region32
    $region31: #{encoder_block.3} parent=5 // pred_region
      %s180 = ssub.s32 %s11, 1
      %p181 = scmp.lt.s32.totalorder %s16, 1
      %s182 = scalar_select %p181, %s16, 1
      %s183 = smul.addr %s182, 24
      %s184 = smul.addr %s183, 4
      %s185 = scalar_lea.vmem %s0, %s184
      %p186 = pneg %p37
      %p187 = pneg %p34
      %p188 = scmp.lt.s32.totalorder %s16, 1
      %s189 = scalar_select %p188, %s16, 1
      %s190 = smul.addr %s189, 20
      %s191 = smul.addr %s190, 8
      %s192 = scalar_lea.vmem %s1, %s191
      %p193 = pneg %p63
      %p194 = pneg %p60
      %p195 = pneg %p84
      %p196 = pneg %p81
      %p197 = pneg %p110
      %p198 = pneg %p107
      %p199 = scmp.lt.s32.totalorder %s16, 1
      %s200 = scalar_select %p199, %s16, 1
      %s201 = smul.addr %s200, 20
      %s202 = smul.addr %s201, 4
      %s203 = scalar_lea.vmem %s3, %s202
      %p204 = pneg %p136
      %p205 = pneg %p133
      %p206 = scmp.lt.s32.totalorder %s16, 1
      %s207 = scalar_select %p206, %s16, 1
      %s208 = smul.addr %s207, 2
      %s209 = scalar_lea.vmem %s4, %s208
      %p210 = scmp.lt.s32.totalorder %s16, 1
      %s211 = scalar_select %p210, %s16, 1
      %s212 = smul.addr %s211, 24
      %s213 = smul.addr %s212, 4
      %s214 = scalar_lea.vmem %s0, %s213
      %p215 = scmp.lt.s32.totalorder %s16, 1
      %s216 = scalar_select %p215, %s16, 1
      %s217 = smul.addr %s216, 20
      %s218 = smul.addr %s217, 8
      %s219 = scalar_lea.vmem %s1, %s218
      %p220 = scmp.lt.s32.totalorder %s16, 1
      %s221 = scalar_select %p220, %s16, 1
      %s222 = smul.addr %s221, 20
      %s223 = smul.addr %s222, 4
      %s224 = scalar_lea.vmem %s3, %s223
      %p225 = scmp.lt.s32.totalorder %s16, 1
      %s226 = scalar_select %p225, %s16, 1
      %s227 = smul.addr %s226, 2
      %s228 = scalar_lea.vmem %s4, %s227
      %v230 = vld [vmem:[%s214] sm:$0xc]
      %v231 = vld [vmem:[%s214 + $0x4] sm:$0xf]
      %v232 = vld [vmem:[%s214 + $0x8] sm:$0xf]
      %v233 = vld [vmem:[%s214 + $0xc] sm:$0xf]
      %v234 = vld [vmem:[%s214 + $0x10] sm:$0xf]
      %v235 = vld [vmem:[%s214 + $0x14] sm:$0xf]
      %v236 = vld [vmem:[%s214 + $0x18] sm:$0xf]
      %v237 = vld [vmem:[%s214 + $0x1c] sm:$0xf]
      %v238 = vld [vmem:[%s214 + $0x20] sm:$0xf]
      %v239 = vld [vmem:[%s214 + $0x24] sm:$0xf]
      %v240 = vld [vmem:[%s214 + $0x28] sm:$0xf]
      %v241 = vld [vmem:[%s214 + $0x2c] sm:$0xf]
      %v242 = vld [vmem:[%s214 + $0x30] sm:$0xf]
      %v243 = vld [vmem:[%s214 + $0x34] sm:$0xf]
      %v244 = vld [vmem:[%s214 + $0x38] sm:$0xf]
      %v245 = vld [vmem:[%s214 + $0x3c] sm:$0xf]
      %v246 = vld [vmem:[%s214 + $0x40] sm:$0xf]
      %v247 = vld [vmem:[%s214 + $0x44] sm:$0xf]
      %v248 = vld [vmem:[%s214 + $0x48] sm:$0xf]
      %v249 = vld [vmem:[%s214 + $0x4c] sm:$0xf]
      %v250 = vld [vmem:[%s214 + $0x50] sm:$0x7]
      %v251 = vld [vmem:[%s214] sm:$0x8]
      %v252 = vld [vmem:[%s214 + $0x50] sm:$0xf]
      %v253 = vld [vmem:[%s214 + $0x4] sm:$0x8]
      %v254 = vld [vmem:[%s214 + $0x54] sm:$0xf]
      %v255 = vld [vmem:[%s214 + $0x58] sm:$0x1]
      %v256 = vld [vmem:[%s214 + $0x58] sm:$0xf]
      %v257 = vld [vmem:[%s214 + $0x5c] sm:$0x1]
      %v258 = vld [vmem:[%s214 + $0xc] sm:$0xe]
      %v259 = vld [vmem:[%s214 + $0x5c] sm:$0x3]
      %v281 = vunpack.c.l.b16 %v230
      %v282 = vunpack.c.l.b16 %v231
      %v283 = vunpack.c.l.b16 %v232
      %v284 = vunpack.c.l.b16 %v233
      %v285 = vunpack.c.l.b16 %v234
      %v286 = vunpack.c.l.b16 %v235
      %v287 = vunpack.c.l.b16 %v236
      %v288 = vunpack.c.l.b16 %v237
      %v289 = vunpack.c.l.b16 %v238
      %v290 = vunpack.c.l.b16 %v239
      %v291 = vunpack.c.l.b16 %v240
      %v292 = vunpack.c.l.b16 %v241
      %v293 = vunpack.c.l.b16 %v242
      %v294 = vunpack.c.l.b16 %v243
      %v295 = vunpack.c.l.b16 %v244
      %v296 = vunpack.c.l.b16 %v245
      %v297 = vunpack.c.l.b16 %v246
      %v298 = vunpack.c.l.b16 %v247
      %v299 = vunpack.c.l.b16 %v248
      %v300 = vunpack.c.l.b16 %v249
      %v301 = vunpack.c.l.b16 %v250
      %v302 = vpack.c.b16 %v282, %v281
      %v303 = vpack.c.b16 %v284, %v283
      %v304 = vpack.c.b16 %v286, %v285
      %v305 = vpack.c.b16 %v288, %v287
      %v306 = vpack.c.b16 %v290, %v289
      %v307 = vpack.c.b16 %v292, %v291
      %v308 = vpack.c.b16 %v294, %v293
      %v309 = vpack.c.b16 %v296, %v295
      %v310 = vpack.c.b16 %v298, %v297
      %v311 = vpack.c.b16 %v300, %v299
      %v312 = vpack.c.b16 %v301, %v301
      %v314 = vunpack.c.l.b16 %v251
      %v315 = vpack.c.b16 %v282, %v314
      %vm316 = vsmask.f32 7424
      %v318 = vshrl.u32 %v315, 16
      %v320 = vshll.u32 %v315, 16
      %v322 = vrot.slane %v320, 1
      %v323 = vor.u32 %v318, %v322
      %v325 = vshll.u32 %v303, 16
      %v327 = vrot.slane %v325, 1
      %v328 = vsel %vm316, %v323, %v327
      %v329 = vshrl.u32 %v303, 16
      %v331 = vor.u32 %v329, %v327
      %v333 = vshll.u32 %v304, 16
      %v335 = vrot.slane %v333, 1
      %v336 = vsel %vm316, %v331, %v335
      %v337 = vshrl.u32 %v304, 16
      %v339 = vor.u32 %v337, %v335
      %v341 = vshll.u32 %v305, 16
      %v343 = vrot.slane %v341, 1
      %v344 = vsel %vm316, %v339, %v343
      %v345 = vshrl.u32 %v305, 16
      %v347 = vor.u32 %v345, %v343
      %v349 = vshll.u32 %v306, 16
      %v351 = vrot.slane %v349, 1
      %v352 = vsel %vm316, %v347, %v351
      %v353 = vshrl.u32 %v306, 16
      %v355 = vor.u32 %v353, %v351
      %v357 = vshll.u32 %v307, 16
      %v359 = vrot.slane %v357, 1
      %v360 = vsel %vm316, %v355, %v359
      %v361 = vshrl.u32 %v307, 16
      %v363 = vor.u32 %v361, %v359
      %v365 = vshll.u32 %v308, 16
      %v367 = vrot.slane %v365, 1
      %v368 = vsel %vm316, %v363, %v367
      %v369 = vshrl.u32 %v308, 16
      %v371 = vor.u32 %v369, %v367
      %v373 = vshll.u32 %v309, 16
      %v375 = vrot.slane %v373, 1
      %v376 = vsel %vm316, %v371, %v375
      %v377 = vshrl.u32 %v309, 16
      %v379 = vor.u32 %v377, %v375
      %v381 = vshll.u32 %v310, 16
      %v383 = vrot.slane %v381, 1
      %v384 = vsel %vm316, %v379, %v383
      %v385 = vshrl.u32 %v310, 16
      %v387 = vor.u32 %v385, %v383
      %v389 = vshll.u32 %v311, 16
      %v391 = vrot.slane %v389, 1
      %v392 = vsel %vm316, %v387, %v391
      %v393 = vshrl.u32 %v311, 16
      %v395 = vor.u32 %v393, %v391
      %v397 = vshll.u32 %v312, 16
      %v399 = vrot.slane %v397, 1
      %v400 = vsel %vm316, %v395, %v399
      %v401 = vshrl.u32 %v312, 16
      %v403 = vor.u32 %v401, %v399
      %404 = vrot.lane.b32.xlu0 %v328, 4
      %v405 = vpop.permute.xlu0 %404
      %406 = vrot.lane.b32.xlu0 %v336, 4
      %v407 = vpop.permute.xlu0 %406
      %408 = vrot.lane.b32.xlu0 %v344, 4
      %v409 = vpop.permute.xlu0 %408
      %410 = vrot.lane.b32.xlu0 %v352, 4
      %v411 = vpop.permute.xlu0 %410
      %412 = vrot.lane.b32.xlu0 %v360, 4
      %v413 = vpop.permute.xlu0 %412
      %414 = vrot.lane.b32.xlu0 %v368, 4
      %v415 = vpop.permute.xlu0 %414
      %416 = vrot.lane.b32.xlu0 %v376, 4
      %v417 = vpop.permute.xlu0 %416
      %418 = vrot.lane.b32.xlu0 %v384, 4
      %v419 = vpop.permute.xlu0 %418
      %420 = vrot.lane.b32.xlu0 %v392, 4
      %v421 = vpop.permute.xlu0 %420
      %422 = vrot.lane.b32.xlu0 %v400, 4
      %v423 = vpop.permute.xlu0 %422
      %424 = vrot.lane.b32.xlu0 %v403, 4
      %v425 = vpop.permute.xlu0 %424
      %v427 = vunpack.c.l.b16 %v252
      %v428 = vpack.c.b16 %v427, %v427
      %vm429 = vcmask 1046528
      %v430 = vrot.slane %v315, 1
      %v431 = vrot.slane %v303, 1
      %v432 = vsel %vm429, %v430, %v431
      %v433 = vrot.slane %v304, 1
      %v434 = vsel %vm429, %v431, %v433
      %v435 = vrot.slane %v305, 1
      %v436 = vsel %vm429, %v433, %v435
      %v437 = vrot.slane %v306, 1
      %v438 = vsel %vm429, %v435, %v437
      %v439 = vrot.slane %v307, 1
      %v440 = vsel %vm429, %v437, %v439
      %v441 = vrot.slane %v308, 1
      %v442 = vsel %vm429, %v439, %v441
      %v443 = vrot.slane %v309, 1
      %v444 = vsel %vm429, %v441, %v443
      %v445 = vrot.slane %v310, 1
      %v446 = vsel %vm429, %v443, %v445
      %v447 = vrot.slane %v311, 1
      %v448 = vsel %vm429, %v445, %v447
      %v449 = vrot.slane %v428, 1
      %v450 = vsel %vm429, %v447, %v449
      %451 = vrot.lane.b32.xlu0 %v432, 8
      %v452 = vpop.permute.xlu0 %451
      %453 = vrot.lane.b32.xlu0 %v434, 8
      %v454 = vpop.permute.xlu0 %453
      %455 = vrot.lane.b32.xlu0 %v436, 8
      %v456 = vpop.permute.xlu0 %455
      %457 = vrot.lane.b32.xlu0 %v438, 8
      %v458 = vpop.permute.xlu0 %457
      %459 = vrot.lane.b32.xlu0 %v440, 8
      %v460 = vpop.permute.xlu0 %459
      %461 = vrot.lane.b32.xlu0 %v442, 8
      %v462 = vpop.permute.xlu0 %461
      %463 = vrot.lane.b32.xlu0 %v444, 8
      %v464 = vpop.permute.xlu0 %463
      %465 = vrot.lane.b32.xlu0 %v446, 8
      %v466 = vpop.permute.xlu0 %465
      %467 = vrot.lane.b32.xlu0 %v448, 8
      %v468 = vpop.permute.xlu0 %467
      %469 = vrot.lane.b32.xlu0 %v450, 8
      %v470 = vpop.permute.xlu0 %469
      %471 = vrot.lane.b32.xlu0 %v449, 8
      %v472 = vpop.permute.xlu0 %471
      %v475 = vunpack.c.l.b16 %v253
      %v476 = vunpack.c.l.b16 %v254
      %v477 = vpack.c.b16 %v283, %v475
      %v478 = vpack.c.b16 %v285, %v284
      %v479 = vpack.c.b16 %v287, %v286
      %v480 = vpack.c.b16 %v289, %v288
      %v481 = vpack.c.b16 %v291, %v290
      %v482 = vpack.c.b16 %v293, %v292
      %v483 = vpack.c.b16 %v295, %v294
      %v484 = vpack.c.b16 %v297, %v296
      %v485 = vpack.c.b16 %v299, %v298
      %v486 = vpack.c.b16 %v427, %v300
      %v487 = vpack.c.b16 %v476, %v476
      %v488 = vrot.slane %v477, 1
      %v489 = vrot.slane %v478, 1
      %v490 = vsel %vm429, %v488, %v489
      %v491 = vrot.slane %v479, 1
      %v492 = vsel %vm429, %v489, %v491
      %v493 = vrot.slane %v480, 1
      %v494 = vsel %vm429, %v491, %v493
      %v495 = vrot.slane %v481, 1
      %v496 = vsel %vm429, %v493, %v495
      %v497 = vrot.slane %v482, 1
      %v498 = vsel %vm429, %v495, %v497
      %v499 = vrot.slane %v483, 1
      %v500 = vsel %vm429, %v497, %v499
      %v501 = vrot.slane %v484, 1
      %v502 = vsel %vm429, %v499, %v501
      %v503 = vrot.slane %v485, 1
      %v504 = vsel %vm429, %v501, %v503
      %v505 = vrot.slane %v486, 1
      %v506 = vsel %vm429, %v503, %v505
      %v507 = vrot.slane %v487, 1
      %v508 = vsel %vm429, %v505, %v507
      %509 = vrot.lane.b32.xlu0 %v490, 12
      %v510 = vpop.permute.xlu0 %509
      %511 = vrot.lane.b32.xlu0 %v492, 12
      %v512 = vpop.permute.xlu0 %511
      %513 = vrot.lane.b32.xlu0 %v494, 12
      %v514 = vpop.permute.xlu0 %513
      %515 = vrot.lane.b32.xlu0 %v496, 12
      %v516 = vpop.permute.xlu0 %515
      %517 = vrot.lane.b32.xlu0 %v498, 12
      %v518 = vpop.permute.xlu0 %517
      %519 = vrot.lane.b32.xlu0 %v500, 12
      %v520 = vpop.permute.xlu0 %519
      %521 = vrot.lane.b32.xlu0 %v502, 12
      %v522 = vpop.permute.xlu0 %521
      %523 = vrot.lane.b32.xlu0 %v504, 12
      %v524 = vpop.permute.xlu0 %523
      %525 = vrot.lane.b32.xlu0 %v506, 12
      %v526 = vpop.permute.xlu0 %525
      %527 = vrot.lane.b32.xlu0 %v508, 12
      %v528 = vpop.permute.xlu0 %527
      %529 = vrot.lane.b32.xlu0 %v507, 12
      %v530 = vpop.permute.xlu0 %529
      %v531 = vpack.c.b16 %v476, %v427
      %vm532 = vsmask.f32 2304
      %v533 = vrot.slane %v329, 5
      %v534 = vrot.slane %v325, 6
      %v535 = vor.u32 %v533, %v534
      %v536 = vrot.slane %v337, 5
      %v537 = vrot.slane %v333, 6
      %v538 = vor.u32 %v536, %v537
      %v539 = vsel %vm532, %v535, %v538
      %v540 = vrot.slane %v345, 5
      %v541 = vrot.slane %v341, 6
      %v542 = vor.u32 %v540, %v541
      %v543 = vsel %vm532, %v538, %v542
      %v544 = vrot.slane %v353, 5
      %v545 = vrot.slane %v349, 6
      %v546 = vor.u32 %v544, %v545
      %v547 = vsel %vm532, %v542, %v546
      %v548 = vrot.slane %v361, 5
      %v549 = vrot.slane %v357, 6
      %v550 = vor.u32 %v548, %v549
      %v551 = vsel %vm532, %v546, %v550
      %v552 = vrot.slane %v369, 5
      %v553 = vrot.slane %v365, 6
      %v554 = vor.u32 %v552, %v553
      %v555 = vsel %vm532, %v550, %v554
      %v556 = vrot.slane %v377, 5
      %v557 = vrot.slane %v373, 6
      %v558 = vor.u32 %v556, %v557
      %v559 = vsel %vm532, %v554, %v558
      %v560 = vrot.slane %v385, 5
      %v561 = vrot.slane %v381, 6
      %v562 = vor.u32 %v560, %v561
      %v563 = vsel %vm532, %v558, %v562
      %v564 = vrot.slane %v393, 5
      %v565 = vrot.slane %v389, 6
      %v566 = vor.u32 %v564, %v565
      %v567 = vsel %vm532, %v562, %v566
      %v569 = vshrl.u32 %v531, 16
      %v571 = vrot.slane %v569, 5
      %v572 = vshll.u32 %v531, 16
      %v574 = vrot.slane %v572, 6
      %v575 = vor.u32 %v571, %v574
      %v576 = vsel %vm532, %v566, %v575
      %577 = vrot.lane.b32.xlu0 %v535, 16
      %v578 = vpop.permute.xlu0 %577
      %579 = vrot.lane.b32.xlu0 %v539, 16
      %v580 = vpop.permute.xlu0 %579
      %581 = vrot.lane.b32.xlu0 %v543, 16
      %v582 = vpop.permute.xlu0 %581
      %583 = vrot.lane.b32.xlu0 %v547, 16
      %v584 = vpop.permute.xlu0 %583
      %585 = vrot.lane.b32.xlu0 %v551, 16
      %v586 = vpop.permute.xlu0 %585
      %587 = vrot.lane.b32.xlu0 %v555, 16
      %v588 = vpop.permute.xlu0 %587
      %589 = vrot.lane.b32.xlu0 %v559, 16
      %v590 = vpop.permute.xlu0 %589
      %591 = vrot.lane.b32.xlu0 %v563, 16
      %v592 = vpop.permute.xlu0 %591
      %593 = vrot.lane.b32.xlu0 %v567, 16
      %v594 = vpop.permute.xlu0 %593
      %595 = vrot.lane.b32.xlu0 %v576, 16
      %v596 = vpop.permute.xlu0 %595
      %597 = vrot.lane.b32.xlu0 %v575, 16
      %v598 = vpop.permute.xlu0 %597
      %v600 = vunpack.c.l.b16 %v255
      %v601 = vpack.c.b16 %v600, %v600
      %vm602 = vcmask 1041408
      %v603 = vrot.slane %v303, 6
      %v604 = vrot.slane %v304, 6
      %v605 = vsel %vm602, %v603, %v604
      %v606 = vrot.slane %v305, 6
      %v607 = vsel %vm602, %v604, %v606
      %v608 = vrot.slane %v306, 6
      %v609 = vsel %vm602, %v606, %v608
      %v610 = vrot.slane %v307, 6
      %v611 = vsel %vm602, %v608, %v610
      %v612 = vrot.slane %v308, 6
      %v613 = vsel %vm602, %v610, %v612
      %v614 = vrot.slane %v309, 6
      %v615 = vsel %vm602, %v612, %v614
      %v616 = vrot.slane %v310, 6
      %v617 = vsel %vm602, %v614, %v616
      %v618 = vrot.slane %v311, 6
      %v619 = vsel %vm602, %v616, %v618
      %v620 = vrot.slane %v531, 6
      %v621 = vsel %vm602, %v618, %v620
      %v622 = vrot.slane %v601, 6
      %v623 = vsel %vm602, %v620, %v622
      %624 = vrot.lane.b32.xlu0 %v603, 20
      %v625 = vpop.permute.xlu0 %624
      %626 = vrot.lane.b32.xlu0 %v605, 20
      %v627 = vpop.permute.xlu0 %626
      %628 = vrot.lane.b32.xlu0 %v607, 20
      %v629 = vpop.permute.xlu0 %628
      %630 = vrot.lane.b32.xlu0 %v609, 20
      %v631 = vpop.permute.xlu0 %630
      %632 = vrot.lane.b32.xlu0 %v611, 20
      %v633 = vpop.permute.xlu0 %632
      %634 = vrot.lane.b32.xlu0 %v613, 20
      %v635 = vpop.permute.xlu0 %634
      %636 = vrot.lane.b32.xlu0 %v615, 20
      %v637 = vpop.permute.xlu0 %636
      %638 = vrot.lane.b32.xlu0 %v617, 20
      %v639 = vpop.permute.xlu0 %638
      %640 = vrot.lane.b32.xlu0 %v619, 20
      %v641 = vpop.permute.xlu0 %640
      %642 = vrot.lane.b32.xlu0 %v621, 20
      %v643 = vpop.permute.xlu0 %642
      %644 = vrot.lane.b32.xlu0 %v623, 20
      %v645 = vpop.permute.xlu0 %644
      %v648 = vunpack.c.l.b16 %v256
      %v649 = vunpack.c.l.b16 %v257
      %v650 = vpack.c.b16 %v648, %v476
      %v651 = vpack.c.b16 %v649, %v649
      %v652 = vrot.slane %v478, 6
      %v653 = vrot.slane %v479, 6
      %v654 = vsel %vm602, %v652, %v653
      %v655 = vrot.slane %v480, 6
      %v656 = vsel %vm602, %v653, %v655
      %v657 = vrot.slane %v481, 6
      %v658 = vsel %vm602, %v655, %v657
      %v659 = vrot.slane %v482, 6
      %v660 = vsel %vm602, %v657, %v659
      %v661 = vrot.slane %v483, 6
      %v662 = vsel %vm602, %v659, %v661
      %v663 = vrot.slane %v484, 6
      %v664 = vsel %vm602, %v661, %v663
      %v665 = vrot.slane %v485, 6
      %v666 = vsel %vm602, %v663, %v665
      %v667 = vrot.slane %v486, 6
      %v668 = vsel %vm602, %v665, %v667
      %v669 = vrot.slane %v650, 6
      %v670 = vsel %vm602, %v667, %v669
      %v671 = vrot.slane %v651, 6
      %v672 = vsel %vm602, %v669, %v671
      %673 = vrot.lane.b32.xlu0 %v652, 24
      %v674 = vpop.permute.xlu0 %673
      %675 = vrot.lane.b32.xlu0 %v654, 24
      %v676 = vpop.permute.xlu0 %675
      %677 = vrot.lane.b32.xlu0 %v656, 24
      %v678 = vpop.permute.xlu0 %677
      %679 = vrot.lane.b32.xlu0 %v658, 24
      %v680 = vpop.permute.xlu0 %679
      %681 = vrot.lane.b32.xlu0 %v660, 24
      %v682 = vpop.permute.xlu0 %681
      %683 = vrot.lane.b32.xlu0 %v662, 24
      %v684 = vpop.permute.xlu0 %683
      %685 = vrot.lane.b32.xlu0 %v664, 24
      %v686 = vpop.permute.xlu0 %685
      %687 = vrot.lane.b32.xlu0 %v666, 24
      %v688 = vpop.permute.xlu0 %687
      %689 = vrot.lane.b32.xlu0 %v668, 24
      %v690 = vpop.permute.xlu0 %689
      %691 = vrot.lane.b32.xlu0 %v670, 24
      %v692 = vpop.permute.xlu0 %691
      %693 = vrot.lane.b32.xlu0 %v672, 24
      %v694 = vpop.permute.xlu0 %693
      %v696 = vunpack.c.l.b16 %v258
      %v697 = vpack.c.b16 %v285, %v696
      %vm698 = vsmask.f32 1280
      %v700 = vshrl.u32 %v697, 16
      %v702 = vrot.slane %v700, 6
      %v703 = vshll.u32 %v697, 16
      %v705 = vrot.slane %v703, 7
      %v706 = vor.u32 %v702, %v705
      %v708 = vshrl.u32 %v479, 16
      %v710 = vrot.slane %v708, 6
      %v711 = vshll.u32 %v479, 16
      %v713 = vrot.slane %v711, 7
      %v714 = vor.u32 %v710, %v713
      %v715 = vsel %vm698, %v706, %v714
      %v717 = vshrl.u32 %v480, 16
      %v719 = vrot.slane %v717, 6
      %v720 = vshll.u32 %v480, 16
      %v722 = vrot.slane %v720, 7
      %v723 = vor.u32 %v719, %v722
      %v724 = vsel %vm698, %v714, %v723
      %v726 = vshrl.u32 %v481, 16
      %v728 = vrot.slane %v726, 6
      %v729 = vshll.u32 %v481, 16
      %v731 = vrot.slane %v729, 7
      %v732 = vor.u32 %v728, %v731
      %v733 = vsel %vm698, %v723, %v732
      %v735 = vshrl.u32 %v482, 16
      %v737 = vrot.slane %v735, 6
      %v738 = vshll.u32 %v482, 16
      %v740 = vrot.slane %v738, 7
      %v741 = vor.u32 %v737, %v740
      %v742 = vsel %vm698, %v732, %v741
      %v744 = vshrl.u32 %v483, 16
      %v746 = vrot.slane %v744, 6
      %v747 = vshll.u32 %v483, 16
      %v749 = vrot.slane %v747, 7
      %v750 = vor.u32 %v746, %v749
      %v751 = vsel %vm698, %v741, %v750
      %v753 = vshrl.u32 %v484, 16
      %v755 = vrot.slane %v753, 6
      %v756 = vshll.u32 %v484, 16
      %v758 = vrot.slane %v756, 7
      %v759 = vor.u32 %v755, %v758
      %v760 = vsel %vm698, %v750, %v759
      %v762 = vshrl.u32 %v485, 16
      %v764 = vrot.slane %v762, 6
      %v765 = vshll.u32 %v485, 16
      %v767 = vrot.slane %v765, 7
      %v768 = vor.u32 %v764, %v767
      %v769 = vsel %vm698, %v759, %v768
      %v771 = vshrl.u32 %v486, 16
      %v773 = vrot.slane %v771, 6
      %v774 = vshll.u32 %v486, 16
      %v776 = vrot.slane %v774, 7
      %v777 = vor.u32 %v773, %v776
      %v778 = vsel %vm698, %v768, %v777
      %v780 = vshrl.u32 %v650, 16
      %v782 = vrot.slane %v780, 6
      %v783 = vshll.u32 %v650, 16
      %v785 = vrot.slane %v783, 7
      %v786 = vor.u32 %v782, %v785
      %v787 = vsel %vm698, %v777, %v786
      %v789 = vshrl.u32 %v651, 16
      %v791 = vrot.slane %v789, 6
      %v792 = vshll.u32 %v651, 16
      %v794 = vrot.slane %v792, 7
      %v795 = vor.u32 %v791, %v794
      %v796 = vsel %vm698, %v786, %v795
      %797 = vrot.lane.b32.xlu0 %v706, 28
      %v798 = vpop.permute.xlu0 %797
      %799 = vrot.lane.b32.xlu0 %v715, 28
      %v800 = vpop.permute.xlu0 %799
      %801 = vrot.lane.b32.xlu0 %v724, 28
      %v802 = vpop.permute.xlu0 %801
      %803 = vrot.lane.b32.xlu0 %v733, 28
      %v804 = vpop.permute.xlu0 %803
      %805 = vrot.lane.b32.xlu0 %v742, 28
      %v806 = vpop.permute.xlu0 %805
      %807 = vrot.lane.b32.xlu0 %v751, 28
      %v808 = vpop.permute.xlu0 %807
      %809 = vrot.lane.b32.xlu0 %v760, 28
      %v810 = vpop.permute.xlu0 %809
      %811 = vrot.lane.b32.xlu0 %v769, 28
      %v812 = vpop.permute.xlu0 %811
      %813 = vrot.lane.b32.xlu0 %v778, 28
      %v814 = vpop.permute.xlu0 %813
      %815 = vrot.lane.b32.xlu0 %v787, 28
      %v816 = vpop.permute.xlu0 %815
      %817 = vrot.lane.b32.xlu0 %v796, 28
      %v818 = vpop.permute.xlu0 %817
      %v820 = vunpack.c.l.b16 %v259
      %v821 = vpack.c.b16 %v820, %v820
      %vm822 = vcmask 1040384
      %v823 = vrot.slane %v697, 7
      %v824 = vrot.slane %v479, 7
      %v825 = vsel %vm822, %v823, %v824
      %v826 = vrot.slane %v480, 7
      %v827 = vsel %vm822, %v824, %v826
      %v828 = vrot.slane %v481, 7
      %v829 = vsel %vm822, %v826, %v828
      %v830 = vrot.slane %v482, 7
      %v831 = vsel %vm822, %v828, %v830
      %v832 = vrot.slane %v483, 7
      %v833 = vsel %vm822, %v830, %v832
      %v834 = vrot.slane %v484, 7
      %v835 = vsel %vm822, %v832, %v834
      %v836 = vrot.slane %v485, 7
      %v837 = vsel %vm822, %v834, %v836
      %v838 = vrot.slane %v486, 7
      %v839 = vsel %vm822, %v836, %v838
      %v840 = vrot.slane %v650, 7
      %v841 = vsel %vm822, %v838, %v840
      %v842 = vrot.slane %v821, 7
      %v843 = vsel %vm822, %v840, %v842
      %844 = vrot.lane.b32.xlu0 %v823, 32
      %v845 = vpop.permute.xlu0 %844
      %846 = vrot.lane.b32.xlu0 %v825, 32
      %v847 = vpop.permute.xlu0 %846
      %848 = vrot.lane.b32.xlu0 %v827, 32
      %v849 = vpop.permute.xlu0 %848
      %850 = vrot.lane.b32.xlu0 %v829, 32
      %v851 = vpop.permute.xlu0 %850
      %852 = vrot.lane.b32.xlu0 %v831, 32
      %v853 = vpop.permute.xlu0 %852
      %854 = vrot.lane.b32.xlu0 %v833, 32
      %v855 = vpop.permute.xlu0 %854
      %856 = vrot.lane.b32.xlu0 %v835, 32
      %v857 = vpop.permute.xlu0 %856
      %858 = vrot.lane.b32.xlu0 %v837, 32
      %v859 = vpop.permute.xlu0 %858
      %860 = vrot.lane.b32.xlu0 %v839, 32
      %v861 = vpop.permute.xlu0 %860
      %862 = vrot.lane.b32.xlu0 %v841, 32
      %v863 = vpop.permute.xlu0 %862
      %864 = vrot.lane.b32.xlu0 %v843, 32
      %v865 = vpop.permute.xlu0 %864
      %vm866 = vcmask 31744
      %v869 = vsel %vm866, %v302, %v405
      %v871 = vsel %vm866, %v303, %v407
      %v873 = vsel %vm866, %v304, %v409
      %v875 = vsel %vm866, %v305, %v411
      %v877 = vsel %vm866, %v306, %v413
      %v879 = vsel %vm866, %v307, %v415
      %v881 = vsel %vm866, %v308, %v417
      %v883 = vsel %vm866, %v309, %v419
      %v885 = vsel %vm866, %v310, %v421
      %v887 = vsel %vm866, %v311, %v423
      %v889 = vsel %vm866, %v312, %v425
      %vm890 = vcmask 64512
      %v892 = vsel %vm890, %v869, %v452
      %v894 = vsel %vm890, %v871, %v454
      %v896 = vsel %vm890, %v873, %v456
      %v898 = vsel %vm890, %v875, %v458
      %v900 = vsel %vm890, %v877, %v460
      %v902 = vsel %vm890, %v879, %v462
      %v904 = vsel %vm890, %v881, %v464
      %v906 = vsel %vm890, %v883, %v466
      %v908 = vsel %vm890, %v885, %v468
      %v910 = vsel %vm890, %v887, %v470
      %v912 = vsel %vm890, %v889, %v472
      %vm913 = vcmask 97280
      %v915 = vsel %vm913, %v892, %v510
      %v917 = vsel %vm913, %v894, %v512
      %v919 = vsel %vm913, %v896, %v514
      %v921 = vsel %vm913, %v898, %v516
      %v923 = vsel %vm913, %v900, %v518
      %v925 = vsel %vm913, %v902, %v520
      %v927 = vsel %vm913, %v904, %v522
      %v929 = vsel %vm913, %v906, %v524
      %v931 = vsel %vm913, %v908, %v526
      %v933 = vsel %vm913, %v910, %v528
      %v935 = vsel %vm913, %v912, %v530
      %vm936 = vcmask 130048
      %v938 = vsel %vm936, %v915, %v578
      %v940 = vsel %vm936, %v917, %v580
      %v942 = vsel %vm936, %v919, %v582
      %v944 = vsel %vm936, %v921, %v584
      %v946 = vsel %vm936, %v923, %v586
      %v948 = vsel %vm936, %v925, %v588
      %v950 = vsel %vm936, %v927, %v590
      %v952 = vsel %vm936, %v929, %v592
      %v954 = vsel %vm936, %v931, %v594
      %v956 = vsel %vm936, %v933, %v596
      %v958 = vsel %vm936, %v935, %v598
      %vm959 = vcmask 162816
      %v961 = vsel %vm959, %v938, %v625
      %v963 = vsel %vm959, %v940, %v627
      %v965 = vsel %vm959, %v942, %v629
      %v967 = vsel %vm959, %v944, %v631
      %v969 = vsel %vm959, %v946, %v633
      %v971 = vsel %vm959, %v948, %v635
      %v973 = vsel %vm959, %v950, %v637
      %v975 = vsel %vm959, %v952, %v639
      %v977 = vsel %vm959, %v954, %v641
      %v979 = vsel %vm959, %v956, %v643
      %v981 = vsel %vm959, %v958, %v645
      %vm982 = vcmask 195584
      %v984 = vsel %vm982, %v961, %v674
      %v986 = vsel %vm982, %v963, %v676
      %v988 = vsel %vm982, %v965, %v678
      %v990 = vsel %vm982, %v967, %v680
      %v992 = vsel %vm982, %v969, %v682
      %v994 = vsel %vm982, %v971, %v684
      %v996 = vsel %vm982, %v973, %v686
      %v998 = vsel %vm982, %v975, %v688
      %v1000 = vsel %vm982, %v977, %v690
      %v1002 = vsel %vm982, %v979, %v692
      %v1004 = vsel %vm982, %v981, %v694
      %vm1005 = vcmask 228352
      %v1007 = vsel %vm1005, %v984, %v798
      %v1009 = vsel %vm1005, %v986, %v800
      %v1011 = vsel %vm1005, %v988, %v802
      %v1013 = vsel %vm1005, %v990, %v804
      %v1015 = vsel %vm1005, %v992, %v806
      %v1017 = vsel %vm1005, %v994, %v808
      %v1019 = vsel %vm1005, %v996, %v810
      %v1021 = vsel %vm1005, %v998, %v812
      %v1023 = vsel %vm1005, %v1000, %v814
      %v1025 = vsel %vm1005, %v1002, %v816
      %v1027 = vsel %vm1005, %v1004, %v818
      %vm1028 = vcmask 261120
      %v1030 = vsel %vm1028, %v1007, %v845
      %v1032 = vsel %vm1028, %v1009, %v847
      %v1034 = vsel %vm1028, %v1011, %v849
      %v1036 = vsel %vm1028, %v1013, %v851
      %v1038 = vsel %vm1028, %v1015, %v853
      %v1040 = vsel %vm1028, %v1017, %v855
      %v1042 = vsel %vm1028, %v1019, %v857
      %v1044 = vsel %vm1028, %v1021, %v859
      %v1046 = vsel %vm1028, %v1023, %v861
      %v1048 = vsel %vm1028, %v1025, %v863
      %v1050 = vsel %vm1028, %v1027, %v865
      %v1051 = vld [vmem:[%s2] sm:$0xf]
      %v1052 = vld [vmem:[%s2 + $0x4] sm:$0xf]
      %v1053 = vld [vmem:[%s2 + $0x8] sm:$0xf]
      %v1054 = vld [vmem:[%s2 + $0xc] sm:$0xf]
      %v1055 = vld [vmem:[%s2 + $0x10] sm:$0x3]
      %vm1056 = vsmask.f32 5376
      %v1057 = vshrl.u32 %v1030, 16
      %v1059 = vrot.slane %v1057, 2
      %v1060 = vshll.u32 %v1030, 16
      %v1062 = vrot.slane %v1060, 3
      %v1063 = vor.u32 %v1059, %v1062
      %v1064 = vshrl.u32 %v1032, 16
      %v1066 = vrot.slane %v1064, 2
      %v1067 = vshll.u32 %v1032, 16
      %v1069 = vrot.slane %v1067, 3
      %v1070 = vor.u32 %v1066, %v1069
      %v1071 = vsel %vm1056, %v1063, %v1070
      %v1072 = vshrl.u32 %v1034, 16
      %v1074 = vrot.slane %v1072, 2
      %v1075 = vshll.u32 %v1034, 16
      %v1077 = vrot.slane %v1075, 3
      %v1078 = vor.u32 %v1074, %v1077
      %v1079 = vsel %vm1056, %v1070, %v1078
      %v1080 = vshrl.u32 %v1036, 16
      %v1082 = vrot.slane %v1080, 2
      %v1083 = vshll.u32 %v1036, 16
      %v1085 = vrot.slane %v1083, 3
      %v1086 = vor.u32 %v1082, %v1085
      %v1087 = vsel %vm1056, %v1078, %v1086
      %v1088 = vshrl.u32 %v1038, 16
      %v1090 = vrot.slane %v1088, 2
      %v1091 = vshll.u32 %v1038, 16
      %v1093 = vrot.slane %v1091, 3
      %v1094 = vor.u32 %v1090, %v1093
      %v1095 = vsel %vm1056, %v1086, %v1094
      %v1096 = vshrl.u32 %v1040, 16
      %v1098 = vrot.slane %v1096, 2
      %v1099 = vshll.u32 %v1040, 16
      %v1101 = vrot.slane %v1099, 3
      %v1102 = vor.u32 %v1098, %v1101
      %v1103 = vsel %vm1056, %v1094, %v1102
      %v1104 = vshrl.u32 %v1042, 16
      %v1106 = vrot.slane %v1104, 2
      %v1107 = vshll.u32 %v1042, 16
      %v1109 = vrot.slane %v1107, 3
      %v1110 = vor.u32 %v1106, %v1109
      %v1111 = vsel %vm1056, %v1102, %v1110
      %v1112 = vshrl.u32 %v1044, 16
      %v1114 = vrot.slane %v1112, 2
      %v1115 = vshll.u32 %v1044, 16
      %v1117 = vrot.slane %v1115, 3
      %v1118 = vor.u32 %v1114, %v1117
      %v1119 = vsel %vm1056, %v1110, %v1118
      %v1120 = vshrl.u32 %v1046, 16
      %v1122 = vrot.slane %v1120, 2
      %v1123 = vshll.u32 %v1046, 16
      %v1125 = vrot.slane %v1123, 3
      %v1126 = vor.u32 %v1122, %v1125
      %v1127 = vsel %vm1056, %v1118, %v1126
      %v1128 = vshrl.u32 %v1048, 16
      %v1130 = vrot.slane %v1128, 2
      %v1131 = vshll.u32 %v1048, 16
      %v1133 = vrot.slane %v1131, 3
      %v1134 = vor.u32 %v1130, %v1133
      %v1135 = vsel %vm1056, %v1126, %v1134
      %v1136 = vshrl.u32 %v1050, 16
      %v1138 = vrot.slane %v1136, 2
      %v1139 = vshll.u32 %v1050, 16
      %v1141 = vrot.slane %v1139, 3
      %v1142 = vor.u32 %v1138, %v1141
      %v1143 = vsel %vm1056, %v1134, %v1142
      %v1149 = vunpack.c.l.b16 %v1051
      %v1150 = vunpack.c.l.b16 %v1052
      %v1151 = vunpack.c.l.b16 %v1053
      %v1152 = vunpack.c.l.b16 %v1054
      %v1153 = vunpack.c.l.b16 %v1055
      %v1154 = vpack.c.b16 %v1150, %v1149
      %v1155 = vpack.c.b16 %v1152, %v1151
      %v1156 = vpack.c.b16 %v1153, %v1153
      %vm1159 = vcmask 293888
      %v1161 = vsel %vm1159, %v1071, 0
      %v1164 = vsel %vm1159, %v1079, 0
      %v1167 = vsel %vm1159, %v1087, 0
      %v1170 = vsel %vm1159, %v1095, 0
      %v1173 = vsel %vm1159, %v1103, 0
      %v1176 = vsel %vm1159, %v1111, 0
      %v1179 = vsel %vm1159, %v1119, 0
      %v1182 = vsel %vm1159, %v1127, 0
      %v1185 = vsel %vm1159, %v1135, 0
      %v1188 = vsel %vm1159, %v1143, 0
      %vm1190 = vcmask 1041408
      %v1192 = vsel %vm1190, %v1156, 0
      %1194 = vmatprep.subr.bf16.mxu0 0
      %1195 = vmatpush1.bf16.msra.mxu0 %v1154
      %1196 = vmatprep.subr.bf16.mxu0 0
      %1197 = vmatpush1.bf16.msra.mxu0 %v1155
      %1198 = vmatprep.subr.bf16.mxu0 0
      %1199 = vmatpush1.bf16.msra.mxu0 %v1192
      %1200 = vmatprep.subr.bf16.mxu0 0
      %1201 = vmatpush1.bf16.msra.mxu0 0
      %1202 = vmatprep.subr.bf16.mxu0 0
      %1203 = vmatpush1.bf16.msra.mxu0 0
      %1204 = vmatprep.subr.bf16.mxu0 0
      %1205 = vmatpush1.bf16.msra.mxu0 0
      %1206 = vmatprep.subr.bf16.mxu0 0
      %1207 = vmatpush1.bf16.msra.mxu0 0
      %1208 = vmatprep.subr.bf16.mxu0 0
      %1209 = vmatpush1.bf16.msra.mxu0 0
      %1210 = vmatprep.subr.bf16.mxu0 0
      %1211 = vmatpush1.bf16.msra.mxu0 0
      %1212 = vmatprep.subr.bf16.mxu0 0
      %1213 = vmatpush1.bf16.msra.mxu0 0
      %1214 = vmatprep.subr.bf16.mxu0 0
      %1215 = vmatpush1.bf16.msra.mxu0 0
      %1216 = vmatprep.subr.bf16.mxu0 0
      %1217 = vmatpush1.bf16.msra.mxu0 0
      %1218 = vmatprep.subr.bf16.mxu0 0
      %1219 = vmatpush1.bf16.msra.mxu0 0
      %1220 = vmatprep.subr.bf16.mxu0 0
      %1221 = vmatpush1.bf16.msra.mxu0 0
      %1222 = vmatprep.subr.bf16.mxu0 0
      %1223 = vmatpush1.bf16.msra.mxu0 0
      %1224 = vmatprep.subr.bf16.mxu0 0
      %1225 = vmatpush1.bf16.msra.mxu0 0
      %1226 = vmatprep.mubr.bf16.mxu0 0
      %1227 = vmatmul.mubr.bf16.gmra.mrb[0].mxu0 %v1161
      %v1228 = vpop.f32.mrb[0].mxu0
      %v1229 = vadd.f32 0.0, %v1228
      %v1230 = vpop.f32.mrb[0].mxu0
      %v1231 = vpop.f32.mrb[0].mxu0
      %v1232 = vadd.f32 0.0, %v1231
      %v1233 = vpop.f32.mrb[0].mxu0
      %1234 = vmatprep.mubr.bf16.mxu0 0
      %1235 = vmatmul.mubr.bf16.gmra.mrb[0].mxu0 %v1164
      %v1236 = vpop.f32.mrb[0].mxu0
      %v1237 = vadd.f32 0.0, %v1236
      %v1238 = vpop.f32.mrb[0].mxu0
      %v1239 = vpop.f32.mrb[0].mxu0
      %v1240 = vadd.f32 0.0, %v1239
      %v1241 = vpop.f32.mrb[0].mxu0
      %1242 = vmatprep.mubr.bf16.mxu0 0
      %1243 = vmatmul.mubr.bf16.gmra.mrb[0].mxu0 %v1167
      %v1244 = vpop.f32.mrb[0].mxu0
      %v1245 = vadd.f32 0.0, %v1244
      %v1246 = vpop.f32.mrb[0].mxu0
      %v1247 = vpop.f32.mrb[0].mxu0
      %v1248 = vadd.f32 0.0, %v1247
      %v1249 = vpop.f32.mrb[0].mxu0
      %1250 = vmatprep.mubr.bf16.mxu0 0
      %1251 = vmatmul.mubr.bf16.gmra.mrb[0].mxu0 %v1170
      %v1252 = vpop.f32.mrb[0].mxu0
      %v1253 = vadd.f32 0.0, %v1252
      %v1254 = vpop.f32.mrb[0].mxu0
      %v1255 = vpop.f32.mrb[0].mxu0
      %v1256 = vadd.f32 0.0, %v1255
      %v1257 = vpop.f32.mrb[0].mxu0
      %1258 = vmatprep.mubr.bf16.mxu0 0
      %1259 = vmatmul.mubr.bf16.gmra.mrb[0].mxu0 %v1173
      %v1260 = vpop.f32.mrb[0].mxu0
      %v1261 = vadd.f32 0.0, %v1260
      %v1262 = vpop.f32.mrb[0].mxu0
      %v1263 = vpop.f32.mrb[0].mxu0
      %v1264 = vadd.f32 0.0, %v1263
      %v1265 = vpop.f32.mrb[0].mxu0
      %1266 = vmatprep.mubr.bf16.mxu0 0
      %1267 = vmatmul.mubr.bf16.gmra.mrb[0].mxu0 %v1176
      %v1268 = vpop.f32.mrb[0].mxu0
      %v1269 = vadd.f32 0.0, %v1268
      %v1270 = vpop.f32.mrb[0].mxu0
      %v1271 = vpop.f32.mrb[0].mxu0
      %v1272 = vadd.f32 0.0, %v1271
      %v1273 = vpop.f32.mrb[0].mxu0
      %1274 = vmatprep.mubr.bf16.mxu0 0
      %1275 = vmatmul.mubr.bf16.gmra.mrb[0].mxu0 %v1179
      %v1276 = vpop.f32.mrb[0].mxu0
      %v1277 = vadd.f32 0.0, %v1276
      %v1278 = vpop.f32.mrb[0].mxu0
      %v1279 = vpop.f32.mrb[0].mxu0
      %v1280 = vadd.f32 0.0, %v1279
      %v1281 = vpop.f32.mrb[0].mxu0
      %1282 = vmatprep.mubr.bf16.mxu0 0
      %1283 = vmatmul.mubr.bf16.gmra.mrb[0].mxu0 %v1182
      %v1284 = vpop.f32.mrb[0].mxu0
      %v1285 = vadd.f32 0.0, %v1284
      %v1286 = vpop.f32.mrb[0].mxu0
      %v1287 = vpop.f32.mrb[0].mxu0
      %v1288 = vadd.f32 0.0, %v1287
      %v1289 = vpop.f32.mrb[0].mxu0
      %1290 = vmatprep.mubr.bf16.mxu0 0
      %1291 = vmatmul.mubr.bf16.gmra.mrb[0].mxu0 %v1185
      %v1292 = vpop.f32.mrb[0].mxu0
      %v1293 = vadd.f32 0.0, %v1292
      %v1294 = vpop.f32.mrb[0].mxu0
      %v1295 = vpop.f32.mrb[0].mxu0
      %v1296 = vadd.f32 0.0, %v1295
      %v1297 = vpop.f32.mrb[0].mxu0
      %1298 = vmatprep.mubr.bf16.mxu0 0
      %1299 = vmatmul.mubr.bf16.gmra.mrb[0].mxu0 %v1188
      %v1300 = vpop.f32.mrb[0].mxu0
      %v1301 = vadd.f32 0.0, %v1300
      %v1302 = vpop.f32.mrb[0].mxu0
      %v1303 = vpop.f32.mrb[0].mxu0
      %v1304 = vadd.f32 0.0, %v1303
      %v1305 = vpop.f32.mrb[0].mxu0
      %1306 = vdwg.mxu0
      %v1307 = vpack.c.bf16 %v1232, %v1229
      %v1308 = vpack.c.bf16 %v1240, %v1237
      %v1309 = vpack.c.bf16 %v1248, %v1245
      %v1310 = vpack.c.bf16 %v1256, %v1253
      %v1311 = vpack.c.bf16 %v1264, %v1261
      %v1312 = vpack.c.bf16 %v1272, %v1269
      %v1313 = vpack.c.bf16 %v1280, %v1277
      %v1314 = vpack.c.bf16 %v1288, %v1285
      %v1315 = vpack.c.bf16 %v1296, %v1293
      %v1316 = vpack.c.bf16 %v1304, %v1301
      %v1327 = vunpack.c.l.b16 %v1307
      %v1328 = vunpack.c.h.b16 %v1307
      %v1329 = vunpack.c.l.b16 %v1308
      %v1330 = vunpack.c.h.b16 %v1308
      %v1331 = vunpack.c.l.b16 %v1309
      %v1332 = vunpack.c.h.b16 %v1309
      %v1333 = vunpack.c.l.b16 %v1310
      %v1334 = vunpack.c.h.b16 %v1310
      %v1335 = vunpack.c.l.b16 %v1311
      %v1336 = vunpack.c.h.b16 %v1311
      %v1337 = vunpack.c.l.b16 %v1312
      %v1338 = vunpack.c.h.b16 %v1312
      %v1339 = vunpack.c.l.b16 %v1313
      %v1340 = vunpack.c.h.b16 %v1313
      %v1341 = vunpack.c.l.b16 %v1314
      %v1342 = vunpack.c.h.b16 %v1314
      %v1343 = vunpack.c.l.b16 %v1315
      %v1344 = vunpack.c.h.b16 %v1315
      %v1345 = vunpack.c.l.b16 %v1316
      %v1346 = vunpack.c.h.b16 %v1316
      %v1347 = vpack.c.b16 %v1327, %v1327
      %v1348 = vpack.c.b16 %v1328, %v1328
      %v1349 = vpack.c.b16 %v1329, %v1329
      %v1350 = vpack.c.b16 %v1330, %v1330
      %v1351 = vpack.c.b16 %v1331, %v1331
      %v1352 = vpack.c.b16 %v1332, %v1332
      %v1353 = vpack.c.b16 %v1333, %v1333
      %v1354 = vpack.c.b16 %v1334, %v1334
      %v1355 = vpack.c.b16 %v1335, %v1335
      %v1356 = vpack.c.b16 %v1336, %v1336
      %v1357 = vpack.c.b16 %v1337, %v1337
      %v1358 = vpack.c.b16 %v1338, %v1338
      %v1359 = vpack.c.b16 %v1339, %v1339
      %v1360 = vpack.c.b16 %v1340, %v1340
      %v1361 = vpack.c.b16 %v1341, %v1341
      %v1362 = vpack.c.b16 %v1342, %v1342
      %v1363 = vpack.c.b16 %v1343, %v1343
      %v1364 = vpack.c.b16 %v1344, %v1344
      %v1365 = vpack.c.b16 %v1345, %v1345
      %v1366 = vpack.c.b16 %v1346, %v1346
      %vm1387 = vcmask 60416
      %1388 = vst.msk [vmem:[%s224] sm:$0xf] %vm1387, %v1347
      %1389 = vst.msk [vmem:[%s224 + $0x4] sm:$0xf] %vm1387, %v1348
      %1390 = vst.msk [vmem:[%s224 + $0x8] sm:$0xf] %vm1387, %v1349
      %1391 = vst.msk [vmem:[%s224 + $0xc] sm:$0xf] %vm1387, %v1350
      %1392 = vst.msk [vmem:[%s224 + $0x10] sm:$0xf] %vm1387, %v1351
      %1393 = vst.msk [vmem:[%s224 + $0x14] sm:$0xf] %vm1387, %v1352
      %1394 = vst.msk [vmem:[%s224 + $0x18] sm:$0xf] %vm1387, %v1353
      %1395 = vst.msk [vmem:[%s224 + $0x1c] sm:$0xf] %vm1387, %v1354
      %1396 = vst.msk [vmem:[%s224 + $0x20] sm:$0xf] %vm1387, %v1355
      %1397 = vst.msk [vmem:[%s224 + $0x24] sm:$0xf] %vm1387, %v1356
      %1398 = vst.msk [vmem:[%s224 + $0x28] sm:$0xf] %vm1387, %v1357
      %1399 = vst.msk [vmem:[%s224 + $0x2c] sm:$0xf] %vm1387, %v1358
      %1400 = vst.msk [vmem:[%s224 + $0x30] sm:$0xf] %vm1387, %v1359
      %1401 = vst.msk [vmem:[%s224 + $0x34] sm:$0xf] %vm1387, %v1360
      %1402 = vst.msk [vmem:[%s224 + $0x38] sm:$0xf] %vm1387, %v1361
      %1403 = vst.msk [vmem:[%s224 + $0x3c] sm:$0xf] %vm1387, %v1362
      %1404 = vst.msk [vmem:[%s224 + $0x40] sm:$0xf] %vm1387, %v1363
      %1405 = vst.msk [vmem:[%s224 + $0x44] sm:$0xf] %vm1387, %v1364
      %1406 = vst.msk [vmem:[%s224 + $0x48] sm:$0xf] %vm1387, %v1365
      %1407 = vst.msk [vmem:[%s224 + $0x4c] sm:$0xf] %vm1387, %v1366
      %v1408 = vld [vmem:[%s219 + $0x10] sm:$0xff]
      %v1409 = vld [vmem:[%s219 + $0x18] sm:$0xff]
      %v1410 = vld [vmem:[%s219 + $0x20] sm:$0xff]
      %v1411 = vld [vmem:[%s219 + $0x28] sm:$0xff]
      %v1412 = vld [vmem:[%s219 + $0x30] sm:$0xff]
      %v1413 = vld [vmem:[%s219 + $0x38] sm:$0xff]
      %v1414 = vld [vmem:[%s219 + $0x40] sm:$0xff]
      %v1415 = vld [vmem:[%s219 + $0x48] sm:$0xff]
      %v1416 = vld [vmem:[%s219 + $0x50] sm:$0xff]
      %v1417 = vld [vmem:[%s219 + $0x58] sm:$0xff]
      %v1418 = vld [vmem:[%s219 + $0x60] sm:$0xff]
      %v1419 = vld [vmem:[%s219 + $0x68] sm:$0xff]
      %v1420 = vld [vmem:[%s219 + $0x70] sm:$0xff]
      %v1421 = vld [vmem:[%s219 + $0x78] sm:$0xff]
      %v1422 = vld [vmem:[%s219 + $0x80] sm:$0xff]
      %v1423 = vld [vmem:[%s219 + $0x88] sm:$0xff]
      %1425 = vset.pattern.permute.xlu0 0
      %1426 = vperm.xlu0 %1425, %v1408
      %v1427 = vpop.permute.xlu0 %1426
      %1430 = vset.pattern.permute.xlu0 0
      %1431 = vperm.xlu0 %1430, %v1409
      %v1432 = vpop.permute.xlu0 %1431
      %1435 = vset.pattern.permute.xlu0 0
      %1436 = vperm.xlu0 %1435, %v1410
      %v1437 = vpop.permute.xlu0 %1436
      %1440 = vset.pattern.permute.xlu0 0
      %1441 = vperm.xlu0 %1440, %v1411
      %v1442 = vpop.permute.xlu0 %1441
      %1445 = vset.pattern.permute.xlu0 0
      %1446 = vperm.xlu0 %1445, %v1412
      %v1447 = vpop.permute.xlu0 %1446
      %1450 = vset.pattern.permute.xlu0 0
      %1451 = vperm.xlu0 %1450, %v1413
      %v1452 = vpop.permute.xlu0 %1451
      %1455 = vset.pattern.permute.xlu0 0
      %1456 = vperm.xlu0 %1455, %v1414
      %v1457 = vpop.permute.xlu0 %1456
      %1460 = vset.pattern.permute.xlu0 0
      %1461 = vperm.xlu0 %1460, %v1415
      %v1462 = vpop.permute.xlu0 %1461
      %1465 = vset.pattern.permute.xlu0 0
      %1466 = vperm.xlu0 %1465, %v1416
      %v1467 = vpop.permute.xlu0 %1466
      %1470 = vset.pattern.permute.xlu0 0
      %1471 = vperm.xlu0 %1470, %v1417
      %v1472 = vpop.permute.xlu0 %1471
      %1475 = vset.pattern.permute.xlu0 0
      %1476 = vperm.xlu0 %1475, %v1418
      %v1477 = vpop.permute.xlu0 %1476
      %1480 = vset.pattern.permute.xlu0 0
      %1481 = vperm.xlu0 %1480, %v1419
      %v1482 = vpop.permute.xlu0 %1481
      %1485 = vset.pattern.permute.xlu0 0
      %1486 = vperm.xlu0 %1485, %v1420
      %v1487 = vpop.permute.xlu0 %1486
      %1490 = vset.pattern.permute.xlu0 0
      %1491 = vperm.xlu0 %1490, %v1421
      %v1492 = vpop.permute.xlu0 %1491
      %1495 = vset.pattern.permute.xlu0 0
      %1496 = vperm.xlu0 %1495, %v1422
      %v1497 = vpop.permute.xlu0 %1496
      %1500 = vset.pattern.permute.xlu0 0
      %1501 = vperm.xlu0 %1500, %v1423
      %v1502 = vpop.permute.xlu0 %1501
      %v1504 = vmul.f32 %v1237, %v1427
      %v1505 = vmul.f32 %v1240, %v1432
      %v1506 = vmul.f32 %v1245, %v1437
      %v1507 = vmul.f32 %v1248, %v1442
      %v1508 = vmul.f32 %v1253, %v1447
      %v1509 = vmul.f32 %v1256, %v1452
      %v1510 = vmul.f32 %v1261, %v1457
      %v1511 = vmul.f32 %v1264, %v1462
      %v1512 = vmul.f32 %v1269, %v1467
      %v1513 = vmul.f32 %v1272, %v1472
      %v1514 = vmul.f32 %v1277, %v1477
      %v1515 = vmul.f32 %v1280, %v1482
      %v1516 = vmul.f32 %v1285, %v1487
      %v1517 = vmul.f32 %v1288, %v1492
      %v1518 = vmul.f32 %v1293, %v1497
      %v1519 = vmul.f32 %v1296, %v1502
      %v1520 = vsel %vm890, %v1504, 0.0
      %v1521 = vsel %vm890, %v1505, 0.0
      %v1522 = vadd.f32 %v1520, %v1521
      %v1523 = vsel %vm890, %v1506, 0.0
      %v1524 = vadd.f32 %v1522, %v1523
      %v1525 = vsel %vm890, %v1507, 0.0
      %v1526 = vadd.f32 %v1524, %v1525
      %v1527 = vsel %vm890, %v1508, 0.0
      %v1528 = vadd.f32 %v1526, %v1527
      %v1529 = vsel %vm890, %v1509, 0.0
      %v1530 = vadd.f32 %v1528, %v1529
      %v1531 = vsel %vm890, %v1510, 0.0
      %v1532 = vadd.f32 %v1530, %v1531
      %v1533 = vsel %vm890, %v1511, 0.0
      %v1534 = vadd.f32 %v1532, %v1533
      %v1535 = vsel %vm890, %v1512, 0.0
      %v1536 = vadd.f32 %v1534, %v1535
      %v1537 = vsel %vm890, %v1513, 0.0
      %v1538 = vadd.f32 %v1536, %v1537
      %v1539 = vsel %vm890, %v1514, 0.0
      %v1540 = vadd.f32 %v1538, %v1539
      %v1541 = vsel %vm890, %v1515, 0.0
      %v1542 = vadd.f32 %v1540, %v1541
      %v1543 = vsel %vm890, %v1516, 0.0
      %v1544 = vadd.f32 %v1542, %v1543
      %v1545 = vsel %vm890, %v1517, 0.0
      %v1546 = vadd.f32 %v1544, %v1545
      %v1547 = vsel %vm890, %v1518, 0.0
      %v1548 = vadd.f32 %v1546, %v1547
      %v1549 = vsel %vm890, %v1519, 0.0
      %v1550 = vadd.f32 %v1548, %v1549
      %v1551 = vrot.slane %v1550, 4
      %v1552 = vadd.f32 %v1550, %v1551
      %v1553 = vrot.slane %v1552, 2
      %v1554 = vadd.f32 %v1552, %v1553
      %v1555 = vrot.slane %v1554, 1
      %v1556 = vadd.f32 %v1554, %v1555
      %v1557 = vmul.f32 %v1504, %v1504
      %v1558 = vmul.f32 %v1505, %v1505
      %v1559 = vmul.f32 %v1506, %v1506
      %v1560 = vmul.f32 %v1507, %v1507
      %v1561 = vmul.f32 %v1508, %v1508
      %v1562 = vmul.f32 %v1509, %v1509
      %v1563 = vmul.f32 %v1510, %v1510
      %v1564 = vmul.f32 %v1511, %v1511
      %v1565 = vmul.f32 %v1512, %v1512
      %v1566 = vmul.f32 %v1513, %v1513
      %v1567 = vmul.f32 %v1514, %v1514
      %v1568 = vmul.f32 %v1515, %v1515
      %v1569 = vmul.f32 %v1516, %v1516
      %v1570 = vmul.f32 %v1517, %v1517
      %v1571 = vmul.f32 %v1518, %v1518
      %v1572 = vmul.f32 %v1519, %v1519
      %v1573 = vsel %vm890, %v1557, 0.0
      %v1574 = vsel %vm890, %v1558, 0.0
      %v1575 = vadd.f32 %v1573, %v1574
      %v1576 = vsel %vm890, %v1559, 0.0
      %v1577 = vadd.f32 %v1575, %v1576
      %v1578 = vsel %vm890, %v1560, 0.0
      %v1579 = vadd.f32 %v1577, %v1578
      %v1580 = vsel %vm890, %v1561, 0.0
      %v1581 = vadd.f32 %v1579, %v1580
      %v1582 = vsel %vm890, %v1562, 0.0
      %v1583 = vadd.f32 %v1581, %v1582
      %v1584 = vsel %vm890, %v1563, 0.0
      %v1585 = vadd.f32 %v1583, %v1584
      %v1586 = vsel %vm890, %v1564, 0.0
      %v1587 = vadd.f32 %v1585, %v1586
      %v1588 = vsel %vm890, %v1565, 0.0
      %v1589 = vadd.f32 %v1587, %v1588
      %v1590 = vsel %vm890, %v1566, 0.0
      %v1591 = vadd.f32 %v1589, %v1590
      %v1592 = vsel %vm890, %v1567, 0.0
      %v1593 = vadd.f32 %v1591, %v1592
      %v1594 = vsel %vm890, %v1568, 0.0
      %v1595 = vadd.f32 %v1593, %v1594
      %v1596 = vsel %vm890, %v1569, 0.0
      %v1597 = vadd.f32 %v1595, %v1596
      %v1598 = vsel %vm890, %v1570, 0.0
      %v1599 = vadd.f32 %v1597, %v1598
      %v1600 = vsel %vm890, %v1571, 0.0
      %v1601 = vadd.f32 %v1599, %v1600
      %v1602 = vsel %vm890, %v1572, 0.0
      %v1603 = vadd.f32 %v1601, %v1602
      %v1604 = vrot.slane %v1603, 4
      %v1605 = vadd.f32 %v1603, %v1604
      %v1606 = vrot.slane %v1605, 2
      %v1607 = vadd.f32 %v1605, %v1606
      %v1608 = vrot.slane %v1607, 1
      %v1609 = vadd.f32 %v1607, %v1608
      %vm1610 = vcmask 1040384
      %v1611 = vsel %vm1610, %v1556, %v1609
      %vm1612 = vcmask 58368
      %1613 = vst.msk [vmem:[%s228] sm:$0x3] %vm1612, %v1611
      %p1614 = scmp.lt.s32.totalorder %s16, 1
      %s1615 = scalar_select %p1614, %s16, 1
      %s1616 = smul.addr %s1615, 20
      %s1617 = smul.addr %s1616, 4
      %s1618 = scalar_lea.vmem %s3, %s1617
      %p1619 = scmp.lt.s32.totalorder %s16, 1
      %s1620 = scalar_select %p1619, %s16, 1
      %s1621 = smul.addr %s1620, 2
      %s1622 = scalar_lea.vmem %s4, %s1621
      // Predicated region
      $region33: #{encoder_block.3} parent=31 // pred_check
        %p1623 = pneg %p107
      $region34: #{encoder_block.3} parent=31 // pred_check_branch
        %1625 = sbr.rel (%p1623) target = $region36
      $region35: #{encoder_block.3} parent=31 // pred_region
        _
      $region36: #{encoder_block.3} parent=31 // pred_fallthru
        _
      // Predicated region
      $region37: #{encoder_block.3} parent=31 // pred_check
        %p1626 = pneg %p133
      $region38: #{encoder_block.3} parent=31 // pred_check_branch
        %1628 = sbr.rel (%p1626) target = $region40
      $region39: #{encoder_block.3} parent=31 // pred_region
        _
      $region40: #{encoder_block.3} parent=31 // pred_fallthru
        _
    $region32: #{encoder_block.3} parent=5 // pred_fallthru
      _
    %p1629 = scmp.le.s32.totalorder 2, %s11
    // Predicated region
    $region41: #{encoder_block.3} parent=5 // pred_check
      %p1630 = pneg %p1629
    $region42: #{encoder_block.3} parent=5 // pred_check_branch
      %1632 = sbr.rel (%p1630) target = $region44
    $region43: #{encoder_block.3} parent=5 // pred_region
      %s1633 = ssub.s32 %s11, 2
      // Predicated region
      $region45: #{encoder_block.3} parent=43 // pred_check
        %p1634 = pneg %p113
      $region46: #{encoder_block.3} parent=43 // pred_check_branch
        %1636 = sbr.rel (%p1634) target = $region48
      $region47: #{encoder_block.3} parent=43 // pred_region
        %p1637 = scmp.lt.s32.totalorder %s17, 1
        %s1638 = scalar_select %p1637, %s17, 1
        %s1639 = smul.addr %s1638, 20
        %s1640 = smul.addr %s1639, 4
        %s1641 = scalar_lea.vmem %s3, %s1640
      $region48: #{encoder_block.3} parent=43 // pred_fallthru
        _
      // Predicated region
      $region49: #{encoder_block.3} parent=43 // pred_check
        %p1642 = pneg %p139
      $region50: #{encoder_block.3} parent=43 // pred_check_branch
        %1644 = sbr.rel (%p1642) target = $region52
      $region51: #{encoder_block.3} parent=43 // pred_region
        %p1645 = scmp.lt.s32.totalorder %s17, 1
        %s1646 = scalar_select %p1645, %s17, 1
        %s1647 = smul.addr %s1646, 2
        %s1648 = scalar_lea.vmem %s4, %s1647
      $region52: #{encoder_block.3} parent=43 // pred_fallthru
        _
    $region44: #{encoder_block.3} parent=5 // pred_fallthru
      _
  $region6: #{encoder_block.3} parent=0 // loop_footer
    %s15 = sadd.s32 1, %s11
  $region7: #{encoder_block.3} parent=0 // loop_footer_branch
    %10 = sbr.rel target = $region3
  $region8: #{encoder_block.3} parent=0 // loop_exit
    _

</llo_original>
